<compile_context>
chip_gen: v5e
topology: v5e:2x2
jax: 0.10.0
libtpu: 0.0.40
codegen_flags: <defaults>
</compile_context>

<pallas_src>
import functools
import math

import jax
import jax.numpy as jnp
from jax import lax
from jax.experimental import pallas as pl
from jax.experimental.pallas import tpu as pltpu  # noqa: F401  (TPU backend)


# --------------------------------------------------------------------------
# The single fused forward kernel
# --------------------------------------------------------------------------
def _fwd_kernel(dims, names, pred_s, *refs):
    (nB, nPob, nPta, nF, nDS, nDG, nD, dimPred) = dims
    S_ob = nB * nPob
    S_ta = nB * nPta
    f32 = jnp.float32
    inv_sqrt_d = 1.0 / math.sqrt(nD)

    n_in = len(names)
    R = dict(zip(names, refs[:n_in]))
    gpred_ref, spred_ref, gloss_ref, sloss_ref = refs[n_in:]

    def w(name):
        return R[name][...]

    def linear(x, wname, bname, act=None):
        y = jnp.dot(x, w(wname), preferred_element_type=f32) + w(bname)
        if act == "relu":
            y = jnp.maximum(y, 0.0)
        return y

    def matmul_nt(a, b):
        # a @ b.T, contracting last dims directly (no explicit transpose).
        return lax.dot_general(a, b, (((1,), (1,)), ((), ())),
                               preferred_element_type=f32)

    def masked_softmax(scores, mask):
        s = scores + mask
        s = s - jnp.max(s, axis=-1, keepdims=True)
        p = jnp.exp(s)
        return p * pl.reciprocal(jnp.sum(p, axis=-1, keepdims=True), approx=True)

    # ---------------- FeatureFusion (concat->dense->ReLU, split-weight form) ----
    # TODO(synk): FeatureFusion internals unavailable; concat + dense + ReLU.
    featOb = jnp.maximum(
        jnp.dot(w("sOb"), w("ff_ws"), preferred_element_type=f32)
        + jnp.dot(w("gOb"), w("ff_wg"), preferred_element_type=f32)
        + w("ff_b"), 0.0)                                   # (nF*S_ob, nD) frame-major rows

    featTa0 = jnp.maximum(
        jnp.dot(w("sTa0"), w("ff_ws"), preferred_element_type=f32)
        + jnp.dot(w("gTa0"), w("ff_wg"), preferred_element_type=f32)
        + w("ff_b"), 0.0)                                   # (S_ta, nD)

    # ---------------- STEncoder --------------------------------------------
    # TODO(synk): STEncoder internals unavailable; single-head self-attention
    # over frames (per batch/particle, via block-diagonal mask) + FFN.
    x = featOb
    q = linear(x, "e_q_w", "e_q_b")
    k = linear(x, "e_k_w", "e_k_b")
    v = linear(x, "e_v_w", "e_v_b")
    s = matmul_nt(q, k) * inv_sqrt_d                        # (nF*S_ob, nF*S_ob)
    p = masked_softmax(s, w("enc_mask"))
    a = jnp.dot(p, v, preferred_element_type=f32)
    h = x + linear(a, "e_o_w", "e_o_b")
    fe = linear(linear(h, "e_f1_w", "e_f1_b", act="relu"), "e_f2_w", "e_f2_b")
    att = h + fe                                            # (nF*S_ob, nD)

    # Cross-attention K/V for ALL observed rows, hoisted out of the frame loop.
    kc_all = linear(att, "d_ck_w", "d_ck_b")                # (nF*S_ob, nD)
    vc_all = linear(att, "d_cv_w", "d_cv_b")

    # ---------------- STDecoder loop (statically unrolled) -------------------
    # TODO(synk): STDecoder internals unavailable; temporal attention over the
    # generated target frames + cross-attention to observed particles + FFN.
    cross_mask_ref = R["cross_mask"]
    sTaR = R["sTaR"]
    gGtR = R["gGtR"]

    ks_list = [linear(featTa0, "d_tk_w", "d_tk_b")]         # KV cache (in vregs)
    vs_list = [linear(featTa0, "d_tv_w", "d_tv_b")]
    last_frame = featTa0

    g_sse = jnp.zeros((1, 1), f32)
    s_sse = jnp.zeros((1, 1), f32)

    for fId in range(1, nF):
        t_idx = fId - 1

        # --- temporal self-attention (query = last generated frame), online softmax
        q_t = linear(last_frame, "d_tq_w", "d_tq_b")                       # (S_ta, nD)
        scores = [jnp.sum(q_t * kj, axis=-1, keepdims=True) * inv_sqrt_d
                  for kj in ks_list]                                       # each (S_ta, 1)
        m = scores[0]
        for sc in scores[1:]:
            m = jnp.maximum(m, sc)
        ws_ = [jnp.exp(sc - m) for sc in scores]
        denom = ws_[0]
        for wj in ws_[1:]:
            denom = denom + wj
        acc = ws_[0] * vs_list[0]
        for wj, vj in zip(ws_[1:], vs_list[1:]):
            acc = acc + wj * vj
        a_t = acc * pl.reciprocal(denom, approx=True)                      # (S_ta, nD)
        h1 = linear(a_t, "d_to_w", "d_to_b") + last_frame

        # --- cross-attention to observed particles at frame fId (mask selects
        #     same-batch rows of frame fId out of all encoder rows)
        qc = linear(h1, "d_cq_w", "d_cq_b")                                # (S_ta, nD)
        sc_c = matmul_nt(qc, kc_all) * inv_sqrt_d                          # (S_ta, nF*S_ob)
        pc = masked_softmax(sc_c, cross_mask_ref[t_idx])
        ac = jnp.dot(pc, vc_all, preferred_element_type=f32)               # (S_ta, nD)
        h2 = h1 + linear(ac, "d_co_w", "d_co_b")

        # --- FFN
        fd = linear(linear(h2, "d_f1_w", "d_f1_b", act="relu"), "d_f2_w", "d_f2_b")
        featTat = h2 + fd                                                  # (S_ta, nD)

        # --- Prediction heads
        # TODO(synk): Prediction internals unavailable; two linear heads.
        gP = linear(featTat, "pg_w", "pg_b")                               # (S_ta, dimPred)
        sP = linear(featTat, "ps_w", "ps_b")                               # (S_ta, nDS)
        gpred_ref[t_idx] = gP
        spred_ref[t_idx] = sP

        # --- losses (SSE/2, accumulated in-kernel)
        gGt_f = gGtR[t_idx]
        dg = gP - gGt_f
        g_sse = g_sse + jnp.sum(dg * dg, keepdims=True)

        sGt_f = sTaR[t_idx]
        if pred_s:
            msk = jnp.where(sGt_f > 0, 2.0, 1.0).astype(f32)
            ds_ = (sP - sGt_f) * msk
            s_sse = s_sse + jnp.sum(ds_ * ds_, keepdims=True)

        # --- fuse next decoder input frame (FeatureFusion of [sNext, gP, t/10]).
        # Skipped on the last iteration (original computes it but never uses it).
        if fId < nF - 1:
            sNext = sP if pred_s else sGt_f
            new_frame = jnp.maximum(
                jnp.dot(sNext, w("ff_ws"), preferred_element_type=f32)
                + jnp.dot(gP, w("ff_wp"), preferred_element_type=f32)
                + (float(fId) / 10.0) * w("ff_wt")
                + w("ff_b"), 0.0)                                          # (S_ta, nD)
            ks_list.append(linear(new_frame, "d_tk_w", "d_tk_b"))
            vs_list.append(linear(new_frame, "d_tv_w", "d_tv_b"))
            last_frame = new_frame

    gloss_ref[...] = 0.5 * g_sse
    if pred_s:
        sloss_ref[...] = 0.5 * s_sse
    else:
        sloss_ref[...] = jnp.zeros((1, 1), f32)


# --------------------------------------------------------------------------
# Parameter initialization (deterministic, same structure as before)
# --------------------------------------------------------------------------
def _dense(key, fan_in, fan_out):
    w = jax.random.normal(key, (fan_in, fan_out), jnp.float32) / math.sqrt(fan_in)
    b = jnp.zeros((fan_out,), jnp.float32)
    return {"w": w, "b": b}


def init_params(key, nDS, nDG, nD, dimPred):
    keys = jax.random.split(key, 20)
    return {
        "ff": _dense(keys[0], nDS + nDG, nD),
        "enc": {
            "q": _dense(keys[1], nD, nD), "k": _dense(keys[2], nD, nD),
            "v": _dense(keys[3], nD, nD), "o": _dense(keys[4], nD, nD),
            "f1": _dense(keys[5], nD, 2 * nD), "f2": _dense(keys[6], 2 * nD, nD),
        },
        "dec": {
            "tq": _dense(keys[7], nD, nD), "tk": _dense(keys[8], nD, nD),
            "tv": _dense(keys[9], nD, nD), "to": _dense(keys[10], nD, nD),
            "cq": _dense(keys[11], nD, nD), "ck": _dense(keys[12], nD, nD),
            "cv": _dense(keys[13], nD, nD), "co": _dense(keys[14], nD, nD),
            "f1": _dense(keys[15], nD, 2 * nD), "f2": _dense(keys[16], 2 * nD, nD),
        },
        "pred": {
            "g": _dense(keys[17], nD, dimPred),
            "s": _dense(keys[18], nD, nDS),
        },
    }


# --------------------------------------------------------------------------
# EFTransformer forward (wrapper: layout prep in JAX, one pallas_call, stats)
# --------------------------------------------------------------------------
def ef_transformer_forward(params, sFeatOb, sFeatTa, gFeatOb, gFeatTa,
                           dimPred, predFlag):
    f32 = jnp.float32
    nB, nPob, nF, nDS = sFeatOb.shape
    _, nPta, _, nDG = gFeatTa.shape
    nD = params["ff"]["w"].shape[1]
    assert nDG == dimPred + 1, "geometric feature must be (pos[dimPred], time/10)"
    S_ob, S_ta = nB * nPob, nB * nPta
    pred_s = (predFlag[1] == 1)

    # Frame-major encoder rows: row = f * S_ob + (b * nPob + p)
    def frame_major(x):
        return jnp.transpose(x, (2, 0, 1, 3)).reshape(-1, x.shape[3]).astype(f32)

    sOb = frame_major(sFeatOb)
    gOb = frame_major(gFeatOb)
    sTa0 = sFeatTa[:, :, 0, :].reshape(S_ta, nDS).astype(f32)
    gTa0 = gFeatTa[:, :, 0, :].reshape(S_ta, nDG).astype(f32)
    sTaR = jnp.transpose(sFeatTa[:, :, 1:, :], (2, 0, 1, 3)).reshape(nF - 1, S_ta, nDS).astype(f32)
    gGtR = jnp.transpose(lax.stop_gradient(gFeatTa)[:, :, 1:, :dimPred],
                         (2, 0, 1, 3)).reshape(nF - 1, S_ta, dimPred).astype(f32)

    # Additive attention masks (0 = allowed, -1e30 = disallowed), built once.
    NEG = -1.0e30
    row = jnp.arange(nF * S_ob)
    row_f = row // S_ob                 # frame index of encoder row
    row_s = row % S_ob                  # (batch, particle) sequence index
    row_b = row_s // nPob               # batch index of encoder row
    enc_mask = jnp.where(row_s[:, None] == row_s[None, :], 0.0, NEG).astype(f32)
    ta_b = jnp.arange(S_ta) // nPta     # batch index of target row
    fr = jnp.arange(1, nF)
    allow = ((row_f[None, None, :] == fr[:, None, None])
             & (row_b[None, None, :] == ta_b[None, :, None]))
    cross_mask = jnp.where(allow, 0.0, NEG).astype(f32)      # (nF-1, S_ta, nF*S_ob)

    P = params

    def b2(x):
        return x.reshape(1, -1).astype(f32)

    inputs = dict(
        sOb=sOb, gOb=gOb, sTa0=sTa0, gTa0=gTa0, sTaR=sTaR, gGtR=gGtR,
        enc_mask=enc_mask, cross_mask=cross_mask,
        ff_ws=P["ff"]["w"][:nDS].astype(f32),
        ff_wg=P["ff"]["w"][nDS:].astype(f32),
        ff_wp=P["ff"]["w"][nDS:nDS + dimPred].astype(f32),
        ff_wt=P["ff"]["w"][nDS + dimPred:].astype(f32),
        ff_b=b2(P["ff"]["b"]),
        e_q_w=P["enc"]["q"]["w"].astype(f32), e_q_b=b2(P["enc"]["q"]["b"]),
        e_k_w=P["enc"]["k"]["w"].astype(f32), e_k_b=b2(P["enc"]["k"]["b"]),
        e_v_w=P["enc"]["v"]["w"].astype(f32), e_v_b=b2(P["enc"]["v"]["b"]),
        e_o_w=P["enc"]["o"]["w"].astype(f32), e_o_b=b2(P["enc"]["o"]["b"]),
        e_f1_w=P["enc"]["f1"]["w"].astype(f32), e_f1_b=b2(P["enc"]["f1"]["b"]),
        e_f2_w=P["enc"]["f2"]["w"].astype(f32), e_f2_b=b2(P["enc"]["f2"]["b"]),
        d_tq_w=P["dec"]["tq"]["w"].astype(f32), d_tq_b=b2(P["dec"]["tq"]["b"]),
        d_tk_w=P["dec"]["tk"]["w"].astype(f32), d_tk_b=b2(P["dec"]["tk"]["b"]),
        d_tv_w=P["dec"]["tv"]["w"].astype(f32), d_tv_b=b2(P["dec"]["tv"]["b"]),
        d_to_w=P["dec"]["to"]["w"].astype(f32), d_to_b=b2(P["dec"]["to"]["b"]),
        d_cq_w=P["dec"]["cq"]["w"].astype(f32), d_cq_b=b2(P["dec"]["cq"]["b"]),
        d_ck_w=P["dec"]["ck"]["w"].astype(f32), d_ck_b=b2(P["dec"]["ck"]["b"]),
        d_cv_w=P["dec"]["cv"]["w"].astype(f32), d_cv_b=b2(P["dec"]["cv"]["b"]),
        d_co_w=P["dec"]["co"]["w"].astype(f32), d_co_b=b2(P["dec"]["co"]["b"]),
        d_f1_w=P["dec"]["f1"]["w"].astype(f32), d_f1_b=b2(P["dec"]["f1"]["b"]),
        d_f2_w=P["dec"]["f2"]["w"].astype(f32), d_f2_b=b2(P["dec"]["f2"]["b"]),
        pg_w=P["pred"]["g"]["w"].astype(f32), pg_b=b2(P["pred"]["g"]["b"]),
        ps_w=P["pred"]["s"]["w"].astype(f32), ps_b=b2(P["pred"]["s"]["b"]),
    )
    names = tuple(inputs.keys())
    dims = (nB, nPob, nPta, nF, nDS, nDG, nD, dimPred)

    out_shape = (
        jax.ShapeDtypeStruct((nF - 1, S_ta, dimPred), f32),   # geometric preds (frame-major)
        jax.ShapeDtypeStruct((nF - 1, S_ta, nDS), f32),       # semantic preds (frame-major)
        jax.ShapeDtypeStruct((1, 1), f32),                    # gLoss
        jax.ShapeDtypeStruct((1, 1), f32),                    # sLoss
    )

    gpred_fm, spred_fm, gloss, sloss = pl.pallas_call(
        functools.partial(_fwd_kernel, dims, names, pred_s),
        out_shape=out_shape,
    )(*[inputs[n] for n in names])

    # -------- post-processing / stats (plain-JAX glue, matches reference) ----
    gPred = jnp.transpose(gpred_fm.reshape(nF - 1, nB, nPta, dimPred), (1, 2, 0, 3))
    gLoss = gloss[0, 0]

    gGt = lax.stop_gradient(gFeatTa)[:, :, 1:, :dimPred]
    dist = jnp.sqrt(jnp.sum((gPred - gGt) ** 2, axis=3)).reshape(nB * nPta, nF - 1)
    total = nB * nPta * (nF - 1)
    nMiss = [total - jnp.sum(dist <= 0.01),
             total - jnp.sum(dist <= 0.03),
             total - jnp.sum(dist <= 0.05)]
    maxDist = jnp.max(dist, axis=0)
    gStat = [nMiss, maxDist]

    if pred_s:
        sPred = jnp.transpose(spred_fm.reshape(nF - 1, nB, nPta, nDS), (1, 2, 0, 3))
        sGt = sFeatTa[:, :, 1:, :]
        sLoss = sloss[0, 0]
        nPos = jnp.sum(sGt > 0)
        nNeg = jnp.sum(sGt == 0)
        avgPos = jnp.sum(jnp.where(sGt > 0, sPred, 0.0)) / nPos.astype(f32)
        avgNeg = jnp.sum(jnp.where(sGt == 0, sPred, 0.0)) / nNeg.astype(f32)
        sStat = [avgPos, avgNeg]
    else:
        sPred = jnp.zeros((0,), f32)
        sLoss = jnp.zeros((), f32)   # scalar for API consistency with the other branch
        sStat = [0.0, 0.0]

    return gPred, sPred, gLoss, sLoss, gStat, sStat


# --------------------------------------------------------------------------
# Driver
# --------------------------------------------------------------------------
if __name__ == "__main__":
    nB, nPob, nPta, nF = 2, 3, 3, 6
    dimPred = 2
    nDG = dimPred + 1          # (x, y, time/10) geometric feature
    nDS = 6                    # semantic feature dim (args.inChannelsQ)
    nD = 32                    # fused hidden dim
    predFlag = (1, 1)

    key = jax.random.PRNGKey(0)
    k1, k2, k3, k4, kp = jax.random.split(key, 5)

    # semantic features: non-negative, sparse (so gt>0 and gt==0 both occur)
    u1 = jax.random.uniform(k1, (nB, nPob, nF, nDS), jnp.float32)
    sFeatOb = jnp.where(u1 > 0.5, u1, 0.0)
    u2 = jax.random.uniform(k2, (nB, nPta, nF, nDS), jnp.float32)
    sFeatTa = jnp.where(u2 > 0.5, u2, 0.0)

    # geometric features: (position[dimPred], time/10)
    t = (jnp.arange(nF, dtype=jnp.float32) / 10.0).reshape(1, 1, nF, 1)
    posOb = 0.1 * jax.random.normal(k3, (nB, nPob, nF, dimPred), jnp.float32)
    gFeatOb = jnp.concatenate([posOb, jnp.broadcast_to(t, (nB, nPob, nF, 1))], axis=3)
    posTa = 0.1 * jax.random.normal(k4, (nB, nPta, nF, dimPred), jnp.float32)
    gFeatTa = jnp.concatenate([posTa, jnp.broadcast_to(t, (nB, nPta, nF, 1))], axis=3)

    params = init_params(kp, nDS, nDG, nD, dimPred)

    fwd = jax.jit(functools.partial(ef_transformer_forward,
                                    dimPred=dimPred, predFlag=predFlag))
    out = fwd(params, sFeatOb, sFeatTa, gFeatOb, gFeatTa)
    jax.block_until_ready(out)
    print("KERNEL_OK")
</pallas_src>

<mosaic_0001>
module attributes {stable_mosaic.version = 11 : i64} {
  func.func @_fwd_kernel(%arg0: memref<36x6xf32, #tpu.memory_space<vmem>>, %arg1: memref<36x3xf32, #tpu.memory_space<vmem>>, %arg2: memref<6x6xf32, #tpu.memory_space<vmem>>, %arg3: memref<6x3xf32, #tpu.memory_space<vmem>>, %arg4: memref<5x6x6xf32, #tpu.memory_space<vmem>>, %arg5: memref<5x6x2xf32, #tpu.memory_space<vmem>>, %arg6: memref<36x36xf32, #tpu.memory_space<vmem>>, %arg7: memref<5x6x36xf32, #tpu.memory_space<vmem>>, %arg8: memref<6x32xf32, #tpu.memory_space<vmem>>, %arg9: memref<3x32xf32, #tpu.memory_space<vmem>>, %arg10: memref<2x32xf32, #tpu.memory_space<vmem>>, %arg11: memref<1x32xf32, #tpu.memory_space<vmem>>, %arg12: memref<1x32xf32, #tpu.memory_space<vmem>>, %arg13: memref<32x32xf32, #tpu.memory_space<vmem>>, %arg14: memref<1x32xf32, #tpu.memory_space<vmem>>, %arg15: memref<32x32xf32, #tpu.memory_space<vmem>>, %arg16: memref<1x32xf32, #tpu.memory_space<vmem>>, %arg17: memref<32x32xf32, #tpu.memory_space<vmem>>, %arg18: memref<1x32xf32, #tpu.memory_space<vmem>>, %arg19: memref<32x32xf32, #tpu.memory_space<vmem>>, %arg20: memref<1x32xf32, #tpu.memory_space<vmem>>, %arg21: memref<32x64xf32, #tpu.memory_space<vmem>>, %arg22: memref<1x64xf32, #tpu.memory_space<vmem>>, %arg23: memref<64x32xf32, #tpu.memory_space<vmem>>, %arg24: memref<1x32xf32, #tpu.memory_space<vmem>>, %arg25: memref<32x32xf32, #tpu.memory_space<vmem>>, %arg26: memref<1x32xf32, #tpu.memory_space<vmem>>, %arg27: memref<32x32xf32, #tpu.memory_space<vmem>>, %arg28: memref<1x32xf32, #tpu.memory_space<vmem>>, %arg29: memref<32x32xf32, #tpu.memory_space<vmem>>, %arg30: memref<1x32xf32, #tpu.memory_space<vmem>>, %arg31: memref<32x32xf32, #tpu.memory_space<vmem>>, %arg32: memref<1x32xf32, #tpu.memory_space<vmem>>, %arg33: memref<32x32xf32, #tpu.memory_space<vmem>>, %arg34: memref<1x32xf32, #tpu.memory_space<vmem>>, %arg35: memref<32x32xf32, #tpu.memory_space<vmem>>, %arg36: memref<1x32xf32, #tpu.memory_space<vmem>>, %arg37: memref<32x32xf32, #tpu.memory_space<vmem>>, %arg38: memref<1x32xf32, #tpu.memory_space<vmem>>, %arg39: memref<32x32xf32, #tpu.memory_space<vmem>>, %arg40: memref<1x32xf32, #tpu.memory_space<vmem>>, %arg41: memref<32x64xf32, #tpu.memory_space<vmem>>, %arg42: memref<1x64xf32, #tpu.memory_space<vmem>>, %arg43: memref<64x32xf32, #tpu.memory_space<vmem>>, %arg44: memref<1x32xf32, #tpu.memory_space<vmem>>, %arg45: memref<32x2xf32, #tpu.memory_space<vmem>>, %arg46: memref<1x2xf32, #tpu.memory_space<vmem>>, %arg47: memref<32x6xf32, #tpu.memory_space<vmem>>, %arg48: memref<1x6xf32, #tpu.memory_space<vmem>>, %arg49: memref<5x6x2xf32, #tpu.memory_space<vmem>>, %arg50: memref<5x6x6xf32, #tpu.memory_space<vmem>>, %arg51: memref<1x1xf32, #tpu.memory_space<vmem>>, %arg52: memref<1x1xf32, #tpu.memory_space<vmem>>) attributes {dimension_semantics = [], scalar_prefetch = 0 : i64, scratch_operands = 0 : i64, tpu.core_type = #tpu.core_type<tc>} {
    %c0 = arith.constant 0 : index
    %c0_0 = arith.constant 0 : index
    %0 = vector.load %arg0[%c0, %c0_0] : memref<36x6xf32, #tpu.memory_space<vmem>>, vector<36x6xf32>
    %c0_1 = arith.constant 0 : index
    %c0_2 = arith.constant 0 : index
    %1 = vector.load %arg8[%c0_1, %c0_2] : memref<6x32xf32, #tpu.memory_space<vmem>>, vector<6x32xf32>
    %cst = arith.constant dense<0.000000e+00> : vector<36x32xf32>
    %2 = tpu.matmul %0, %1, %cst {dimension_numbers = #tpu.dot_dimension_numbers<[1], [0], [0], [1], [0, 0, 1, 1], [], []>} : vector<36x6xf32>, vector<6x32xf32>, vector<36x32xf32> -> vector<36x32xf32>
    %c0_3 = arith.constant 0 : index
    %c0_4 = arith.constant 0 : index
    %3 = vector.load %arg1[%c0_3, %c0_4] : memref<36x3xf32, #tpu.memory_space<vmem>>, vector<36x3xf32>
    %c0_5 = arith.constant 0 : index
    %c0_6 = arith.constant 0 : index
    %4 = vector.load %arg9[%c0_5, %c0_6] : memref<3x32xf32, #tpu.memory_space<vmem>>, vector<3x32xf32>
    %cst_7 = arith.constant dense<0.000000e+00> : vector<36x32xf32>
    %5 = tpu.matmul %3, %4, %cst_7 {dimension_numbers = #tpu.dot_dimension_numbers<[1], [0], [0], [1], [0, 0, 1, 1], [], []>} : vector<36x3xf32>, vector<3x32xf32>, vector<36x32xf32> -> vector<36x32xf32>
    %6 = arith.addf %2, %5 : vector<36x32xf32>
    %c0_8 = arith.constant 0 : index
    %c0_9 = arith.constant 0 : index
    %7 = vector.load %arg12[%c0_8, %c0_9] : memref<1x32xf32, #tpu.memory_space<vmem>>, vector<1x32xf32>
    %8 = vector.broadcast %7 : vector<1x32xf32> to vector<36x32xf32>
    %9 = arith.addf %6, %8 : vector<36x32xf32>
    %cst_10 = arith.constant 0.000000e+00 : f32
    %10 = vector.broadcast %cst_10 : f32 to vector<36x32xf32>
    %11 = arith.maximumf %9, %10 : vector<36x32xf32>
    %c0_11 = arith.constant 0 : index
    %c0_12 = arith.constant 0 : index
    %12 = vector.load %arg2[%c0_11, %c0_12] : memref<6x6xf32, #tpu.memory_space<vmem>>, vector<6x6xf32>
    %c0_13 = arith.constant 0 : index
    %c0_14 = arith.constant 0 : index
    %13 = vector.load %arg8[%c0_13, %c0_14] : memref<6x32xf32, #tpu.memory_space<vmem>>, vector<6x32xf32>
    %cst_15 = arith.constant dense<0.000000e+00> : vector<6x32xf32>
    %14 = tpu.matmul %12, %13, %cst_15 {dimension_numbers = #tpu.dot_dimension_numbers<[1], [0], [0], [1], [0, 0, 1, 1], [], []>} : vector<6x6xf32>, vector<6x32xf32>, vector<6x32xf32> -> vector<6x32xf32>
    %c0_16 = arith.constant 0 : index
    %c0_17 = arith.constant 0 : index
    %15 = vector.load %arg3[%c0_16, %c0_17] : memref<6x3xf32, #tpu.memory_space<vmem>>, vector<6x3xf32>
    %c0_18 = arith.constant 0 : index
    %c0_19 = arith.constant 0 : index
    %16 = vector.load %arg9[%c0_18, %c0_19] : memref<3x32xf32, #tpu.memory_space<vmem>>, vector<3x32xf32>
    %cst_20 = arith.constant dense<0.000000e+00> : vector<6x32xf32>
    %17 = tpu.matmul %15, %16, %cst_20 {dimension_numbers = #tpu.dot_dimension_numbers<[1], [0], [0], [1], [0, 0, 1, 1], [], []>} : vector<6x3xf32>, vector<3x32xf32>, vector<6x32xf32> -> vector<6x32xf32>
    %18 = arith.addf %14, %17 : vector<6x32xf32>
    %c0_21 = arith.constant 0 : index
    %c0_22 = arith.constant 0 : index
    %19 = vector.load %arg12[%c0_21, %c0_22] : memref<1x32xf32, #tpu.memory_space<vmem>>, vector<1x32xf32>
    %20 = vector.broadcast %19 : vector<1x32xf32> to vector<6x32xf32>
    %21 = arith.addf %18, %20 : vector<6x32xf32>
    %cst_23 = arith.constant 0.000000e+00 : f32
    %22 = vector.broadcast %cst_23 : f32 to vector<6x32xf32>
    %23 = arith.maximumf %21, %22 : vector<6x32xf32>
    %c0_24 = arith.constant 0 : index
    %c0_25 = arith.constant 0 : index
    %24 = vector.load %arg13[%c0_24, %c0_25] : memref<32x32xf32, #tpu.memory_space<vmem>>, vector<32x32xf32>
    %cst_26 = arith.constant dense<0.000000e+00> : vector<36x32xf32>
    %25 = tpu.matmul %11, %24, %cst_26 {dimension_numbers = #tpu.dot_dimension_numbers<[1], [0], [0], [1], [0, 0, 1, 1], [], []>} : vector<36x32xf32>, vector<32x32xf32>, vector<36x32xf32> -> vector<36x32xf32>
    %c0_27 = arith.constant 0 : index
    %c0_28 = arith.constant 0 : index
    %26 = vector.load %arg14[%c0_27, %c0_28] : memref<1x32xf32, #tpu.memory_space<vmem>>, vector<1x32xf32>
    %27 = vector.broadcast %26 : vector<1x32xf32> to vector<36x32xf32>
    %28 = arith.addf %25, %27 : vector<36x32xf32>
    %c0_29 = arith.constant 0 : index
    %c0_30 = arith.constant 0 : index
    %29 = vector.load %arg15[%c0_29, %c0_30] : memref<32x32xf32, #tpu.memory_space<vmem>>, vector<32x32xf32>
    %cst_31 = arith.constant dense<0.000000e+00> : vector<36x32xf32>
    %30 = tpu.matmul %11, %29, %cst_31 {dimension_numbers = #tpu.dot_dimension_numbers<[1], [0], [0], [1], [0, 0, 1, 1], [], []>} : vector<36x32xf32>, vector<32x32xf32>, vector<36x32xf32> -> vector<36x32xf32>
    %c0_32 = arith.constant 0 : index
    %c0_33 = arith.constant 0 : index
    %31 = vector.load %arg16[%c0_32, %c0_33] : memref<1x32xf32, #tpu.memory_space<vmem>>, vector<1x32xf32>
    %32 = vector.broadcast %31 : vector<1x32xf32> to vector<36x32xf32>
    %33 = arith.addf %30, %32 : vector<36x32xf32>
    %c0_34 = arith.constant 0 : index
    %c0_35 = arith.constant 0 : index
    %34 = vector.load %arg17[%c0_34, %c0_35] : memref<32x32xf32, #tpu.memory_space<vmem>>, vector<32x32xf32>
    %cst_36 = arith.constant dense<0.000000e+00> : vector<36x32xf32>
    %35 = tpu.matmul %11, %34, %cst_36 {dimension_numbers = #tpu.dot_dimension_numbers<[1], [0], [0], [1], [0, 0, 1, 1], [], []>} : vector<36x32xf32>, vector<32x32xf32>, vector<36x32xf32> -> vector<36x32xf32>
    %c0_37 = arith.constant 0 : index
    %c0_38 = arith.constant 0 : index
    %36 = vector.load %arg18[%c0_37, %c0_38] : memref<1x32xf32, #tpu.memory_space<vmem>>, vector<1x32xf32>
    %37 = vector.broadcast %36 : vector<1x32xf32> to vector<36x32xf32>
    %38 = arith.addf %35, %37 : vector<36x32xf32>
    %cst_39 = arith.constant dense<0.000000e+00> : vector<36x36xf32>
    %39 = tpu.matmul %28, %33, %cst_39 {dimension_numbers = #tpu.dot_dimension_numbers<[1], [1], [0], [0], [0, 0, 1, 0], [], []>} : vector<36x32xf32>, vector<36x32xf32>, vector<36x36xf32> -> vector<36x36xf32>
    %cst_40 = arith.constant 0.176776692 : f32
    %40 = vector.broadcast %cst_40 : f32 to vector<36x36xf32>
    %41 = arith.mulf %39, %40 : vector<36x36xf32>
    %c0_41 = arith.constant 0 : index
    %c0_42 = arith.constant 0 : index
    %42 = vector.load %arg6[%c0_41, %c0_42] : memref<36x36xf32, #tpu.memory_space<vmem>>, vector<36x36xf32>
    %43 = arith.addf %41, %42 : vector<36x36xf32>
    %cst_43 = arith.constant dense<0xFF800000> : vector<36xf32>
    %44 = vector.multi_reduction <maximumf>, %43, %cst_43 [1] : vector<36x36xf32> to vector<36xf32>
    %45 = vector.shape_cast %44 : vector<36xf32> to vector<36x1xf32>
    %46 = vector.broadcast %45 : vector<36x1xf32> to vector<36x36xf32>
    %47 = arith.subf %43, %46 : vector<36x36xf32>
    %48 = math.exp %47 : vector<36x36xf32>
    %cst_44 = arith.constant dense<0.000000e+00> : vector<36xf32>
    %49 = vector.multi_reduction <add>, %48, %cst_44 [1] : vector<36x36xf32> to vector<36xf32>
    %50 = vector.shape_cast %49 : vector<36xf32> to vector<36x1xf32>
    %51 = tpu.reciprocal %50 {approx = true} : vector<36x1xf32> -> vector<36x1xf32>
    %52 = vector.broadcast %51 : vector<36x1xf32> to vector<36x36xf32>
    %53 = arith.mulf %48, %52 : vector<36x36xf32>
    %cst_45 = arith.constant dense<0.000000e+00> : vector<36x32xf32>
    %54 = tpu.matmul %53, %38, %cst_45 {dimension_numbers = #tpu.dot_dimension_numbers<[1], [0], [0], [1], [0, 0, 1, 1], [], []>} : vector<36x36xf32>, vector<36x32xf32>, vector<36x32xf32> -> vector<36x32xf32>
    %c0_46 = arith.constant 0 : index
    %c0_47 = arith.constant 0 : index
    %55 = vector.load %arg19[%c0_46, %c0_47] : memref<32x32xf32, #tpu.memory_space<vmem>>, vector<32x32xf32>
    %cst_48 = arith.constant dense<0.000000e+00> : vector<36x32xf32>
    %56 = tpu.matmul %54, %55, %cst_48 {dimension_numbers = #tpu.dot_dimension_numbers<[1], [0], [0], [1], [0, 0, 1, 1], [], []>} : vector<36x32xf32>, vector<32x32xf32>, vector<36x32xf32> -> vector<36x32xf32>
    %c0_49 = arith.constant 0 : index
    %c0_50 = arith.constant 0 : index
    %57 = vector.load %arg20[%c0_49, %c0_50] : memref<1x32xf32, #tpu.memory_space<vmem>>, vector<1x32xf32>
    %58 = vector.broadcast %57 : vector<1x32xf32> to vector<36x32xf32>
    %59 = arith.addf %56, %58 : vector<36x32xf32>
    %60 = arith.addf %11, %59 : vector<36x32xf32>
    %c0_51 = arith.constant 0 : index
    %c0_52 = arith.constant 0 : index
    %61 = vector.load %arg21[%c0_51, %c0_52] : memref<32x64xf32, #tpu.memory_space<vmem>>, vector<32x64xf32>
    %cst_53 = arith.constant dense<0.000000e+00> : vector<36x64xf32>
    %62 = tpu.matmul %60, %61, %cst_53 {dimension_numbers = #tpu.dot_dimension_numbers<[1], [0], [0], [1], [0, 0, 1, 1], [], []>} : vector<36x32xf32>, vector<32x64xf32>, vector<36x64xf32> -> vector<36x64xf32>
    %c0_54 = arith.constant 0 : index
    %c0_55 = arith.constant 0 : index
    %63 = vector.load %arg22[%c0_54, %c0_55] : memref<1x64xf32, #tpu.memory_space<vmem>>, vector<1x64xf32>
    %64 = vector.broadcast %63 : vector<1x64xf32> to vector<36x64xf32>
    %65 = arith.addf %62, %64 : vector<36x64xf32>
    %cst_56 = arith.constant 0.000000e+00 : f32
    %66 = vector.broadcast %cst_56 : f32 to vector<36x64xf32>
    %67 = arith.maximumf %65, %66 : vector<36x64xf32>
    %c0_57 = arith.constant 0 : index
    %c0_58 = arith.constant 0 : index
    %68 = vector.load %arg23[%c0_57, %c0_58] : memref<64x32xf32, #tpu.memory_space<vmem>>, vector<64x32xf32>
    %cst_59 = arith.constant dense<0.000000e+00> : vector<36x32xf32>
    %69 = tpu.matmul %67, %68, %cst_59 {dimension_numbers = #tpu.dot_dimension_numbers<[1], [0], [0], [1], [0, 0, 1, 1], [], []>} : vector<36x64xf32>, vector<64x32xf32>, vector<36x32xf32> -> vector<36x32xf32>
    %c0_60 = arith.constant 0 : index
    %c0_61 = arith.constant 0 : index
    %70 = vector.load %arg24[%c0_60, %c0_61] : memref<1x32xf32, #tpu.memory_space<vmem>>, vector<1x32xf32>
    %71 = vector.broadcast %70 : vector<1x32xf32> to vector<36x32xf32>
    %72 = arith.addf %69, %71 : vector<36x32xf32>
    %73 = arith.addf %60, %72 : vector<36x32xf32>
    %c0_62 = arith.constant 0 : index
    %c0_63 = arith.constant 0 : index
    %74 = vector.load %arg35[%c0_62, %c0_63] : memref<32x32xf32, #tpu.memory_space<vmem>>, vector<32x32xf32>
    %cst_64 = arith.constant dense<0.000000e+00> : vector<36x32xf32>
    %75 = tpu.matmul %73, %74, %cst_64 {dimension_numbers = #tpu.dot_dimension_numbers<[1], [0], [0], [1], [0, 0, 1, 1], [], []>} : vector<36x32xf32>, vector<32x32xf32>, vector<36x32xf32> -> vector<36x32xf32>
    %c0_65 = arith.constant 0 : index
    %c0_66 = arith.constant 0 : index
    %76 = vector.load %arg36[%c0_65, %c0_66] : memref<1x32xf32, #tpu.memory_space<vmem>>, vector<1x32xf32>
    %77 = vector.broadcast %76 : vector<1x32xf32> to vector<36x32xf32>
    %78 = arith.addf %75, %77 : vector<36x32xf32>
    %c0_67 = arith.constant 0 : index
    %c0_68 = arith.constant 0 : index
    %79 = vector.load %arg37[%c0_67, %c0_68] : memref<32x32xf32, #tpu.memory_space<vmem>>, vector<32x32xf32>
    %cst_69 = arith.constant dense<0.000000e+00> : vector<36x32xf32>
    %80 = tpu.matmul %73, %79, %cst_69 {dimension_numbers = #tpu.dot_dimension_numbers<[1], [0], [0], [1], [0, 0, 1, 1], [], []>} : vector<36x32xf32>, vector<32x32xf32>, vector<36x32xf32> -> vector<36x32xf32>
    %c0_70 = arith.constant 0 : index
    %c0_71 = arith.constant 0 : index
    %81 = vector.load %arg38[%c0_70, %c0_71] : memref<1x32xf32, #tpu.memory_space<vmem>>, vector<1x32xf32>
    %82 = vector.broadcast %81 : vector<1x32xf32> to vector<36x32xf32>
    %83 = arith.addf %80, %82 : vector<36x32xf32>
    %c0_72 = arith.constant 0 : index
    %c0_73 = arith.constant 0 : index
    %84 = vector.load %arg27[%c0_72, %c0_73] : memref<32x32xf32, #tpu.memory_space<vmem>>, vector<32x32xf32>
    %cst_74 = arith.constant dense<0.000000e+00> : vector<6x32xf32>
    %85 = tpu.matmul %23, %84, %cst_74 {dimension_numbers = #tpu.dot_dimension_numbers<[1], [0], [0], [1], [0, 0, 1, 1], [], []>} : vector<6x32xf32>, vector<32x32xf32>, vector<6x32xf32> -> vector<6x32xf32>
    %c0_75 = arith.constant 0 : index
    %c0_76 = arith.constant 0 : index
    %86 = vector.load %arg28[%c0_75, %c0_76] : memref<1x32xf32, #tpu.memory_space<vmem>>, vector<1x32xf32>
    %87 = vector.broadcast %86 : vector<1x32xf32> to vector<6x32xf32>
    %88 = arith.addf %85, %87 : vector<6x32xf32>
    %c0_77 = arith.constant 0 : index
    %c0_78 = arith.constant 0 : index
    %89 = vector.load %arg29[%c0_77, %c0_78] : memref<32x32xf32, #tpu.memory_space<vmem>>, vector<32x32xf32>
    %cst_79 = arith.constant dense<0.000000e+00> : vector<6x32xf32>
    %90 = tpu.matmul %23, %89, %cst_79 {dimension_numbers = #tpu.dot_dimension_numbers<[1], [0], [0], [1], [0, 0, 1, 1], [], []>} : vector<6x32xf32>, vector<32x32xf32>, vector<6x32xf32> -> vector<6x32xf32>
    %c0_80 = arith.constant 0 : index
    %c0_81 = arith.constant 0 : index
    %91 = vector.load %arg30[%c0_80, %c0_81] : memref<1x32xf32, #tpu.memory_space<vmem>>, vector<1x32xf32>
    %92 = vector.broadcast %91 : vector<1x32xf32> to vector<6x32xf32>
    %93 = arith.addf %90, %92 : vector<6x32xf32>
    %cst_82 = arith.constant 0.000000e+00 : f32
    %94 = vector.broadcast %cst_82 : f32 to vector<1x1xf32>
    %cst_83 = arith.constant 0.000000e+00 : f32
    %95 = vector.broadcast %cst_83 : f32 to vector<1x1xf32>
    %c0_84 = arith.constant 0 : index
    %c0_85 = arith.constant 0 : index
    %96 = vector.load %arg25[%c0_84, %c0_85] : memref<32x32xf32, #tpu.memory_space<vmem>>, vector<32x32xf32>
    %cst_86 = arith.constant dense<0.000000e+00> : vector<6x32xf32>
    %97 = tpu.matmul %23, %96, %cst_86 {dimension_numbers = #tpu.dot_dimension_numbers<[1], [0], [0], [1], [0, 0, 1, 1], [], []>} : vector<6x32xf32>, vector<32x32xf32>, vector<6x32xf32> -> vector<6x32xf32>
    %c0_87 = arith.constant 0 : index
    %c0_88 = arith.constant 0 : index
    %98 = vector.load %arg26[%c0_87, %c0_88] : memref<1x32xf32, #tpu.memory_space<vmem>>, vector<1x32xf32>
    %99 = vector.broadcast %98 : vector<1x32xf32> to vector<6x32xf32>
    %100 = arith.addf %97, %99 : vector<6x32xf32>
    %101 = arith.mulf %100, %88 : vector<6x32xf32>
    %cst_89 = arith.constant dense<0.000000e+00> : vector<6xf32>
    %102 = vector.multi_reduction <add>, %101, %cst_89 [1] : vector<6x32xf32> to vector<6xf32>
    %103 = vector.shape_cast %102 : vector<6xf32> to vector<6x1xf32>
    %cst_90 = arith.constant 0.176776692 : f32
    %104 = vector.broadcast %cst_90 : f32 to vector<6x1xf32>
    %105 = arith.mulf %103, %104 : vector<6x1xf32>
    %106 = arith.subf %105, %105 : vector<6x1xf32>
    %107 = math.exp %106 : vector<6x1xf32>
    %108 = vector.broadcast %107 : vector<6x1xf32> to vector<6x32xf32>
    %109 = arith.mulf %108, %93 : vector<6x32xf32>
    %110 = tpu.reciprocal %107 {approx = true} : vector<6x1xf32> -> vector<6x1xf32>
    %111 = vector.broadcast %110 : vector<6x1xf32> to vector<6x32xf32>
    %112 = arith.mulf %109, %111 : vector<6x32xf32>
    %c0_91 = arith.constant 0 : index
    %c0_92 = arith.constant 0 : index
    %113 = vector.load %arg31[%c0_91, %c0_92] : memref<32x32xf32, #tpu.memory_space<vmem>>, vector<32x32xf32>
    %cst_93 = arith.constant dense<0.000000e+00> : vector<6x32xf32>
    %114 = tpu.matmul %112, %113, %cst_93 {dimension_numbers = #tpu.dot_dimension_numbers<[1], [0], [0], [1], [0, 0, 1, 1], [], []>} : vector<6x32xf32>, vector<32x32xf32>, vector<6x32xf32> -> vector<6x32xf32>
    %c0_94 = arith.constant 0 : index
    %c0_95 = arith.constant 0 : index
    %115 = vector.load %arg32[%c0_94, %c0_95] : memref<1x32xf32, #tpu.memory_space<vmem>>, vector<1x32xf32>
    %116 = vector.broadcast %115 : vector<1x32xf32> to vector<6x32xf32>
    %117 = arith.addf %114, %116 : vector<6x32xf32>
    %118 = arith.addf %117, %23 : vector<6x32xf32>
    %c0_96 = arith.constant 0 : index
    %c0_97 = arith.constant 0 : index
    %119 = vector.load %arg33[%c0_96, %c0_97] : memref<32x32xf32, #tpu.memory_space<vmem>>, vector<32x32xf32>
    %cst_98 = arith.constant dense<0.000000e+00> : vector<6x32xf32>
    %120 = tpu.matmul %118, %119, %cst_98 {dimension_numbers = #tpu.dot_dimension_numbers<[1], [0], [0], [1], [0, 0, 1, 1], [], []>} : vector<6x32xf32>, vector<32x32xf32>, vector<6x32xf32> -> vector<6x32xf32>
    %c0_99 = arith.constant 0 : index
    %c0_100 = arith.constant 0 : index
    %121 = vector.load %arg34[%c0_99, %c0_100] : memref<1x32xf32, #tpu.memory_space<vmem>>, vector<1x32xf32>
    %122 = vector.broadcast %121 : vector<1x32xf32> to vector<6x32xf32>
    %123 = arith.addf %120, %122 : vector<6x32xf32>
    %cst_101 = arith.constant dense<0.000000e+00> : vector<6x36xf32>
    %124 = tpu.matmul %123, %78, %cst_101 {dimension_numbers = #tpu.dot_dimension_numbers<[1], [1], [0], [0], [0, 0, 1, 0], [], []>} : vector<6x32xf32>, vector<36x32xf32>, vector<6x36xf32> -> vector<6x36xf32>
    %cst_102 = arith.constant 0.176776692 : f32
    %125 = vector.broadcast %cst_102 : f32 to vector<6x36xf32>
    %126 = arith.mulf %124, %125 : vector<6x36xf32>
    %c0_103 = arith.constant 0 : index
    %c0_104 = arith.constant 0 : index
    %c0_105 = arith.constant 0 : index
    %127 = vector.load %arg7[%c0_103, %c0_104, %c0_105] : memref<5x6x36xf32, #tpu.memory_space<vmem>>, vector<1x6x36xf32>
    %128 = vector.shape_cast %127 : vector<1x6x36xf32> to vector<6x36xf32>
    %129 = arith.addf %126, %128 : vector<6x36xf32>
    %cst_106 = arith.constant dense<0xFF800000> : vector<6xf32>
    %130 = vector.multi_reduction <maximumf>, %129, %cst_106 [1] : vector<6x36xf32> to vector<6xf32>
    %131 = vector.shape_cast %130 : vector<6xf32> to vector<6x1xf32>
    %132 = vector.broadcast %131 : vector<6x1xf32> to vector<6x36xf32>
    %133 = arith.subf %129, %132 : vector<6x36xf32>
    %134 = math.exp %133 : vector<6x36xf32>
    %cst_107 = arith.constant dense<0.000000e+00> : vector<6xf32>
    %135 = vector.multi_reduction <add>, %134, %cst_107 [1] : vector<6x36xf32> to vector<6xf32>
    %136 = vector.shape_cast %135 : vector<6xf32> to vector<6x1xf32>
    %137 = tpu.reciprocal %136 {approx = true} : vector<6x1xf32> -> vector<6x1xf32>
    %138 = vector.broadcast %137 : vector<6x1xf32> to vector<6x36xf32>
    %139 = arith.mulf %134, %138 : vector<6x36xf32>
    %cst_108 = arith.constant dense<0.000000e+00> : vector<6x32xf32>
    %140 = tpu.matmul %139, %83, %cst_108 {dimension_numbers = #tpu.dot_dimension_numbers<[1], [0], [0], [1], [0, 0, 1, 1], [], []>} : vector<6x36xf32>, vector<36x32xf32>, vector<6x32xf32> -> vector<6x32xf32>
    %c0_109 = arith.constant 0 : index
    %c0_110 = arith.constant 0 : index
    %141 = vector.load %arg39[%c0_109, %c0_110] : memref<32x32xf32, #tpu.memory_space<vmem>>, vector<32x32xf32>
    %cst_111 = arith.constant dense<0.000000e+00> : vector<6x32xf32>
    %142 = tpu.matmul %140, %141, %cst_111 {dimension_numbers = #tpu.dot_dimension_numbers<[1], [0], [0], [1], [0, 0, 1, 1], [], []>} : vector<6x32xf32>, vector<32x32xf32>, vector<6x32xf32> -> vector<6x32xf32>
    %c0_112 = arith.constant 0 : index
    %c0_113 = arith.constant 0 : index
    %143 = vector.load %arg40[%c0_112, %c0_113] : memref<1x32xf32, #tpu.memory_space<vmem>>, vector<1x32xf32>
    %144 = vector.broadcast %143 : vector<1x32xf32> to vector<6x32xf32>
    %145 = arith.addf %142, %144 : vector<6x32xf32>
    %146 = arith.addf %118, %145 : vector<6x32xf32>
    %c0_114 = arith.constant 0 : index
    %c0_115 = arith.constant 0 : index
    %147 = vector.load %arg41[%c0_114, %c0_115] : memref<32x64xf32, #tpu.memory_space<vmem>>, vector<32x64xf32>
    %cst_116 = arith.constant dense<0.000000e+00> : vector<6x64xf32>
    %148 = tpu.matmul %146, %147, %cst_116 {dimension_numbers = #tpu.dot_dimension_numbers<[1], [0], [0], [1], [0, 0, 1, 1], [], []>} : vector<6x32xf32>, vector<32x64xf32>, vector<6x64xf32> -> vector<6x64xf32>
    %c0_117 = arith.constant 0 : index
    %c0_118 = arith.constant 0 : index
    %149 = vector.load %arg42[%c0_117, %c0_118] : memref<1x64xf32, #tpu.memory_space<vmem>>, vector<1x64xf32>
    %150 = vector.broadcast %149 : vector<1x64xf32> to vector<6x64xf32>
    %151 = arith.addf %148, %150 : vector<6x64xf32>
    %cst_119 = arith.constant 0.000000e+00 : f32
    %152 = vector.broadcast %cst_119 : f32 to vector<6x64xf32>
    %153 = arith.maximumf %151, %152 : vector<6x64xf32>
    %c0_120 = arith.constant 0 : index
    %c0_121 = arith.constant 0 : index
    %154 = vector.load %arg43[%c0_120, %c0_121] : memref<64x32xf32, #tpu.memory_space<vmem>>, vector<64x32xf32>
    %cst_122 = arith.constant dense<0.000000e+00> : vector<6x32xf32>
    %155 = tpu.matmul %153, %154, %cst_122 {dimension_numbers = #tpu.dot_dimension_numbers<[1], [0], [0], [1], [0, 0, 1, 1], [], []>} : vector<6x64xf32>, vector<64x32xf32>, vector<6x32xf32> -> vector<6x32xf32>
    %c0_123 = arith.constant 0 : index
    %c0_124 = arith.constant 0 : index
    %156 = vector.load %arg44[%c0_123, %c0_124] : memref<1x32xf32, #tpu.memory_space<vmem>>, vector<1x32xf32>
    %157 = vector.broadcast %156 : vector<1x32xf32> to vector<6x32xf32>
    %158 = arith.addf %155, %157 : vector<6x32xf32>
    %159 = arith.addf %146, %158 : vector<6x32xf32>
    %c0_125 = arith.constant 0 : index
    %c0_126 = arith.constant 0 : index
    %160 = vector.load %arg45[%c0_125, %c0_126] : memref<32x2xf32, #tpu.memory_space<vmem>>, vector<32x2xf32>
    %cst_127 = arith.constant dense<0.000000e+00> : vector<6x2xf32>
    %161 = tpu.matmul %159, %160, %cst_127 {dimension_numbers = #tpu.dot_dimension_numbers<[1], [0], [0], [1], [0, 0, 1, 1], [], []>} : vector<6x32xf32>, vector<32x2xf32>, vector<6x2xf32> -> vector<6x2xf32>
    %c0_128 = arith.constant 0 : index
    %c0_129 = arith.constant 0 : index
    %162 = vector.load %arg46[%c0_128, %c0_129] : memref<1x2xf32, #tpu.memory_space<vmem>>, vector<1x2xf32>
    %163 = vector.broadcast %162 : vector<1x2xf32> to vector<6x2xf32>
    %164 = arith.addf %161, %163 : vector<6x2xf32>
    %c0_130 = arith.constant 0 : index
    %c0_131 = arith.constant 0 : index
    %165 = vector.load %arg47[%c0_130, %c0_131] : memref<32x6xf32, #tpu.memory_space<vmem>>, vector<32x6xf32>
    %cst_132 = arith.constant dense<0.000000e+00> : vector<6x6xf32>
    %166 = tpu.matmul %159, %165, %cst_132 {dimension_numbers = #tpu.dot_dimension_numbers<[1], [0], [0], [1], [0, 0, 1, 1], [], []>} : vector<6x32xf32>, vector<32x6xf32>, vector<6x6xf32> -> vector<6x6xf32>
    %c0_133 = arith.constant 0 : index
    %c0_134 = arith.constant 0 : index
    %167 = vector.load %arg48[%c0_133, %c0_134] : memref<1x6xf32, #tpu.memory_space<vmem>>, vector<1x6xf32>
    %168 = vector.broadcast %167 : vector<1x6xf32> to vector<6x6xf32>
    %169 = arith.addf %166, %168 : vector<6x6xf32>
    %c0_135 = arith.constant 0 : index
    %c0_136 = arith.constant 0 : index
    %c0_137 = arith.constant 0 : index
    %170 = vector.load %arg49[%c0_135, %c0_136, %c0_137] : memref<5x6x2xf32, #tpu.memory_space<vmem>>, vector<1x6x2xf32>
    %171 = vector.shape_cast %170 : vector<1x6x2xf32> to vector<6x2xf32>
    %172 = vector.shape_cast %164 : vector<6x2xf32> to vector<1x6x2xf32>
    tpu.vector_store %arg49[%c0_135, %c0_136, %c0_137], %172 {strides = array<i32>} : memref<5x6x2xf32, #tpu.memory_space<vmem>>, vector<1x6x2xf32>,
    %c0_138 = arith.constant 0 : index
    %c0_139 = arith.constant 0 : index
    %c0_140 = arith.constant 0 : index
    %173 = vector.load %arg50[%c0_138, %c0_139, %c0_140] : memref<5x6x6xf32, #tpu.memory_space<vmem>>, vector<1x6x6xf32>
    %174 = vector.shape_cast %173 : vector<1x6x6xf32> to vector<6x6xf32>
    %175 = vector.shape_cast %169 : vector<6x6xf32> to vector<1x6x6xf32>
    tpu.vector_store %arg50[%c0_138, %c0_139, %c0_140], %175 {strides = array<i32>} : memref<5x6x6xf32, #tpu.memory_space<vmem>>, vector<1x6x6xf32>,
    %c0_141 = arith.constant 0 : index
    %c0_142 = arith.constant 0 : index
    %c0_143 = arith.constant 0 : index
    %176 = vector.load %arg5[%c0_141, %c0_142, %c0_143] : memref<5x6x2xf32, #tpu.memory_space<vmem>>, vector<1x6x2xf32>
    %177 = vector.shape_cast %176 : vector<1x6x2xf32> to vector<6x2xf32>
    %178 = arith.subf %164, %177 : vector<6x2xf32>
    %179 = arith.mulf %178, %178 : vector<6x2xf32>
    %180 = vector.shape_cast %179 : vector<6x2xf32> to vector<1x6x2xf32>
    %cst_144 = arith.constant dense<0.000000e+00> : vector<1xf32>
    %181 = vector.multi_reduction <add>, %180, %cst_144 [1, 2] : vector<1x6x2xf32> to vector<1xf32>
    %182 = vector.shape_cast %181 : vector<1xf32> to vector<1x1x1xf32>
    %183 = vector.extract %182[0, 0, 0] : f32 from vector<1x1x1xf32>
    %184 = vector.broadcast %183 : f32 to vector<1x1xf32>
    %185 = arith.addf %94, %184 : vector<1x1xf32>
    %c0_145 = arith.constant 0 : index
    %c0_146 = arith.constant 0 : index
    %c0_147 = arith.constant 0 : index
    %186 = vector.load %arg4[%c0_145, %c0_146, %c0_147] : memref<5x6x6xf32, #tpu.memory_space<vmem>>, vector<1x6x6xf32>
    %187 = vector.shape_cast %186 : vector<1x6x6xf32> to vector<6x6xf32>
    %cst_148 = arith.constant 0.000000e+00 : f32
    %188 = vector.broadcast %cst_148 : f32 to vector<6x6xf32>
    %189 = arith.cmpf ogt, %187, %188 : vector<6x6xf32>
    %cst_149 = arith.constant 2.000000e+00 : f32
    %cst_150 = arith.constant 1.000000e+00 : f32
    %190 = vector.broadcast %cst_149 : f32 to vector<6x6xf32>
    %191 = vector.broadcast %cst_150 : f32 to vector<6x6xf32>
    %192 = arith.select %189, %190, %191 : vector<6x6xi1>, vector<6x6xf32>
    %193 = arith.subf %169, %187 : vector<6x6xf32>
    %194 = arith.mulf %193, %192 : vector<6x6xf32>
    %195 = arith.mulf %194, %194 : vector<6x6xf32>
    %196 = vector.shape_cast %195 : vector<6x6xf32> to vector<1x6x6xf32>
    %cst_151 = arith.constant dense<0.000000e+00> : vector<1xf32>
    %197 = vector.multi_reduction <add>, %196, %cst_151 [1, 2] : vector<1x6x6xf32> to vector<1xf32>
    %198 = vector.shape_cast %197 : vector<1xf32> to vector<1x1x1xf32>
    %199 = vector.extract %198[0, 0, 0] : f32 from vector<1x1x1xf32>
    %200 = vector.broadcast %199 : f32 to vector<1x1xf32>
    %201 = arith.addf %95, %200 : vector<1x1xf32>
    %c0_152 = arith.constant 0 : index
    %c0_153 = arith.constant 0 : index
    %202 = vector.load %arg8[%c0_152, %c0_153] : memref<6x32xf32, #tpu.memory_space<vmem>>, vector<6x32xf32>
    %cst_154 = arith.constant dense<0.000000e+00> : vector<6x32xf32>
    %203 = tpu.matmul %169, %202, %cst_154 {dimension_numbers = #tpu.dot_dimension_numbers<[1], [0], [0], [1], [0, 0, 1, 1], [], []>} : vector<6x6xf32>, vector<6x32xf32>, vector<6x32xf32> -> vector<6x32xf32>
    %c0_155 = arith.constant 0 : index
    %c0_156 = arith.constant 0 : index
    %204 = vector.load %arg10[%c0_155, %c0_156] : memref<2x32xf32, #tpu.memory_space<vmem>>, vector<2x32xf32>
    %cst_157 = arith.constant dense<0.000000e+00> : vector<6x32xf32>
    %205 = tpu.matmul %164, %204, %cst_157 {dimension_numbers = #tpu.dot_dimension_numbers<[1], [0], [0], [1], [0, 0, 1, 1], [], []>} : vector<6x2xf32>, vector<2x32xf32>, vector<6x32xf32> -> vector<6x32xf32>
    %206 = arith.addf %203, %205 : vector<6x32xf32>
    %c0_158 = arith.constant 0 : index
    %c0_159 = arith.constant 0 : index
    %207 = vector.load %arg11[%c0_158, %c0_159] : memref<1x32xf32, #tpu.memory_space<vmem>>, vector<1x32xf32>
    %cst_160 = arith.constant 1.000000e-01 : f32
    %208 = vector.broadcast %cst_160 : f32 to vector<1x32xf32>
    %209 = arith.mulf %208, %207 : vector<1x32xf32>
    %210 = vector.broadcast %209 : vector<1x32xf32> to vector<6x32xf32>
    %211 = arith.addf %206, %210 : vector<6x32xf32>
    %c0_161 = arith.constant 0 : index
    %c0_162 = arith.constant 0 : index
    %212 = vector.load %arg12[%c0_161, %c0_162] : memref<1x32xf32, #tpu.memory_space<vmem>>, vector<1x32xf32>
    %213 = vector.broadcast %212 : vector<1x32xf32> to vector<6x32xf32>
    %214 = arith.addf %211, %213 : vector<6x32xf32>
    %cst_163 = arith.constant 0.000000e+00 : f32
    %215 = vector.broadcast %cst_163 : f32 to vector<6x32xf32>
    %216 = arith.maximumf %214, %215 : vector<6x32xf32>
    %c0_164 = arith.constant 0 : index
    %c0_165 = arith.constant 0 : index
    %217 = vector.load %arg27[%c0_164, %c0_165] : memref<32x32xf32, #tpu.memory_space<vmem>>, vector<32x32xf32>
    %cst_166 = arith.constant dense<0.000000e+00> : vector<6x32xf32>
    %218 = tpu.matmul %216, %217, %cst_166 {dimension_numbers = #tpu.dot_dimension_numbers<[1], [0], [0], [1], [0, 0, 1, 1], [], []>} : vector<6x32xf32>, vector<32x32xf32>, vector<6x32xf32> -> vector<6x32xf32>
    %c0_167 = arith.constant 0 : index
    %c0_168 = arith.constant 0 : index
    %219 = vector.load %arg28[%c0_167, %c0_168] : memref<1x32xf32, #tpu.memory_space<vmem>>, vector<1x32xf32>
    %220 = vector.broadcast %219 : vector<1x32xf32> to vector<6x32xf32>
    %221 = arith.addf %218, %220 : vector<6x32xf32>
    %c0_169 = arith.constant 0 : index
    %c0_170 = arith.constant 0 : index
    %222 = vector.load %arg29[%c0_169, %c0_170] : memref<32x32xf32, #tpu.memory_space<vmem>>, vector<32x32xf32>
    %cst_171 = arith.constant dense<0.000000e+00> : vector<6x32xf32>
    %223 = tpu.matmul %216, %222, %cst_171 {dimension_numbers = #tpu.dot_dimension_numbers<[1], [0], [0], [1], [0, 0, 1, 1], [], []>} : vector<6x32xf32>, vector<32x32xf32>, vector<6x32xf32> -> vector<6x32xf32>
    %c0_172 = arith.constant 0 : index
    %c0_173 = arith.constant 0 : index
    %224 = vector.load %arg30[%c0_172, %c0_173] : memref<1x32xf32, #tpu.memory_space<vmem>>, vector<1x32xf32>
    %225 = vector.broadcast %224 : vector<1x32xf32> to vector<6x32xf32>
    %226 = arith.addf %223, %225 : vector<6x32xf32>
    %c0_174 = arith.constant 0 : index
    %c0_175 = arith.constant 0 : index
    %227 = vector.load %arg25[%c0_174, %c0_175] : memref<32x32xf32, #tpu.memory_space<vmem>>, vector<32x32xf32>
    %cst_176 = arith.constant dense<0.000000e+00> : vector<6x32xf32>
    %228 = tpu.matmul %216, %227, %cst_176 {dimension_numbers = #tpu.dot_dimension_numbers<[1], [0], [0], [1], [0, 0, 1, 1], [], []>} : vector<6x32xf32>, vector<32x32xf32>, vector<6x32xf32> -> vector<6x32xf32>
    %c0_177 = arith.constant 0 : index
    %c0_178 = arith.constant 0 : index
    %229 = vector.load %arg26[%c0_177, %c0_178] : memref<1x32xf32, #tpu.memory_space<vmem>>, vector<1x32xf32>
    %230 = vector.broadcast %229 : vector<1x32xf32> to vector<6x32xf32>
    %231 = arith.addf %228, %230 : vector<6x32xf32>
    %232 = arith.mulf %231, %88 : vector<6x32xf32>
    %cst_179 = arith.constant dense<0.000000e+00> : vector<6xf32>
    %233 = vector.multi_reduction <add>, %232, %cst_179 [1] : vector<6x32xf32> to vector<6xf32>
    %234 = vector.shape_cast %233 : vector<6xf32> to vector<6x1xf32>
    %cst_180 = arith.constant 0.176776692 : f32
    %235 = vector.broadcast %cst_180 : f32 to vector<6x1xf32>
    %236 = arith.mulf %234, %235 : vector<6x1xf32>
    %237 = arith.mulf %231, %221 : vector<6x32xf32>
    %cst_181 = arith.constant dense<0.000000e+00> : vector<6xf32>
    %238 = vector.multi_reduction <add>, %237, %cst_181 [1] : vector<6x32xf32> to vector<6xf32>
    %239 = vector.shape_cast %238 : vector<6xf32> to vector<6x1xf32>
    %cst_182 = arith.constant 0.176776692 : f32
    %240 = vector.broadcast %cst_182 : f32 to vector<6x1xf32>
    %241 = arith.mulf %239, %240 : vector<6x1xf32>
    %242 = arith.maximumf %236, %241 : vector<6x1xf32>
    %243 = arith.subf %236, %242 : vector<6x1xf32>
    %244 = math.exp %243 : vector<6x1xf32>
    %245 = arith.subf %241, %242 : vector<6x1xf32>
    %246 = math.exp %245 : vector<6x1xf32>
    %247 = arith.addf %244, %246 : vector<6x1xf32>
    %248 = vector.broadcast %244 : vector<6x1xf32> to vector<6x32xf32>
    %249 = arith.mulf %248, %93 : vector<6x32xf32>
    %250 = vector.broadcast %246 : vector<6x1xf32> to vector<6x32xf32>
    %251 = arith.mulf %250, %226 : vector<6x32xf32>
    %252 = arith.addf %249, %251 : vector<6x32xf32>
    %253 = tpu.reciprocal %247 {approx = true} : vector<6x1xf32> -> vector<6x1xf32>
    %254 = vector.broadcast %253 : vector<6x1xf32> to vector<6x32xf32>
    %255 = arith.mulf %252, %254 : vector<6x32xf32>
    %c0_183 = arith.constant 0 : index
    %c0_184 = arith.constant 0 : index
    %256 = vector.load %arg31[%c0_183, %c0_184] : memref<32x32xf32, #tpu.memory_space<vmem>>, vector<32x32xf32>
    %cst_185 = arith.constant dense<0.000000e+00> : vector<6x32xf32>
    %257 = tpu.matmul %255, %256, %cst_185 {dimension_numbers = #tpu.dot_dimension_numbers<[1], [0], [0], [1], [0, 0, 1, 1], [], []>} : vector<6x32xf32>, vector<32x32xf32>, vector<6x32xf32> -> vector<6x32xf32>
    %c0_186 = arith.constant 0 : index
    %c0_187 = arith.constant 0 : index
    %258 = vector.load %arg32[%c0_186, %c0_187] : memref<1x32xf32, #tpu.memory_space<vmem>>, vector<1x32xf32>
    %259 = vector.broadcast %258 : vector<1x32xf32> to vector<6x32xf32>
    %260 = arith.addf %257, %259 : vector<6x32xf32>
    %261 = arith.addf %260, %216 : vector<6x32xf32>
    %c0_188 = arith.constant 0 : index
    %c0_189 = arith.constant 0 : index
    %262 = vector.load %arg33[%c0_188, %c0_189] : memref<32x32xf32, #tpu.memory_space<vmem>>, vector<32x32xf32>
    %cst_190 = arith.constant dense<0.000000e+00> : vector<6x32xf32>
    %263 = tpu.matmul %261, %262, %cst_190 {dimension_numbers = #tpu.dot_dimension_numbers<[1], [0], [0], [1], [0, 0, 1, 1], [], []>} : vector<6x32xf32>, vector<32x32xf32>, vector<6x32xf32> -> vector<6x32xf32>
    %c0_191 = arith.constant 0 : index
    %c0_192 = arith.constant 0 : index
    %264 = vector.load %arg34[%c0_191, %c0_192] : memref<1x32xf32, #tpu.memory_space<vmem>>, vector<1x32xf32>
    %265 = vector.broadcast %264 : vector<1x32xf32> to vector<6x32xf32>
    %266 = arith.addf %263, %265 : vector<6x32xf32>
    %cst_193 = arith.constant dense<0.000000e+00> : vector<6x36xf32>
    %267 = tpu.matmul %266, %78, %cst_193 {dimension_numbers = #tpu.dot_dimension_numbers<[1], [1], [0], [0], [0, 0, 1, 0], [], []>} : vector<6x32xf32>, vector<36x32xf32>, vector<6x36xf32> -> vector<6x36xf32>
    %cst_194 = arith.constant 0.176776692 : f32
    %268 = vector.broadcast %cst_194 : f32 to vector<6x36xf32>
    %269 = arith.mulf %267, %268 : vector<6x36xf32>
    %c1 = arith.constant 1 : index
    %c0_195 = arith.constant 0 : index
    %c0_196 = arith.constant 0 : index
    %270 = vector.load %arg7[%c1, %c0_195, %c0_196] : memref<5x6x36xf32, #tpu.memory_space<vmem>>, vector<1x6x36xf32>
    %271 = vector.shape_cast %270 : vector<1x6x36xf32> to vector<6x36xf32>
    %272 = arith.addf %269, %271 : vector<6x36xf32>
    %cst_197 = arith.constant dense<0xFF800000> : vector<6xf32>
    %273 = vector.multi_reduction <maximumf>, %272, %cst_197 [1] : vector<6x36xf32> to vector<6xf32>
    %274 = vector.shape_cast %273 : vector<6xf32> to vector<6x1xf32>
    %275 = vector.broadcast %274 : vector<6x1xf32> to vector<6x36xf32>
    %276 = arith.subf %272, %275 : vector<6x36xf32>
    %277 = math.exp %276 : vector<6x36xf32>
    %cst_198 = arith.constant dense<0.000000e+00> : vector<6xf32>
    %278 = vector.multi_reduction <add>, %277, %cst_198 [1] : vector<6x36xf32> to vector<6xf32>
    %279 = vector.shape_cast %278 : vector<6xf32> to vector<6x1xf32>
    %280 = tpu.reciprocal %279 {approx = true} : vector<6x1xf32> -> vector<6x1xf32>
    %281 = vector.broadcast %280 : vector<6x1xf32> to vector<6x36xf32>
    %282 = arith.mulf %277, %281 : vector<6x36xf32>
    %cst_199 = arith.constant dense<0.000000e+00> : vector<6x32xf32>
    %283 = tpu.matmul %282, %83, %cst_199 {dimension_numbers = #tpu.dot_dimension_numbers<[1], [0], [0], [1], [0, 0, 1, 1], [], []>} : vector<6x36xf32>, vector<36x32xf32>, vector<6x32xf32> -> vector<6x32xf32>
    %c0_200 = arith.constant 0 : index
    %c0_201 = arith.constant 0 : index
    %284 = vector.load %arg39[%c0_200, %c0_201] : memref<32x32xf32, #tpu.memory_space<vmem>>, vector<32x32xf32>
    %cst_202 = arith.constant dense<0.000000e+00> : vector<6x32xf32>
    %285 = tpu.matmul %283, %284, %cst_202 {dimension_numbers = #tpu.dot_dimension_numbers<[1], [0], [0], [1], [0, 0, 1, 1], [], []>} : vector<6x32xf32>, vector<32x32xf32>, vector<6x32xf32> -> vector<6x32xf32>
    %c0_203 = arith.constant 0 : index
    %c0_204 = arith.constant 0 : index
    %286 = vector.load %arg40[%c0_203, %c0_204] : memref<1x32xf32, #tpu.memory_space<vmem>>, vector<1x32xf32>
    %287 = vector.broadcast %286 : vector<1x32xf32> to vector<6x32xf32>
    %288 = arith.addf %285, %287 : vector<6x32xf32>
    %289 = arith.addf %261, %288 : vector<6x32xf32>
    %c0_205 = arith.constant 0 : index
    %c0_206 = arith.constant 0 : index
    %290 = vector.load %arg41[%c0_205, %c0_206] : memref<32x64xf32, #tpu.memory_space<vmem>>, vector<32x64xf32>
    %cst_207 = arith.constant dense<0.000000e+00> : vector<6x64xf32>
    %291 = tpu.matmul %289, %290, %cst_207 {dimension_numbers = #tpu.dot_dimension_numbers<[1], [0], [0], [1], [0, 0, 1, 1], [], []>} : vector<6x32xf32>, vector<32x64xf32>, vector<6x64xf32> -> vector<6x64xf32>
    %c0_208 = arith.constant 0 : index
    %c0_209 = arith.constant 0 : index
    %292 = vector.load %arg42[%c0_208, %c0_209] : memref<1x64xf32, #tpu.memory_space<vmem>>, vector<1x64xf32>
    %293 = vector.broadcast %292 : vector<1x64xf32> to vector<6x64xf32>
    %294 = arith.addf %291, %293 : vector<6x64xf32>
    %cst_210 = arith.constant 0.000000e+00 : f32
    %295 = vector.broadcast %cst_210 : f32 to vector<6x64xf32>
    %296 = arith.maximumf %294, %295 : vector<6x64xf32>
    %c0_211 = arith.constant 0 : index
    %c0_212 = arith.constant 0 : index
    %297 = vector.load %arg43[%c0_211, %c0_212] : memref<64x32xf32, #tpu.memory_space<vmem>>, vector<64x32xf32>
    %cst_213 = arith.constant dense<0.000000e+00> : vector<6x32xf32>
    %298 = tpu.matmul %296, %297, %cst_213 {dimension_numbers = #tpu.dot_dimension_numbers<[1], [0], [0], [1], [0, 0, 1, 1], [], []>} : vector<6x64xf32>, vector<64x32xf32>, vector<6x32xf32> -> vector<6x32xf32>
    %c0_214 = arith.constant 0 : index
    %c0_215 = arith.constant 0 : index
    %299 = vector.load %arg44[%c0_214, %c0_215] : memref<1x32xf32, #tpu.memory_space<vmem>>, vector<1x32xf32>
    %300 = vector.broadcast %299 : vector<1x32xf32> to vector<6x32xf32>
    %301 = arith.addf %298, %300 : vector<6x32xf32>
    %302 = arith.addf %289, %301 : vector<6x32xf32>
    %c0_216 = arith.constant 0 : index
    %c0_217 = arith.constant 0 : index
    %303 = vector.load %arg45[%c0_216, %c0_217] : memref<32x2xf32, #tpu.memory_space<vmem>>, vector<32x2xf32>
    %cst_218 = arith.constant dense<0.000000e+00> : vector<6x2xf32>
    %304 = tpu.matmul %302, %303, %cst_218 {dimension_numbers = #tpu.dot_dimension_numbers<[1], [0], [0], [1], [0, 0, 1, 1], [], []>} : vector<6x32xf32>, vector<32x2xf32>, vector<6x2xf32> -> vector<6x2xf32>
    %c0_219 = arith.constant 0 : index
    %c0_220 = arith.constant 0 : index
    %305 = vector.load %arg46[%c0_219, %c0_220] : memref<1x2xf32, #tpu.memory_space<vmem>>, vector<1x2xf32>
    %306 = vector.broadcast %305 : vector<1x2xf32> to vector<6x2xf32>
    %307 = arith.addf %304, %306 : vector<6x2xf32>
    %c0_221 = arith.constant 0 : index
    %c0_222 = arith.constant 0 : index
    %308 = vector.load %arg47[%c0_221, %c0_222] : memref<32x6xf32, #tpu.memory_space<vmem>>, vector<32x6xf32>
    %cst_223 = arith.constant dense<0.000000e+00> : vector<6x6xf32>
    %309 = tpu.matmul %302, %308, %cst_223 {dimension_numbers = #tpu.dot_dimension_numbers<[1], [0], [0], [1], [0, 0, 1, 1], [], []>} : vector<6x32xf32>, vector<32x6xf32>, vector<6x6xf32> -> vector<6x6xf32>
    %c0_224 = arith.constant 0 : index
    %c0_225 = arith.constant 0 : index
    %310 = vector.load %arg48[%c0_224, %c0_225] : memref<1x6xf32, #tpu.memory_space<vmem>>, vector<1x6xf32>
    %311 = vector.broadcast %310 : vector<1x6xf32> to vector<6x6xf32>
    %312 = arith.addf %309, %311 : vector<6x6xf32>
    %c1_226 = arith.constant 1 : index
    %c0_227 = arith.constant 0 : index
    %c0_228 = arith.constant 0 : index
    %313 = vector.load %arg49[%c1_226, %c0_227, %c0_228] : memref<5x6x2xf32, #tpu.memory_space<vmem>>, vector<1x6x2xf32>
    %314 = vector.shape_cast %313 : vector<1x6x2xf32> to vector<6x2xf32>
    %315 = vector.shape_cast %307 : vector<6x2xf32> to vector<1x6x2xf32>
    tpu.vector_store %arg49[%c1_226, %c0_227, %c0_228], %315 {strides = array<i32>} : memref<5x6x2xf32, #tpu.memory_space<vmem>>, vector<1x6x2xf32>,
    %c1_229 = arith.constant 1 : index
    %c0_230 = arith.constant 0 : index
    %c0_231 = arith.constant 0 : index
    %316 = vector.load %arg50[%c1_229, %c0_230, %c0_231] : memref<5x6x6xf32, #tpu.memory_space<vmem>>, vector<1x6x6xf32>
    %317 = vector.shape_cast %316 : vector<1x6x6xf32> to vector<6x6xf32>
    %318 = vector.shape_cast %312 : vector<6x6xf32> to vector<1x6x6xf32>
    tpu.vector_store %arg50[%c1_229, %c0_230, %c0_231], %318 {strides = array<i32>} : memref<5x6x6xf32, #tpu.memory_space<vmem>>, vector<1x6x6xf32>,
    %c1_232 = arith.constant 1 : index
    %c0_233 = arith.constant 0 : index
    %c0_234 = arith.constant 0 : index
    %319 = vector.load %arg5[%c1_232, %c0_233, %c0_234] : memref<5x6x2xf32, #tpu.memory_space<vmem>>, vector<1x6x2xf32>
    %320 = vector.shape_cast %319 : vector<1x6x2xf32> to vector<6x2xf32>
    %321 = arith.subf %307, %320 : vector<6x2xf32>
    %322 = arith.mulf %321, %321 : vector<6x2xf32>
    %323 = vector.shape_cast %322 : vector<6x2xf32> to vector<1x6x2xf32>
    %cst_235 = arith.constant dense<0.000000e+00> : vector<1xf32>
    %324 = vector.multi_reduction <add>, %323, %cst_235 [1, 2] : vector<1x6x2xf32> to vector<1xf32>
    %325 = vector.shape_cast %324 : vector<1xf32> to vector<1x1x1xf32>
    %326 = vector.extract %325[0, 0, 0] : f32 from vector<1x1x1xf32>
    %327 = vector.broadcast %326 : f32 to vector<1x1xf32>
    %328 = arith.addf %185, %327 : vector<1x1xf32>
    %c1_236 = arith.constant 1 : index
    %c0_237 = arith.constant 0 : index
    %c0_238 = arith.constant 0 : index
    %329 = vector.load %arg4[%c1_236, %c0_237, %c0_238] : memref<5x6x6xf32, #tpu.memory_space<vmem>>, vector<1x6x6xf32>
    %330 = vector.shape_cast %329 : vector<1x6x6xf32> to vector<6x6xf32>
    %cst_239 = arith.constant 0.000000e+00 : f32
    %331 = vector.broadcast %cst_239 : f32 to vector<6x6xf32>
    %332 = arith.cmpf ogt, %330, %331 : vector<6x6xf32>
    %cst_240 = arith.constant 2.000000e+00 : f32
    %cst_241 = arith.constant 1.000000e+00 : f32
    %333 = vector.broadcast %cst_240 : f32 to vector<6x6xf32>
    %334 = vector.broadcast %cst_241 : f32 to vector<6x6xf32>
    %335 = arith.select %332, %333, %334 : vector<6x6xi1>, vector<6x6xf32>
    %336 = arith.subf %312, %330 : vector<6x6xf32>
    %337 = arith.mulf %336, %335 : vector<6x6xf32>
    %338 = arith.mulf %337, %337 : vector<6x6xf32>
    %339 = vector.shape_cast %338 : vector<6x6xf32> to vector<1x6x6xf32>
    %cst_242 = arith.constant dense<0.000000e+00> : vector<1xf32>
    %340 = vector.multi_reduction <add>, %339, %cst_242 [1, 2] : vector<1x6x6xf32> to vector<1xf32>
    %341 = vector.shape_cast %340 : vector<1xf32> to vector<1x1x1xf32>
    %342 = vector.extract %341[0, 0, 0] : f32 from vector<1x1x1xf32>
    %343 = vector.broadcast %342 : f32 to vector<1x1xf32>
    %344 = arith.addf %201, %343 : vector<1x1xf32>
    %c0_243 = arith.constant 0 : index
    %c0_244 = arith.constant 0 : index
    %345 = vector.load %arg8[%c0_243, %c0_244] : memref<6x32xf32, #tpu.memory_space<vmem>>, vector<6x32xf32>
    %cst_245 = arith.constant dense<0.000000e+00> : vector<6x32xf32>
    %346 = tpu.matmul %312, %345, %cst_245 {dimension_numbers = #tpu.dot_dimension_numbers<[1], [0], [0], [1], [0, 0, 1, 1], [], []>} : vector<6x6xf32>, vector<6x32xf32>, vector<6x32xf32> -> vector<6x32xf32>
    %c0_246 = arith.constant 0 : index
    %c0_247 = arith.constant 0 : index
    %347 = vector.load %arg10[%c0_246, %c0_247] : memref<2x32xf32, #tpu.memory_space<vmem>>, vector<2x32xf32>
    %cst_248 = arith.constant dense<0.000000e+00> : vector<6x32xf32>
    %348 = tpu.matmul %307, %347, %cst_248 {dimension_numbers = #tpu.dot_dimension_numbers<[1], [0], [0], [1], [0, 0, 1, 1], [], []>} : vector<6x2xf32>, vector<2x32xf32>, vector<6x32xf32> -> vector<6x32xf32>
    %349 = arith.addf %346, %348 : vector<6x32xf32>
    %c0_249 = arith.constant 0 : index
    %c0_250 = arith.constant 0 : index
    %350 = vector.load %arg11[%c0_249, %c0_250] : memref<1x32xf32, #tpu.memory_space<vmem>>, vector<1x32xf32>
    %cst_251 = arith.constant 2.000000e-01 : f32
    %351 = vector.broadcast %cst_251 : f32 to vector<1x32xf32>
    %352 = arith.mulf %351, %350 : vector<1x32xf32>
    %353 = vector.broadcast %352 : vector<1x32xf32> to vector<6x32xf32>
    %354 = arith.addf %349, %353 : vector<6x32xf32>
    %c0_252 = arith.constant 0 : index
    %c0_253 = arith.constant 0 : index
    %355 = vector.load %arg12[%c0_252, %c0_253] : memref<1x32xf32, #tpu.memory_space<vmem>>, vector<1x32xf32>
    %356 = vector.broadcast %355 : vector<1x32xf32> to vector<6x32xf32>
    %357 = arith.addf %354, %356 : vector<6x32xf32>
    %cst_254 = arith.constant 0.000000e+00 : f32
    %358 = vector.broadcast %cst_254 : f32 to vector<6x32xf32>
    %359 = arith.maximumf %357, %358 : vector<6x32xf32>
    %c0_255 = arith.constant 0 : index
    %c0_256 = arith.constant 0 : index
    %360 = vector.load %arg27[%c0_255, %c0_256] : memref<32x32xf32, #tpu.memory_space<vmem>>, vector<32x32xf32>
    %cst_257 = arith.constant dense<0.000000e+00> : vector<6x32xf32>
    %361 = tpu.matmul %359, %360, %cst_257 {dimension_numbers = #tpu.dot_dimension_numbers<[1], [0], [0], [1], [0, 0, 1, 1], [], []>} : vector<6x32xf32>, vector<32x32xf32>, vector<6x32xf32> -> vector<6x32xf32>
    %c0_258 = arith.constant 0 : index
    %c0_259 = arith.constant 0 : index
    %362 = vector.load %arg28[%c0_258, %c0_259] : memref<1x32xf32, #tpu.memory_space<vmem>>, vector<1x32xf32>
    %363 = vector.broadcast %362 : vector<1x32xf32> to vector<6x32xf32>
    %364 = arith.addf %361, %363 : vector<6x32xf32>
    %c0_260 = arith.constant 0 : index
    %c0_261 = arith.constant 0 : index
    %365 = vector.load %arg29[%c0_260, %c0_261] : memref<32x32xf32, #tpu.memory_space<vmem>>, vector<32x32xf32>
    %cst_262 = arith.constant dense<0.000000e+00> : vector<6x32xf32>
    %366 = tpu.matmul %359, %365, %cst_262 {dimension_numbers = #tpu.dot_dimension_numbers<[1], [0], [0], [1], [0, 0, 1, 1], [], []>} : vector<6x32xf32>, vector<32x32xf32>, vector<6x32xf32> -> vector<6x32xf32>
    %c0_263 = arith.constant 0 : index
    %c0_264 = arith.constant 0 : index
    %367 = vector.load %arg30[%c0_263, %c0_264] : memref<1x32xf32, #tpu.memory_space<vmem>>, vector<1x32xf32>
    %368 = vector.broadcast %367 : vector<1x32xf32> to vector<6x32xf32>
    %369 = arith.addf %366, %368 : vector<6x32xf32>
    %c0_265 = arith.constant 0 : index
    %c0_266 = arith.constant 0 : index
    %370 = vector.load %arg25[%c0_265, %c0_266] : memref<32x32xf32, #tpu.memory_space<vmem>>, vector<32x32xf32>
    %cst_267 = arith.constant dense<0.000000e+00> : vector<6x32xf32>
    %371 = tpu.matmul %359, %370, %cst_267 {dimension_numbers = #tpu.dot_dimension_numbers<[1], [0], [0], [1], [0, 0, 1, 1], [], []>} : vector<6x32xf32>, vector<32x32xf32>, vector<6x32xf32> -> vector<6x32xf32>
    %c0_268 = arith.constant 0 : index
    %c0_269 = arith.constant 0 : index
    %372 = vector.load %arg26[%c0_268, %c0_269] : memref<1x32xf32, #tpu.memory_space<vmem>>, vector<1x32xf32>
    %373 = vector.broadcast %372 : vector<1x32xf32> to vector<6x32xf32>
    %374 = arith.addf %371, %373 : vector<6x32xf32>
    %375 = arith.mulf %374, %88 : vector<6x32xf32>
    %cst_270 = arith.constant dense<0.000000e+00> : vector<6xf32>
    %376 = vector.multi_reduction <add>, %375, %cst_270 [1] : vector<6x32xf32> to vector<6xf32>
    %377 = vector.shape_cast %376 : vector<6xf32> to vector<6x1xf32>
    %cst_271 = arith.constant 0.176776692 : f32
    %378 = vector.broadcast %cst_271 : f32 to vector<6x1xf32>
    %379 = arith.mulf %377, %378 : vector<6x1xf32>
    %380 = arith.mulf %374, %221 : vector<6x32xf32>
    %cst_272 = arith.constant dense<0.000000e+00> : vector<6xf32>
    %381 = vector.multi_reduction <add>, %380, %cst_272 [1] : vector<6x32xf32> to vector<6xf32>
    %382 = vector.shape_cast %381 : vector<6xf32> to vector<6x1xf32>
    %cst_273 = arith.constant 0.176776692 : f32
    %383 = vector.broadcast %cst_273 : f32 to vector<6x1xf32>
    %384 = arith.mulf %382, %383 : vector<6x1xf32>
    %385 = arith.mulf %374, %364 : vector<6x32xf32>
    %cst_274 = arith.constant dense<0.000000e+00> : vector<6xf32>
    %386 = vector.multi_reduction <add>, %385, %cst_274 [1] : vector<6x32xf32> to vector<6xf32>
    %387 = vector.shape_cast %386 : vector<6xf32> to vector<6x1xf32>
    %cst_275 = arith.constant 0.176776692 : f32
    %388 = vector.broadcast %cst_275 : f32 to vector<6x1xf32>
    %389 = arith.mulf %387, %388 : vector<6x1xf32>
    %390 = arith.maximumf %379, %384 : vector<6x1xf32>
    %391 = arith.maximumf %390, %389 : vector<6x1xf32>
    %392 = arith.subf %379, %391 : vector<6x1xf32>
    %393 = math.exp %392 : vector<6x1xf32>
    %394 = arith.subf %384, %391 : vector<6x1xf32>
    %395 = math.exp %394 : vector<6x1xf32>
    %396 = arith.subf %389, %391 : vector<6x1xf32>
    %397 = math.exp %396 : vector<6x1xf32>
    %398 = arith.addf %393, %395 : vector<6x1xf32>
    %399 = arith.addf %398, %397 : vector<6x1xf32>
    %400 = vector.broadcast %393 : vector<6x1xf32> to vector<6x32xf32>
    %401 = arith.mulf %400, %93 : vector<6x32xf32>
    %402 = vector.broadcast %395 : vector<6x1xf32> to vector<6x32xf32>
    %403 = arith.mulf %402, %226 : vector<6x32xf32>
    %404 = arith.addf %401, %403 : vector<6x32xf32>
    %405 = vector.broadcast %397 : vector<6x1xf32> to vector<6x32xf32>
    %406 = arith.mulf %405, %369 : vector<6x32xf32>
    %407 = arith.addf %404, %406 : vector<6x32xf32>
    %408 = tpu.reciprocal %399 {approx = true} : vector<6x1xf32> -> vector<6x1xf32>
    %409 = vector.broadcast %408 : vector<6x1xf32> to vector<6x32xf32>
    %410 = arith.mulf %407, %409 : vector<6x32xf32>
    %c0_276 = arith.constant 0 : index
    %c0_277 = arith.constant 0 : index
    %411 = vector.load %arg31[%c0_276, %c0_277] : memref<32x32xf32, #tpu.memory_space<vmem>>, vector<32x32xf32>
    %cst_278 = arith.constant dense<0.000000e+00> : vector<6x32xf32>
    %412 = tpu.matmul %410, %411, %cst_278 {dimension_numbers = #tpu.dot_dimension_numbers<[1], [0], [0], [1], [0, 0, 1, 1], [], []>} : vector<6x32xf32>, vector<32x32xf32>, vector<6x32xf32> -> vector<6x32xf32>
    %c0_279 = arith.constant 0 : index
    %c0_280 = arith.constant 0 : index
    %413 = vector.load %arg32[%c0_279, %c0_280] : memref<1x32xf32, #tpu.memory_space<vmem>>, vector<1x32xf32>
    %414 = vector.broadcast %413 : vector<1x32xf32> to vector<6x32xf32>
    %415 = arith.addf %412, %414 : vector<6x32xf32>
    %416 = arith.addf %415, %359 : vector<6x32xf32>
    %c0_281 = arith.constant 0 : index
    %c0_282 = arith.constant 0 : index
    %417 = vector.load %arg33[%c0_281, %c0_282] : memref<32x32xf32, #tpu.memory_space<vmem>>, vector<32x32xf32>
    %cst_283 = arith.constant dense<0.000000e+00> : vector<6x32xf32>
    %418 = tpu.matmul %416, %417, %cst_283 {dimension_numbers = #tpu.dot_dimension_numbers<[1], [0], [0], [1], [0, 0, 1, 1], [], []>} : vector<6x32xf32>, vector<32x32xf32>, vector<6x32xf32> -> vector<6x32xf32>
    %c0_284 = arith.constant 0 : index
    %c0_285 = arith.constant 0 : index
    %419 = vector.load %arg34[%c0_284, %c0_285] : memref<1x32xf32, #tpu.memory_space<vmem>>, vector<1x32xf32>
    %420 = vector.broadcast %419 : vector<1x32xf32> to vector<6x32xf32>
    %421 = arith.addf %418, %420 : vector<6x32xf32>
    %cst_286 = arith.constant dense<0.000000e+00> : vector<6x36xf32>
    %422 = tpu.matmul %421, %78, %cst_286 {dimension_numbers = #tpu.dot_dimension_numbers<[1], [1], [0], [0], [0, 0, 1, 0], [], []>} : vector<6x32xf32>, vector<36x32xf32>, vector<6x36xf32> -> vector<6x36xf32>
    %cst_287 = arith.constant 0.176776692 : f32
    %423 = vector.broadcast %cst_287 : f32 to vector<6x36xf32>
    %424 = arith.mulf %422, %423 : vector<6x36xf32>
    %c2 = arith.constant 2 : index
    %c0_288 = arith.constant 0 : index
    %c0_289 = arith.constant 0 : index
    %425 = vector.load %arg7[%c2, %c0_288, %c0_289] : memref<5x6x36xf32, #tpu.memory_space<vmem>>, vector<1x6x36xf32>
    %426 = vector.shape_cast %425 : vector<1x6x36xf32> to vector<6x36xf32>
    %427 = arith.addf %424, %426 : vector<6x36xf32>
    %cst_290 = arith.constant dense<0xFF800000> : vector<6xf32>
    %428 = vector.multi_reduction <maximumf>, %427, %cst_290 [1] : vector<6x36xf32> to vector<6xf32>
    %429 = vector.shape_cast %428 : vector<6xf32> to vector<6x1xf32>
    %430 = vector.broadcast %429 : vector<6x1xf32> to vector<6x36xf32>
    %431 = arith.subf %427, %430 : vector<6x36xf32>
    %432 = math.exp %431 : vector<6x36xf32>
    %cst_291 = arith.constant dense<0.000000e+00> : vector<6xf32>
    %433 = vector.multi_reduction <add>, %432, %cst_291 [1] : vector<6x36xf32> to vector<6xf32>
    %434 = vector.shape_cast %433 : vector<6xf32> to vector<6x1xf32>
    %435 = tpu.reciprocal %434 {approx = true} : vector<6x1xf32> -> vector<6x1xf32>
    %436 = vector.broadcast %435 : vector<6x1xf32> to vector<6x36xf32>
    %437 = arith.mulf %432, %436 : vector<6x36xf32>
    %cst_292 = arith.constant dense<0.000000e+00> : vector<6x32xf32>
    %438 = tpu.matmul %437, %83, %cst_292 {dimension_numbers = #tpu.dot_dimension_numbers<[1], [0], [0], [1], [0, 0, 1, 1], [], []>} : vector<6x36xf32>, vector<36x32xf32>, vector<6x32xf32> -> vector<6x32xf32>
    %c0_293 = arith.constant 0 : index
    %c0_294 = arith.constant 0 : index
    %439 = vector.load %arg39[%c0_293, %c0_294] : memref<32x32xf32, #tpu.memory_space<vmem>>, vector<32x32xf32>
    %cst_295 = arith.constant dense<0.000000e+00> : vector<6x32xf32>
    %440 = tpu.matmul %438, %439, %cst_295 {dimension_numbers = #tpu.dot_dimension_numbers<[1], [0], [0], [1], [0, 0, 1, 1], [], []>} : vector<6x32xf32>, vector<32x32xf32>, vector<6x32xf32> -> vector<6x32xf32>
    %c0_296 = arith.constant 0 : index
    %c0_297 = arith.constant 0 : index
    %441 = vector.load %arg40[%c0_296, %c0_297] : memref<1x32xf32, #tpu.memory_space<vmem>>, vector<1x32xf32>
    %442 = vector.broadcast %441 : vector<1x32xf32> to vector<6x32xf32>
    %443 = arith.addf %440, %442 : vector<6x32xf32>
    %444 = arith.addf %416, %443 : vector<6x32xf32>
    %c0_298 = arith.constant 0 : index
    %c0_299 = arith.constant 0 : index
    %445 = vector.load %arg41[%c0_298, %c0_299] : memref<32x64xf32, #tpu.memory_space<vmem>>, vector<32x64xf32>
    %cst_300 = arith.constant dense<0.000000e+00> : vector<6x64xf32>
    %446 = tpu.matmul %444, %445, %cst_300 {dimension_numbers = #tpu.dot_dimension_numbers<[1], [0], [0], [1], [0, 0, 1, 1], [], []>} : vector<6x32xf32>, vector<32x64xf32>, vector<6x64xf32> -> vector<6x64xf32>
    %c0_301 = arith.constant 0 : index
    %c0_302 = arith.constant 0 : index
    %447 = vector.load %arg42[%c0_301, %c0_302] : memref<1x64xf32, #tpu.memory_space<vmem>>, vector<1x64xf32>
    %448 = vector.broadcast %447 : vector<1x64xf32> to vector<6x64xf32>
    %449 = arith.addf %446, %448 : vector<6x64xf32>
    %cst_303 = arith.constant 0.000000e+00 : f32
    %450 = vector.broadcast %cst_303 : f32 to vector<6x64xf32>
    %451 = arith.maximumf %449, %450 : vector<6x64xf32>
    %c0_304 = arith.constant 0 : index
    %c0_305 = arith.constant 0 : index
    %452 = vector.load %arg43[%c0_304, %c0_305] : memref<64x32xf32, #tpu.memory_space<vmem>>, vector<64x32xf32>
    %cst_306 = arith.constant dense<0.000000e+00> : vector<6x32xf32>
    %453 = tpu.matmul %451, %452, %cst_306 {dimension_numbers = #tpu.dot_dimension_numbers<[1], [0], [0], [1], [0, 0, 1, 1], [], []>} : vector<6x64xf32>, vector<64x32xf32>, vector<6x32xf32> -> vector<6x32xf32>
    %c0_307 = arith.constant 0 : index
    %c0_308 = arith.constant 0 : index
    %454 = vector.load %arg44[%c0_307, %c0_308] : memref<1x32xf32, #tpu.memory_space<vmem>>, vector<1x32xf32>
    %455 = vector.broadcast %454 : vector<1x32xf32> to vector<6x32xf32>
    %456 = arith.addf %453, %455 : vector<6x32xf32>
    %457 = arith.addf %444, %456 : vector<6x32xf32>
    %c0_309 = arith.constant 0 : index
    %c0_310 = arith.constant 0 : index
    %458 = vector.load %arg45[%c0_309, %c0_310] : memref<32x2xf32, #tpu.memory_space<vmem>>, vector<32x2xf32>
    %cst_311 = arith.constant dense<0.000000e+00> : vector<6x2xf32>
    %459 = tpu.matmul %457, %458, %cst_311 {dimension_numbers = #tpu.dot_dimension_numbers<[1], [0], [0], [1], [0, 0, 1, 1], [], []>} : vector<6x32xf32>, vector<32x2xf32>, vector<6x2xf32> -> vector<6x2xf32>
    %c0_312 = arith.constant 0 : index
    %c0_313 = arith.constant 0 : index
    %460 = vector.load %arg46[%c0_312, %c0_313] : memref<1x2xf32, #tpu.memory_space<vmem>>, vector<1x2xf32>
    %461 = vector.broadcast %460 : vector<1x2xf32> to vector<6x2xf32>
    %462 = arith.addf %459, %461 : vector<6x2xf32>
    %c0_314 = arith.constant 0 : index
    %c0_315 = arith.constant 0 : index
    %463 = vector.load %arg47[%c0_314, %c0_315] : memref<32x6xf32, #tpu.memory_space<vmem>>, vector<32x6xf32>
    %cst_316 = arith.constant dense<0.000000e+00> : vector<6x6xf32>
    %464 = tpu.matmul %457, %463, %cst_316 {dimension_numbers = #tpu.dot_dimension_numbers<[1], [0], [0], [1], [0, 0, 1, 1], [], []>} : vector<6x32xf32>, vector<32x6xf32>, vector<6x6xf32> -> vector<6x6xf32>
    %c0_317 = arith.constant 0 : index
    %c0_318 = arith.constant 0 : index
    %465 = vector.load %arg48[%c0_317, %c0_318] : memref<1x6xf32, #tpu.memory_space<vmem>>, vector<1x6xf32>
    %466 = vector.broadcast %465 : vector<1x6xf32> to vector<6x6xf32>
    %467 = arith.addf %464, %466 : vector<6x6xf32>
    %c2_319 = arith.constant 2 : index
    %c0_320 = arith.constant 0 : index
    %c0_321 = arith.constant 0 : index
    %468 = vector.load %arg49[%c2_319, %c0_320, %c0_321] : memref<5x6x2xf32, #tpu.memory_space<vmem>>, vector<1x6x2xf32>
    %469 = vector.shape_cast %468 : vector<1x6x2xf32> to vector<6x2xf32>
    %470 = vector.shape_cast %462 : vector<6x2xf32> to vector<1x6x2xf32>
    tpu.vector_store %arg49[%c2_319, %c0_320, %c0_321], %470 {strides = array<i32>} : memref<5x6x2xf32, #tpu.memory_space<vmem>>, vector<1x6x2xf32>,
    %c2_322 = arith.constant 2 : index
    %c0_323 = arith.constant 0 : index
    %c0_324 = arith.constant 0 : index
    %471 = vector.load %arg50[%c2_322, %c0_323, %c0_324] : memref<5x6x6xf32, #tpu.memory_space<vmem>>, vector<1x6x6xf32>
    %472 = vector.shape_cast %471 : vector<1x6x6xf32> to vector<6x6xf32>
    %473 = vector.shape_cast %467 : vector<6x6xf32> to vector<1x6x6xf32>
    tpu.vector_store %arg50[%c2_322, %c0_323, %c0_324], %473 {strides = array<i32>} : memref<5x6x6xf32, #tpu.memory_space<vmem>>, vector<1x6x6xf32>,
    %c2_325 = arith.constant 2 : index
    %c0_326 = arith.constant 0 : index
    %c0_327 = arith.constant 0 : index
    %474 = vector.load %arg5[%c2_325, %c0_326, %c0_327] : memref<5x6x2xf32, #tpu.memory_space<vmem>>, vector<1x6x2xf32>
    %475 = vector.shape_cast %474 : vector<1x6x2xf32> to vector<6x2xf32>
    %476 = arith.subf %462, %475 : vector<6x2xf32>
    %477 = arith.mulf %476, %476 : vector<6x2xf32>
    %478 = vector.shape_cast %477 : vector<6x2xf32> to vector<1x6x2xf32>
    %cst_328 = arith.constant dense<0.000000e+00> : vector<1xf32>
    %479 = vector.multi_reduction <add>, %478, %cst_328 [1, 2] : vector<1x6x2xf32> to vector<1xf32>
    %480 = vector.shape_cast %479 : vector<1xf32> to vector<1x1x1xf32>
    %481 = vector.extract %480[0, 0, 0] : f32 from vector<1x1x1xf32>
    %482 = vector.broadcast %481 : f32 to vector<1x1xf32>
    %483 = arith.addf %328, %482 : vector<1x1xf32>
    %c2_329 = arith.constant 2 : index
    %c0_330 = arith.constant 0 : index
    %c0_331 = arith.constant 0 : index
    %484 = vector.load %arg4[%c2_329, %c0_330, %c0_331] : memref<5x6x6xf32, #tpu.memory_space<vmem>>, vector<1x6x6xf32>
    %485 = vector.shape_cast %484 : vector<1x6x6xf32> to vector<6x6xf32>
    %cst_332 = arith.constant 0.000000e+00 : f32
    %486 = vector.broadcast %cst_332 : f32 to vector<6x6xf32>
    %487 = arith.cmpf ogt, %485, %486 : vector<6x6xf32>
    %cst_333 = arith.constant 2.000000e+00 : f32
    %cst_334 = arith.constant 1.000000e+00 : f32
    %488 = vector.broadcast %cst_333 : f32 to vector<6x6xf32>
    %489 = vector.broadcast %cst_334 : f32 to vector<6x6xf32>
    %490 = arith.select %487, %488, %489 : vector<6x6xi1>, vector<6x6xf32>
    %491 = arith.subf %467, %485 : vector<6x6xf32>
    %492 = arith.mulf %491, %490 : vector<6x6xf32>
    %493 = arith.mulf %492, %492 : vector<6x6xf32>
    %494 = vector.shape_cast %493 : vector<6x6xf32> to vector<1x6x6xf32>
    %cst_335 = arith.constant dense<0.000000e+00> : vector<1xf32>
    %495 = vector.multi_reduction <add>, %494, %cst_335 [1, 2] : vector<1x6x6xf32> to vector<1xf32>
    %496 = vector.shape_cast %495 : vector<1xf32> to vector<1x1x1xf32>
    %497 = vector.extract %496[0, 0, 0] : f32 from vector<1x1x1xf32>
    %498 = vector.broadcast %497 : f32 to vector<1x1xf32>
    %499 = arith.addf %344, %498 : vector<1x1xf32>
    %c0_336 = arith.constant 0 : index
    %c0_337 = arith.constant 0 : index
    %500 = vector.load %arg8[%c0_336, %c0_337] : memref<6x32xf32, #tpu.memory_space<vmem>>, vector<6x32xf32>
    %cst_338 = arith.constant dense<0.000000e+00> : vector<6x32xf32>
    %501 = tpu.matmul %467, %500, %cst_338 {dimension_numbers = #tpu.dot_dimension_numbers<[1], [0], [0], [1], [0, 0, 1, 1], [], []>} : vector<6x6xf32>, vector<6x32xf32>, vector<6x32xf32> -> vector<6x32xf32>
    %c0_339 = arith.constant 0 : index
    %c0_340 = arith.constant 0 : index
    %502 = vector.load %arg10[%c0_339, %c0_340] : memref<2x32xf32, #tpu.memory_space<vmem>>, vector<2x32xf32>
    %cst_341 = arith.constant dense<0.000000e+00> : vector<6x32xf32>
    %503 = tpu.matmul %462, %502, %cst_341 {dimension_numbers = #tpu.dot_dimension_numbers<[1], [0], [0], [1], [0, 0, 1, 1], [], []>} : vector<6x2xf32>, vector<2x32xf32>, vector<6x32xf32> -> vector<6x32xf32>
    %504 = arith.addf %501, %503 : vector<6x32xf32>
    %c0_342 = arith.constant 0 : index
    %c0_343 = arith.constant 0 : index
    %505 = vector.load %arg11[%c0_342, %c0_343] : memref<1x32xf32, #tpu.memory_space<vmem>>, vector<1x32xf32>
    %cst_344 = arith.constant 3.000000e-01 : f32
    %506 = vector.broadcast %cst_344 : f32 to vector<1x32xf32>
    %507 = arith.mulf %506, %505 : vector<1x32xf32>
    %508 = vector.broadcast %507 : vector<1x32xf32> to vector<6x32xf32>
    %509 = arith.addf %504, %508 : vector<6x32xf32>
    %c0_345 = arith.constant 0 : index
    %c0_346 = arith.constant 0 : index
    %510 = vector.load %arg12[%c0_345, %c0_346] : memref<1x32xf32, #tpu.memory_space<vmem>>, vector<1x32xf32>
    %511 = vector.broadcast %510 : vector<1x32xf32> to vector<6x32xf32>
    %512 = arith.addf %509, %511 : vector<6x32xf32>
    %cst_347 = arith.constant 0.000000e+00 : f32
    %513 = vector.broadcast %cst_347 : f32 to vector<6x32xf32>
    %514 = arith.maximumf %512, %513 : vector<6x32xf32>
    %c0_348 = arith.constant 0 : index
    %c0_349 = arith.constant 0 : index
    %515 = vector.load %arg27[%c0_348, %c0_349] : memref<32x32xf32, #tpu.memory_space<vmem>>, vector<32x32xf32>
    %cst_350 = arith.constant dense<0.000000e+00> : vector<6x32xf32>
    %516 = tpu.matmul %514, %515, %cst_350 {dimension_numbers = #tpu.dot_dimension_numbers<[1], [0], [0], [1], [0, 0, 1, 1], [], []>} : vector<6x32xf32>, vector<32x32xf32>, vector<6x32xf32> -> vector<6x32xf32>
    %c0_351 = arith.constant 0 : index
    %c0_352 = arith.constant 0 : index
    %517 = vector.load %arg28[%c0_351, %c0_352] : memref<1x32xf32, #tpu.memory_space<vmem>>, vector<1x32xf32>
    %518 = vector.broadcast %517 : vector<1x32xf32> to vector<6x32xf32>
    %519 = arith.addf %516, %518 : vector<6x32xf32>
    %c0_353 = arith.constant 0 : index
    %c0_354 = arith.constant 0 : index
    %520 = vector.load %arg29[%c0_353, %c0_354] : memref<32x32xf32, #tpu.memory_space<vmem>>, vector<32x32xf32>
    %cst_355 = arith.constant dense<0.000000e+00> : vector<6x32xf32>
    %521 = tpu.matmul %514, %520, %cst_355 {dimension_numbers = #tpu.dot_dimension_numbers<[1], [0], [0], [1], [0, 0, 1, 1], [], []>} : vector<6x32xf32>, vector<32x32xf32>, vector<6x32xf32> -> vector<6x32xf32>
    %c0_356 = arith.constant 0 : index
    %c0_357 = arith.constant 0 : index
    %522 = vector.load %arg30[%c0_356, %c0_357] : memref<1x32xf32, #tpu.memory_space<vmem>>, vector<1x32xf32>
    %523 = vector.broadcast %522 : vector<1x32xf32> to vector<6x32xf32>
    %524 = arith.addf %521, %523 : vector<6x32xf32>
    %c0_358 = arith.constant 0 : index
    %c0_359 = arith.constant 0 : index
    %525 = vector.load %arg25[%c0_358, %c0_359] : memref<32x32xf32, #tpu.memory_space<vmem>>, vector<32x32xf32>
    %cst_360 = arith.constant dense<0.000000e+00> : vector<6x32xf32>
    %526 = tpu.matmul %514, %525, %cst_360 {dimension_numbers = #tpu.dot_dimension_numbers<[1], [0], [0], [1], [0, 0, 1, 1], [], []>} : vector<6x32xf32>, vector<32x32xf32>, vector<6x32xf32> -> vector<6x32xf32>
    %c0_361 = arith.constant 0 : index
    %c0_362 = arith.constant 0 : index
    %527 = vector.load %arg26[%c0_361, %c0_362] : memref<1x32xf32, #tpu.memory_space<vmem>>, vector<1x32xf32>
    %528 = vector.broadcast %527 : vector<1x32xf32> to vector<6x32xf32>
    %529 = arith.addf %526, %528 : vector<6x32xf32>
    %530 = arith.mulf %529, %88 : vector<6x32xf32>
    %cst_363 = arith.constant dense<0.000000e+00> : vector<6xf32>
    %531 = vector.multi_reduction <add>, %530, %cst_363 [1] : vector<6x32xf32> to vector<6xf32>
    %532 = vector.shape_cast %531 : vector<6xf32> to vector<6x1xf32>
    %cst_364 = arith.constant 0.176776692 : f32
    %533 = vector.broadcast %cst_364 : f32 to vector<6x1xf32>
    %534 = arith.mulf %532, %533 : vector<6x1xf32>
    %535 = arith.mulf %529, %221 : vector<6x32xf32>
    %cst_365 = arith.constant dense<0.000000e+00> : vector<6xf32>
    %536 = vector.multi_reduction <add>, %535, %cst_365 [1] : vector<6x32xf32> to vector<6xf32>
    %537 = vector.shape_cast %536 : vector<6xf32> to vector<6x1xf32>
    %cst_366 = arith.constant 0.176776692 : f32
    %538 = vector.broadcast %cst_366 : f32 to vector<6x1xf32>
    %539 = arith.mulf %537, %538 : vector<6x1xf32>
    %540 = arith.mulf %529, %364 : vector<6x32xf32>
    %cst_367 = arith.constant dense<0.000000e+00> : vector<6xf32>
    %541 = vector.multi_reduction <add>, %540, %cst_367 [1] : vector<6x32xf32> to vector<6xf32>
    %542 = vector.shape_cast %541 : vector<6xf32> to vector<6x1xf32>
    %cst_368 = arith.constant 0.176776692 : f32
    %543 = vector.broadcast %cst_368 : f32 to vector<6x1xf32>
    %544 = arith.mulf %542, %543 : vector<6x1xf32>
    %545 = arith.mulf %529, %519 : vector<6x32xf32>
    %cst_369 = arith.constant dense<0.000000e+00> : vector<6xf32>
    %546 = vector.multi_reduction <add>, %545, %cst_369 [1] : vector<6x32xf32> to vector<6xf32>
    %547 = vector.shape_cast %546 : vector<6xf32> to vector<6x1xf32>
    %cst_370 = arith.constant 0.176776692 : f32
    %548 = vector.broadcast %cst_370 : f32 to vector<6x1xf32>
    %549 = arith.mulf %547, %548 : vector<6x1xf32>
    %550 = arith.maximumf %534, %539 : vector<6x1xf32>
    %551 = arith.maximumf %550, %544 : vector<6x1xf32>
    %552 = arith.maximumf %551, %549 : vector<6x1xf32>
    %553 = arith.subf %534, %552 : vector<6x1xf32>
    %554 = math.exp %553 : vector<6x1xf32>
    %555 = arith.subf %539, %552 : vector<6x1xf32>
    %556 = math.exp %555 : vector<6x1xf32>
    %557 = arith.subf %544, %552 : vector<6x1xf32>
    %558 = math.exp %557 : vector<6x1xf32>
    %559 = arith.subf %549, %552 : vector<6x1xf32>
    %560 = math.exp %559 : vector<6x1xf32>
    %561 = arith.addf %554, %556 : vector<6x1xf32>
    %562 = arith.addf %561, %558 : vector<6x1xf32>
    %563 = arith.addf %562, %560 : vector<6x1xf32>
    %564 = vector.broadcast %554 : vector<6x1xf32> to vector<6x32xf32>
    %565 = arith.mulf %564, %93 : vector<6x32xf32>
    %566 = vector.broadcast %556 : vector<6x1xf32> to vector<6x32xf32>
    %567 = arith.mulf %566, %226 : vector<6x32xf32>
    %568 = arith.addf %565, %567 : vector<6x32xf32>
    %569 = vector.broadcast %558 : vector<6x1xf32> to vector<6x32xf32>
    %570 = arith.mulf %569, %369 : vector<6x32xf32>
    %571 = arith.addf %568, %570 : vector<6x32xf32>
    %572 = vector.broadcast %560 : vector<6x1xf32> to vector<6x32xf32>
    %573 = arith.mulf %572, %524 : vector<6x32xf32>
    %574 = arith.addf %571, %573 : vector<6x32xf32>
    %575 = tpu.reciprocal %563 {approx = true} : vector<6x1xf32> -> vector<6x1xf32>
    %576 = vector.broadcast %575 : vector<6x1xf32> to vector<6x32xf32>
    %577 = arith.mulf %574, %576 : vector<6x32xf32>
    %c0_371 = arith.constant 0 : index
    %c0_372 = arith.constant 0 : index
    %578 = vector.load %arg31[%c0_371, %c0_372] : memref<32x32xf32, #tpu.memory_space<vmem>>, vector<32x32xf32>
    %cst_373 = arith.constant dense<0.000000e+00> : vector<6x32xf32>
    %579 = tpu.matmul %577, %578, %cst_373 {dimension_numbers = #tpu.dot_dimension_numbers<[1], [0], [0], [1], [0, 0, 1, 1], [], []>} : vector<6x32xf32>, vector<32x32xf32>, vector<6x32xf32> -> vector<6x32xf32>
    %c0_374 = arith.constant 0 : index
    %c0_375 = arith.constant 0 : index
    %580 = vector.load %arg32[%c0_374, %c0_375] : memref<1x32xf32, #tpu.memory_space<vmem>>, vector<1x32xf32>
    %581 = vector.broadcast %580 : vector<1x32xf32> to vector<6x32xf32>
    %582 = arith.addf %579, %581 : vector<6x32xf32>
    %583 = arith.addf %582, %514 : vector<6x32xf32>
    %c0_376 = arith.constant 0 : index
    %c0_377 = arith.constant 0 : index
    %584 = vector.load %arg33[%c0_376, %c0_377] : memref<32x32xf32, #tpu.memory_space<vmem>>, vector<32x32xf32>
    %cst_378 = arith.constant dense<0.000000e+00> : vector<6x32xf32>
    %585 = tpu.matmul %583, %584, %cst_378 {dimension_numbers = #tpu.dot_dimension_numbers<[1], [0], [0], [1], [0, 0, 1, 1], [], []>} : vector<6x32xf32>, vector<32x32xf32>, vector<6x32xf32> -> vector<6x32xf32>
    %c0_379 = arith.constant 0 : index
    %c0_380 = arith.constant 0 : index
    %586 = vector.load %arg34[%c0_379, %c0_380] : memref<1x32xf32, #tpu.memory_space<vmem>>, vector<1x32xf32>
    %587 = vector.broadcast %586 : vector<1x32xf32> to vector<6x32xf32>
    %588 = arith.addf %585, %587 : vector<6x32xf32>
    %cst_381 = arith.constant dense<0.000000e+00> : vector<6x36xf32>
    %589 = tpu.matmul %588, %78, %cst_381 {dimension_numbers = #tpu.dot_dimension_numbers<[1], [1], [0], [0], [0, 0, 1, 0], [], []>} : vector<6x32xf32>, vector<36x32xf32>, vector<6x36xf32> -> vector<6x36xf32>
    %cst_382 = arith.constant 0.176776692 : f32
    %590 = vector.broadcast %cst_382 : f32 to vector<6x36xf32>
    %591 = arith.mulf %589, %590 : vector<6x36xf32>
    %c3 = arith.constant 3 : index
    %c0_383 = arith.constant 0 : index
    %c0_384 = arith.constant 0 : index
    %592 = vector.load %arg7[%c3, %c0_383, %c0_384] : memref<5x6x36xf32, #tpu.memory_space<vmem>>, vector<1x6x36xf32>
    %593 = vector.shape_cast %592 : vector<1x6x36xf32> to vector<6x36xf32>
    %594 = arith.addf %591, %593 : vector<6x36xf32>
    %cst_385 = arith.constant dense<0xFF800000> : vector<6xf32>
    %595 = vector.multi_reduction <maximumf>, %594, %cst_385 [1] : vector<6x36xf32> to vector<6xf32>
    %596 = vector.shape_cast %595 : vector<6xf32> to vector<6x1xf32>
    %597 = vector.broadcast %596 : vector<6x1xf32> to vector<6x36xf32>
    %598 = arith.subf %594, %597 : vector<6x36xf32>
    %599 = math.exp %598 : vector<6x36xf32>
    %cst_386 = arith.constant dense<0.000000e+00> : vector<6xf32>
    %600 = vector.multi_reduction <add>, %599, %cst_386 [1] : vector<6x36xf32> to vector<6xf32>
    %601 = vector.shape_cast %600 : vector<6xf32> to vector<6x1xf32>
    %602 = tpu.reciprocal %601 {approx = true} : vector<6x1xf32> -> vector<6x1xf32>
    %603 = vector.broadcast %602 : vector<6x1xf32> to vector<6x36xf32>
    %604 = arith.mulf %599, %603 : vector<6x36xf32>
    %cst_387 = arith.constant dense<0.000000e+00> : vector<6x32xf32>
    %605 = tpu.matmul %604, %83, %cst_387 {dimension_numbers = #tpu.dot_dimension_numbers<[1], [0], [0], [1], [0, 0, 1, 1], [], []>} : vector<6x36xf32>, vector<36x32xf32>, vector<6x32xf32> -> vector<6x32xf32>
    %c0_388 = arith.constant 0 : index
    %c0_389 = arith.constant 0 : index
    %606 = vector.load %arg39[%c0_388, %c0_389] : memref<32x32xf32, #tpu.memory_space<vmem>>, vector<32x32xf32>
    %cst_390 = arith.constant dense<0.000000e+00> : vector<6x32xf32>
    %607 = tpu.matmul %605, %606, %cst_390 {dimension_numbers = #tpu.dot_dimension_numbers<[1], [0], [0], [1], [0, 0, 1, 1], [], []>} : vector<6x32xf32>, vector<32x32xf32>, vector<6x32xf32> -> vector<6x32xf32>
    %c0_391 = arith.constant 0 : index
    %c0_392 = arith.constant 0 : index
    %608 = vector.load %arg40[%c0_391, %c0_392] : memref<1x32xf32, #tpu.memory_space<vmem>>, vector<1x32xf32>
    %609 = vector.broadcast %608 : vector<1x32xf32> to vector<6x32xf32>
    %610 = arith.addf %607, %609 : vector<6x32xf32>
    %611 = arith.addf %583, %610 : vector<6x32xf32>
    %c0_393 = arith.constant 0 : index
    %c0_394 = arith.constant 0 : index
    %612 = vector.load %arg41[%c0_393, %c0_394] : memref<32x64xf32, #tpu.memory_space<vmem>>, vector<32x64xf32>
    %cst_395 = arith.constant dense<0.000000e+00> : vector<6x64xf32>
    %613 = tpu.matmul %611, %612, %cst_395 {dimension_numbers = #tpu.dot_dimension_numbers<[1], [0], [0], [1], [0, 0, 1, 1], [], []>} : vector<6x32xf32>, vector<32x64xf32>, vector<6x64xf32> -> vector<6x64xf32>
    %c0_396 = arith.constant 0 : index
    %c0_397 = arith.constant 0 : index
    %614 = vector.load %arg42[%c0_396, %c0_397] : memref<1x64xf32, #tpu.memory_space<vmem>>, vector<1x64xf32>
    %615 = vector.broadcast %614 : vector<1x64xf32> to vector<6x64xf32>
    %616 = arith.addf %613, %615 : vector<6x64xf32>
    %cst_398 = arith.constant 0.000000e+00 : f32
    %617 = vector.broadcast %cst_398 : f32 to vector<6x64xf32>
    %618 = arith.maximumf %616, %617 : vector<6x64xf32>
    %c0_399 = arith.constant 0 : index
    %c0_400 = arith.constant 0 : index
    %619 = vector.load %arg43[%c0_399, %c0_400] : memref<64x32xf32, #tpu.memory_space<vmem>>, vector<64x32xf32>
    %cst_401 = arith.constant dense<0.000000e+00> : vector<6x32xf32>
    %620 = tpu.matmul %618, %619, %cst_401 {dimension_numbers = #tpu.dot_dimension_numbers<[1], [0], [0], [1], [0, 0, 1, 1], [], []>} : vector<6x64xf32>, vector<64x32xf32>, vector<6x32xf32> -> vector<6x32xf32>
    %c0_402 = arith.constant 0 : index
    %c0_403 = arith.constant 0 : index
    %621 = vector.load %arg44[%c0_402, %c0_403] : memref<1x32xf32, #tpu.memory_space<vmem>>, vector<1x32xf32>
    %622 = vector.broadcast %621 : vector<1x32xf32> to vector<6x32xf32>
    %623 = arith.addf %620, %622 : vector<6x32xf32>
    %624 = arith.addf %611, %623 : vector<6x32xf32>
    %c0_404 = arith.constant 0 : index
    %c0_405 = arith.constant 0 : index
    %625 = vector.load %arg45[%c0_404, %c0_405] : memref<32x2xf32, #tpu.memory_space<vmem>>, vector<32x2xf32>
    %cst_406 = arith.constant dense<0.000000e+00> : vector<6x2xf32>
    %626 = tpu.matmul %624, %625, %cst_406 {dimension_numbers = #tpu.dot_dimension_numbers<[1], [0], [0], [1], [0, 0, 1, 1], [], []>} : vector<6x32xf32>, vector<32x2xf32>, vector<6x2xf32> -> vector<6x2xf32>
    %c0_407 = arith.constant 0 : index
    %c0_408 = arith.constant 0 : index
    %627 = vector.load %arg46[%c0_407, %c0_408] : memref<1x2xf32, #tpu.memory_space<vmem>>, vector<1x2xf32>
    %628 = vector.broadcast %627 : vector<1x2xf32> to vector<6x2xf32>
    %629 = arith.addf %626, %628 : vector<6x2xf32>
    %c0_409 = arith.constant 0 : index
    %c0_410 = arith.constant 0 : index
    %630 = vector.load %arg47[%c0_409, %c0_410] : memref<32x6xf32, #tpu.memory_space<vmem>>, vector<32x6xf32>
    %cst_411 = arith.constant dense<0.000000e+00> : vector<6x6xf32>
    %631 = tpu.matmul %624, %630, %cst_411 {dimension_numbers = #tpu.dot_dimension_numbers<[1], [0], [0], [1], [0, 0, 1, 1], [], []>} : vector<6x32xf32>, vector<32x6xf32>, vector<6x6xf32> -> vector<6x6xf32>
    %c0_412 = arith.constant 0 : index
    %c0_413 = arith.constant 0 : index
    %632 = vector.load %arg48[%c0_412, %c0_413] : memref<1x6xf32, #tpu.memory_space<vmem>>, vector<1x6xf32>
    %633 = vector.broadcast %632 : vector<1x6xf32> to vector<6x6xf32>
    %634 = arith.addf %631, %633 : vector<6x6xf32>
    %c3_414 = arith.constant 3 : index
    %c0_415 = arith.constant 0 : index
    %c0_416 = arith.constant 0 : index
    %635 = vector.load %arg49[%c3_414, %c0_415, %c0_416] : memref<5x6x2xf32, #tpu.memory_space<vmem>>, vector<1x6x2xf32>
    %636 = vector.shape_cast %635 : vector<1x6x2xf32> to vector<6x2xf32>
    %637 = vector.shape_cast %629 : vector<6x2xf32> to vector<1x6x2xf32>
    tpu.vector_store %arg49[%c3_414, %c0_415, %c0_416], %637 {strides = array<i32>} : memref<5x6x2xf32, #tpu.memory_space<vmem>>, vector<1x6x2xf32>,
    %c3_417 = arith.constant 3 : index
    %c0_418 = arith.constant 0 : index
    %c0_419 = arith.constant 0 : index
    %638 = vector.load %arg50[%c3_417, %c0_418, %c0_419] : memref<5x6x6xf32, #tpu.memory_space<vmem>>, vector<1x6x6xf32>
    %639 = vector.shape_cast %638 : vector<1x6x6xf32> to vector<6x6xf32>
    %640 = vector.shape_cast %634 : vector<6x6xf32> to vector<1x6x6xf32>
    tpu.vector_store %arg50[%c3_417, %c0_418, %c0_419], %640 {strides = array<i32>} : memref<5x6x6xf32, #tpu.memory_space<vmem>>, vector<1x6x6xf32>,
    %c3_420 = arith.constant 3 : index
    %c0_421 = arith.constant 0 : index
    %c0_422 = arith.constant 0 : index
    %641 = vector.load %arg5[%c3_420, %c0_421, %c0_422] : memref<5x6x2xf32, #tpu.memory_space<vmem>>, vector<1x6x2xf32>
    %642 = vector.shape_cast %641 : vector<1x6x2xf32> to vector<6x2xf32>
    %643 = arith.subf %629, %642 : vector<6x2xf32>
    %644 = arith.mulf %643, %643 : vector<6x2xf32>
    %645 = vector.shape_cast %644 : vector<6x2xf32> to vector<1x6x2xf32>
    %cst_423 = arith.constant dense<0.000000e+00> : vector<1xf32>
    %646 = vector.multi_reduction <add>, %645, %cst_423 [1, 2] : vector<1x6x2xf32> to vector<1xf32>
    %647 = vector.shape_cast %646 : vector<1xf32> to vector<1x1x1xf32>
    %648 = vector.extract %647[0, 0, 0] : f32 from vector<1x1x1xf32>
    %649 = vector.broadcast %648 : f32 to vector<1x1xf32>
    %650 = arith.addf %483, %649 : vector<1x1xf32>
    %c3_424 = arith.constant 3 : index
    %c0_425 = arith.constant 0 : index
    %c0_426 = arith.constant 0 : index
    %651 = vector.load %arg4[%c3_424, %c0_425, %c0_426] : memref<5x6x6xf32, #tpu.memory_space<vmem>>, vector<1x6x6xf32>
    %652 = vector.shape_cast %651 : vector<1x6x6xf32> to vector<6x6xf32>
    %cst_427 = arith.constant 0.000000e+00 : f32
    %653 = vector.broadcast %cst_427 : f32 to vector<6x6xf32>
    %654 = arith.cmpf ogt, %652, %653 : vector<6x6xf32>
    %cst_428 = arith.constant 2.000000e+00 : f32
    %cst_429 = arith.constant 1.000000e+00 : f32
    %655 = vector.broadcast %cst_428 : f32 to vector<6x6xf32>
    %656 = vector.broadcast %cst_429 : f32 to vector<6x6xf32>
    %657 = arith.select %654, %655, %656 : vector<6x6xi1>, vector<6x6xf32>
    %658 = arith.subf %634, %652 : vector<6x6xf32>
    %659 = arith.mulf %658, %657 : vector<6x6xf32>
    %660 = arith.mulf %659, %659 : vector<6x6xf32>
    %661 = vector.shape_cast %660 : vector<6x6xf32> to vector<1x6x6xf32>
    %cst_430 = arith.constant dense<0.000000e+00> : vector<1xf32>
    %662 = vector.multi_reduction <add>, %661, %cst_430 [1, 2] : vector<1x6x6xf32> to vector<1xf32>
    %663 = vector.shape_cast %662 : vector<1xf32> to vector<1x1x1xf32>
    %664 = vector.extract %663[0, 0, 0] : f32 from vector<1x1x1xf32>
    %665 = vector.broadcast %664 : f32 to vector<1x1xf32>
    %666 = arith.addf %499, %665 : vector<1x1xf32>
    %c0_431 = arith.constant 0 : index
    %c0_432 = arith.constant 0 : index
    %667 = vector.load %arg8[%c0_431, %c0_432] : memref<6x32xf32, #tpu.memory_space<vmem>>, vector<6x32xf32>
    %cst_433 = arith.constant dense<0.000000e+00> : vector<6x32xf32>
    %668 = tpu.matmul %634, %667, %cst_433 {dimension_numbers = #tpu.dot_dimension_numbers<[1], [0], [0], [1], [0, 0, 1, 1], [], []>} : vector<6x6xf32>, vector<6x32xf32>, vector<6x32xf32> -> vector<6x32xf32>
    %c0_434 = arith.constant 0 : index
    %c0_435 = arith.constant 0 : index
    %669 = vector.load %arg10[%c0_434, %c0_435] : memref<2x32xf32, #tpu.memory_space<vmem>>, vector<2x32xf32>
    %cst_436 = arith.constant dense<0.000000e+00> : vector<6x32xf32>
    %670 = tpu.matmul %629, %669, %cst_436 {dimension_numbers = #tpu.dot_dimension_numbers<[1], [0], [0], [1], [0, 0, 1, 1], [], []>} : vector<6x2xf32>, vector<2x32xf32>, vector<6x32xf32> -> vector<6x32xf32>
    %671 = arith.addf %668, %670 : vector<6x32xf32>
    %c0_437 = arith.constant 0 : index
    %c0_438 = arith.constant 0 : index
    %672 = vector.load %arg11[%c0_437, %c0_438] : memref<1x32xf32, #tpu.memory_space<vmem>>, vector<1x32xf32>
    %cst_439 = arith.constant 4.000000e-01 : f32
    %673 = vector.broadcast %cst_439 : f32 to vector<1x32xf32>
    %674 = arith.mulf %673, %672 : vector<1x32xf32>
    %675 = vector.broadcast %674 : vector<1x32xf32> to vector<6x32xf32>
    %676 = arith.addf %671, %675 : vector<6x32xf32>
    %c0_440 = arith.constant 0 : index
    %c0_441 = arith.constant 0 : index
    %677 = vector.load %arg12[%c0_440, %c0_441] : memref<1x32xf32, #tpu.memory_space<vmem>>, vector<1x32xf32>
    %678 = vector.broadcast %677 : vector<1x32xf32> to vector<6x32xf32>
    %679 = arith.addf %676, %678 : vector<6x32xf32>
    %cst_442 = arith.constant 0.000000e+00 : f32
    %680 = vector.broadcast %cst_442 : f32 to vector<6x32xf32>
    %681 = arith.maximumf %679, %680 : vector<6x32xf32>
    %c0_443 = arith.constant 0 : index
    %c0_444 = arith.constant 0 : index
    %682 = vector.load %arg27[%c0_443, %c0_444] : memref<32x32xf32, #tpu.memory_space<vmem>>, vector<32x32xf32>
    %cst_445 = arith.constant dense<0.000000e+00> : vector<6x32xf32>
    %683 = tpu.matmul %681, %682, %cst_445 {dimension_numbers = #tpu.dot_dimension_numbers<[1], [0], [0], [1], [0, 0, 1, 1], [], []>} : vector<6x32xf32>, vector<32x32xf32>, vector<6x32xf32> -> vector<6x32xf32>
    %c0_446 = arith.constant 0 : index
    %c0_447 = arith.constant 0 : index
    %684 = vector.load %arg28[%c0_446, %c0_447] : memref<1x32xf32, #tpu.memory_space<vmem>>, vector<1x32xf32>
    %685 = vector.broadcast %684 : vector<1x32xf32> to vector<6x32xf32>
    %686 = arith.addf %683, %685 : vector<6x32xf32>
    %c0_448 = arith.constant 0 : index
    %c0_449 = arith.constant 0 : index
    %687 = vector.load %arg29[%c0_448, %c0_449] : memref<32x32xf32, #tpu.memory_space<vmem>>, vector<32x32xf32>
    %cst_450 = arith.constant dense<0.000000e+00> : vector<6x32xf32>
    %688 = tpu.matmul %681, %687, %cst_450 {dimension_numbers = #tpu.dot_dimension_numbers<[1], [0], [0], [1], [0, 0, 1, 1], [], []>} : vector<6x32xf32>, vector<32x32xf32>, vector<6x32xf32> -> vector<6x32xf32>
    %c0_451 = arith.constant 0 : index
    %c0_452 = arith.constant 0 : index
    %689 = vector.load %arg30[%c0_451, %c0_452] : memref<1x32xf32, #tpu.memory_space<vmem>>, vector<1x32xf32>
    %690 = vector.broadcast %689 : vector<1x32xf32> to vector<6x32xf32>
    %691 = arith.addf %688, %690 : vector<6x32xf32>
    %c0_453 = arith.constant 0 : index
    %c0_454 = arith.constant 0 : index
    %692 = vector.load %arg25[%c0_453, %c0_454] : memref<32x32xf32, #tpu.memory_space<vmem>>, vector<32x32xf32>
    %cst_455 = arith.constant dense<0.000000e+00> : vector<6x32xf32>
    %693 = tpu.matmul %681, %692, %cst_455 {dimension_numbers = #tpu.dot_dimension_numbers<[1], [0], [0], [1], [0, 0, 1, 1], [], []>} : vector<6x32xf32>, vector<32x32xf32>, vector<6x32xf32> -> vector<6x32xf32>
    %c0_456 = arith.constant 0 : index
    %c0_457 = arith.constant 0 : index
    %694 = vector.load %arg26[%c0_456, %c0_457] : memref<1x32xf32, #tpu.memory_space<vmem>>, vector<1x32xf32>
    %695 = vector.broadcast %694 : vector<1x32xf32> to vector<6x32xf32>
    %696 = arith.addf %693, %695 : vector<6x32xf32>
    %697 = arith.mulf %696, %88 : vector<6x32xf32>
    %cst_458 = arith.constant dense<0.000000e+00> : vector<6xf32>
    %698 = vector.multi_reduction <add>, %697, %cst_458 [1] : vector<6x32xf32> to vector<6xf32>
    %699 = vector.shape_cast %698 : vector<6xf32> to vector<6x1xf32>
    %cst_459 = arith.constant 0.176776692 : f32
    %700 = vector.broadcast %cst_459 : f32 to vector<6x1xf32>
    %701 = arith.mulf %699, %700 : vector<6x1xf32>
    %702 = arith.mulf %696, %221 : vector<6x32xf32>
    %cst_460 = arith.constant dense<0.000000e+00> : vector<6xf32>
    %703 = vector.multi_reduction <add>, %702, %cst_460 [1] : vector<6x32xf32> to vector<6xf32>
    %704 = vector.shape_cast %703 : vector<6xf32> to vector<6x1xf32>
    %cst_461 = arith.constant 0.176776692 : f32
    %705 = vector.broadcast %cst_461 : f32 to vector<6x1xf32>
    %706 = arith.mulf %704, %705 : vector<6x1xf32>
    %707 = arith.mulf %696, %364 : vector<6x32xf32>
    %cst_462 = arith.constant dense<0.000000e+00> : vector<6xf32>
    %708 = vector.multi_reduction <add>, %707, %cst_462 [1] : vector<6x32xf32> to vector<6xf32>
    %709 = vector.shape_cast %708 : vector<6xf32> to vector<6x1xf32>
    %cst_463 = arith.constant 0.176776692 : f32
    %710 = vector.broadcast %cst_463 : f32 to vector<6x1xf32>
    %711 = arith.mulf %709, %710 : vector<6x1xf32>
    %712 = arith.mulf %696, %519 : vector<6x32xf32>
    %cst_464 = arith.constant dense<0.000000e+00> : vector<6xf32>
    %713 = vector.multi_reduction <add>, %712, %cst_464 [1] : vector<6x32xf32> to vector<6xf32>
    %714 = vector.shape_cast %713 : vector<6xf32> to vector<6x1xf32>
    %cst_465 = arith.constant 0.176776692 : f32
    %715 = vector.broadcast %cst_465 : f32 to vector<6x1xf32>
    %716 = arith.mulf %714, %715 : vector<6x1xf32>
    %717 = arith.mulf %696, %686 : vector<6x32xf32>
    %cst_466 = arith.constant dense<0.000000e+00> : vector<6xf32>
    %718 = vector.multi_reduction <add>, %717, %cst_466 [1] : vector<6x32xf32> to vector<6xf32>
    %719 = vector.shape_cast %718 : vector<6xf32> to vector<6x1xf32>
    %cst_467 = arith.constant 0.176776692 : f32
    %720 = vector.broadcast %cst_467 : f32 to vector<6x1xf32>
    %721 = arith.mulf %719, %720 : vector<6x1xf32>
    %722 = arith.maximumf %701, %706 : vector<6x1xf32>
    %723 = arith.maximumf %722, %711 : vector<6x1xf32>
    %724 = arith.maximumf %723, %716 : vector<6x1xf32>
    %725 = arith.maximumf %724, %721 : vector<6x1xf32>
    %726 = arith.subf %701, %725 : vector<6x1xf32>
    %727 = math.exp %726 : vector<6x1xf32>
    %728 = arith.subf %706, %725 : vector<6x1xf32>
    %729 = math.exp %728 : vector<6x1xf32>
    %730 = arith.subf %711, %725 : vector<6x1xf32>
    %731 = math.exp %730 : vector<6x1xf32>
    %732 = arith.subf %716, %725 : vector<6x1xf32>
    %733 = math.exp %732 : vector<6x1xf32>
    %734 = arith.subf %721, %725 : vector<6x1xf32>
    %735 = math.exp %734 : vector<6x1xf32>
    %736 = arith.addf %727, %729 : vector<6x1xf32>
    %737 = arith.addf %736, %731 : vector<6x1xf32>
    %738 = arith.addf %737, %733 : vector<6x1xf32>
    %739 = arith.addf %738, %735 : vector<6x1xf32>
    %740 = vector.broadcast %727 : vector<6x1xf32> to vector<6x32xf32>
    %741 = arith.mulf %740, %93 : vector<6x32xf32>
    %742 = vector.broadcast %729 : vector<6x1xf32> to vector<6x32xf32>
    %743 = arith.mulf %742, %226 : vector<6x32xf32>
    %744 = arith.addf %741, %743 : vector<6x32xf32>
    %745 = vector.broadcast %731 : vector<6x1xf32> to vector<6x32xf32>
    %746 = arith.mulf %745, %369 : vector<6x32xf32>
    %747 = arith.addf %744, %746 : vector<6x32xf32>
    %748 = vector.broadcast %733 : vector<6x1xf32> to vector<6x32xf32>
    %749 = arith.mulf %748, %524 : vector<6x32xf32>
    %750 = arith.addf %747, %749 : vector<6x32xf32>
    %751 = vector.broadcast %735 : vector<6x1xf32> to vector<6x32xf32>
    %752 = arith.mulf %751, %691 : vector<6x32xf32>
    %753 = arith.addf %750, %752 : vector<6x32xf32>
    %754 = tpu.reciprocal %739 {approx = true} : vector<6x1xf32> -> vector<6x1xf32>
    %755 = vector.broadcast %754 : vector<6x1xf32> to vector<6x32xf32>
    %756 = arith.mulf %753, %755 : vector<6x32xf32>
    %c0_468 = arith.constant 0 : index
    %c0_469 = arith.constant 0 : index
    %757 = vector.load %arg31[%c0_468, %c0_469] : memref<32x32xf32, #tpu.memory_space<vmem>>, vector<32x32xf32>
    %cst_470 = arith.constant dense<0.000000e+00> : vector<6x32xf32>
    %758 = tpu.matmul %756, %757, %cst_470 {dimension_numbers = #tpu.dot_dimension_numbers<[1], [0], [0], [1], [0, 0, 1, 1], [], []>} : vector<6x32xf32>, vector<32x32xf32>, vector<6x32xf32> -> vector<6x32xf32>
    %c0_471 = arith.constant 0 : index
    %c0_472 = arith.constant 0 : index
    %759 = vector.load %arg32[%c0_471, %c0_472] : memref<1x32xf32, #tpu.memory_space<vmem>>, vector<1x32xf32>
    %760 = vector.broadcast %759 : vector<1x32xf32> to vector<6x32xf32>
    %761 = arith.addf %758, %760 : vector<6x32xf32>
    %762 = arith.addf %761, %681 : vector<6x32xf32>
    %c0_473 = arith.constant 0 : index
    %c0_474 = arith.constant 0 : index
    %763 = vector.load %arg33[%c0_473, %c0_474] : memref<32x32xf32, #tpu.memory_space<vmem>>, vector<32x32xf32>
    %cst_475 = arith.constant dense<0.000000e+00> : vector<6x32xf32>
    %764 = tpu.matmul %762, %763, %cst_475 {dimension_numbers = #tpu.dot_dimension_numbers<[1], [0], [0], [1], [0, 0, 1, 1], [], []>} : vector<6x32xf32>, vector<32x32xf32>, vector<6x32xf32> -> vector<6x32xf32>
    %c0_476 = arith.constant 0 : index
    %c0_477 = arith.constant 0 : index
    %765 = vector.load %arg34[%c0_476, %c0_477] : memref<1x32xf32, #tpu.memory_space<vmem>>, vector<1x32xf32>
    %766 = vector.broadcast %765 : vector<1x32xf32> to vector<6x32xf32>
    %767 = arith.addf %764, %766 : vector<6x32xf32>
    %cst_478 = arith.constant dense<0.000000e+00> : vector<6x36xf32>
    %768 = tpu.matmul %767, %78, %cst_478 {dimension_numbers = #tpu.dot_dimension_numbers<[1], [1], [0], [0], [0, 0, 1, 0], [], []>} : vector<6x32xf32>, vector<36x32xf32>, vector<6x36xf32> -> vector<6x36xf32>
    %cst_479 = arith.constant 0.176776692 : f32
    %769 = vector.broadcast %cst_479 : f32 to vector<6x36xf32>
    %770 = arith.mulf %768, %769 : vector<6x36xf32>
    %c4 = arith.constant 4 : index
    %c0_480 = arith.constant 0 : index
    %c0_481 = arith.constant 0 : index
    %771 = vector.load %arg7[%c4, %c0_480, %c0_481] : memref<5x6x36xf32, #tpu.memory_space<vmem>>, vector<1x6x36xf32>
    %772 = vector.shape_cast %771 : vector<1x6x36xf32> to vector<6x36xf32>
    %773 = arith.addf %770, %772 : vector<6x36xf32>
    %cst_482 = arith.constant dense<0xFF800000> : vector<6xf32>
    %774 = vector.multi_reduction <maximumf>, %773, %cst_482 [1] : vector<6x36xf32> to vector<6xf32>
    %775 = vector.shape_cast %774 : vector<6xf32> to vector<6x1xf32>
    %776 = vector.broadcast %775 : vector<6x1xf32> to vector<6x36xf32>
    %777 = arith.subf %773, %776 : vector<6x36xf32>
    %778 = math.exp %777 : vector<6x36xf32>
    %cst_483 = arith.constant dense<0.000000e+00> : vector<6xf32>
    %779 = vector.multi_reduction <add>, %778, %cst_483 [1] : vector<6x36xf32> to vector<6xf32>
    %780 = vector.shape_cast %779 : vector<6xf32> to vector<6x1xf32>
    %781 = tpu.reciprocal %780 {approx = true} : vector<6x1xf32> -> vector<6x1xf32>
    %782 = vector.broadcast %781 : vector<6x1xf32> to vector<6x36xf32>
    %783 = arith.mulf %778, %782 : vector<6x36xf32>
    %cst_484 = arith.constant dense<0.000000e+00> : vector<6x32xf32>
    %784 = tpu.matmul %783, %83, %cst_484 {dimension_numbers = #tpu.dot_dimension_numbers<[1], [0], [0], [1], [0, 0, 1, 1], [], []>} : vector<6x36xf32>, vector<36x32xf32>, vector<6x32xf32> -> vector<6x32xf32>
    %c0_485 = arith.constant 0 : index
    %c0_486 = arith.constant 0 : index
    %785 = vector.load %arg39[%c0_485, %c0_486] : memref<32x32xf32, #tpu.memory_space<vmem>>, vector<32x32xf32>
    %cst_487 = arith.constant dense<0.000000e+00> : vector<6x32xf32>
    %786 = tpu.matmul %784, %785, %cst_487 {dimension_numbers = #tpu.dot_dimension_numbers<[1], [0], [0], [1], [0, 0, 1, 1], [], []>} : vector<6x32xf32>, vector<32x32xf32>, vector<6x32xf32> -> vector<6x32xf32>
    %c0_488 = arith.constant 0 : index
    %c0_489 = arith.constant 0 : index
    %787 = vector.load %arg40[%c0_488, %c0_489] : memref<1x32xf32, #tpu.memory_space<vmem>>, vector<1x32xf32>
    %788 = vector.broadcast %787 : vector<1x32xf32> to vector<6x32xf32>
    %789 = arith.addf %786, %788 : vector<6x32xf32>
    %790 = arith.addf %762, %789 : vector<6x32xf32>
    %c0_490 = arith.constant 0 : index
    %c0_491 = arith.constant 0 : index
    %791 = vector.load %arg41[%c0_490, %c0_491] : memref<32x64xf32, #tpu.memory_space<vmem>>, vector<32x64xf32>
    %cst_492 = arith.constant dense<0.000000e+00> : vector<6x64xf32>
    %792 = tpu.matmul %790, %791, %cst_492 {dimension_numbers = #tpu.dot_dimension_numbers<[1], [0], [0], [1], [0, 0, 1, 1], [], []>} : vector<6x32xf32>, vector<32x64xf32>, vector<6x64xf32> -> vector<6x64xf32>
    %c0_493 = arith.constant 0 : index
    %c0_494 = arith.constant 0 : index
    %793 = vector.load %arg42[%c0_493, %c0_494] : memref<1x64xf32, #tpu.memory_space<vmem>>, vector<1x64xf32>
    %794 = vector.broadcast %793 : vector<1x64xf32> to vector<6x64xf32>
    %795 = arith.addf %792, %794 : vector<6x64xf32>
    %cst_495 = arith.constant 0.000000e+00 : f32
    %796 = vector.broadcast %cst_495 : f32 to vector<6x64xf32>
    %797 = arith.maximumf %795, %796 : vector<6x64xf32>
    %c0_496 = arith.constant 0 : index
    %c0_497 = arith.constant 0 : index
    %798 = vector.load %arg43[%c0_496, %c0_497] : memref<64x32xf32, #tpu.memory_space<vmem>>, vector<64x32xf32>
    %cst_498 = arith.constant dense<0.000000e+00> : vector<6x32xf32>
    %799 = tpu.matmul %797, %798, %cst_498 {dimension_numbers = #tpu.dot_dimension_numbers<[1], [0], [0], [1], [0, 0, 1, 1], [], []>} : vector<6x64xf32>, vector<64x32xf32>, vector<6x32xf32> -> vector<6x32xf32>
    %c0_499 = arith.constant 0 : index
    %c0_500 = arith.constant 0 : index
    %800 = vector.load %arg44[%c0_499, %c0_500] : memref<1x32xf32, #tpu.memory_space<vmem>>, vector<1x32xf32>
    %801 = vector.broadcast %800 : vector<1x32xf32> to vector<6x32xf32>
    %802 = arith.addf %799, %801 : vector<6x32xf32>
    %803 = arith.addf %790, %802 : vector<6x32xf32>
    %c0_501 = arith.constant 0 : index
    %c0_502 = arith.constant 0 : index
    %804 = vector.load %arg45[%c0_501, %c0_502] : memref<32x2xf32, #tpu.memory_space<vmem>>, vector<32x2xf32>
    %cst_503 = arith.constant dense<0.000000e+00> : vector<6x2xf32>
    %805 = tpu.matmul %803, %804, %cst_503 {dimension_numbers = #tpu.dot_dimension_numbers<[1], [0], [0], [1], [0, 0, 1, 1], [], []>} : vector<6x32xf32>, vector<32x2xf32>, vector<6x2xf32> -> vector<6x2xf32>
    %c0_504 = arith.constant 0 : index
    %c0_505 = arith.constant 0 : index
    %806 = vector.load %arg46[%c0_504, %c0_505] : memref<1x2xf32, #tpu.memory_space<vmem>>, vector<1x2xf32>
    %807 = vector.broadcast %806 : vector<1x2xf32> to vector<6x2xf32>
    %808 = arith.addf %805, %807 : vector<6x2xf32>
    %c0_506 = arith.constant 0 : index
    %c0_507 = arith.constant 0 : index
    %809 = vector.load %arg47[%c0_506, %c0_507] : memref<32x6xf32, #tpu.memory_space<vmem>>, vector<32x6xf32>
    %cst_508 = arith.constant dense<0.000000e+00> : vector<6x6xf32>
    %810 = tpu.matmul %803, %809, %cst_508 {dimension_numbers = #tpu.dot_dimension_numbers<[1], [0], [0], [1], [0, 0, 1, 1], [], []>} : vector<6x32xf32>, vector<32x6xf32>, vector<6x6xf32> -> vector<6x6xf32>
    %c0_509 = arith.constant 0 : index
    %c0_510 = arith.constant 0 : index
    %811 = vector.load %arg48[%c0_509, %c0_510] : memref<1x6xf32, #tpu.memory_space<vmem>>, vector<1x6xf32>
    %812 = vector.broadcast %811 : vector<1x6xf32> to vector<6x6xf32>
    %813 = arith.addf %810, %812 : vector<6x6xf32>
    %c4_511 = arith.constant 4 : index
    %c0_512 = arith.constant 0 : index
    %c0_513 = arith.constant 0 : index
    %814 = vector.load %arg49[%c4_511, %c0_512, %c0_513] : memref<5x6x2xf32, #tpu.memory_space<vmem>>, vector<1x6x2xf32>
    %815 = vector.shape_cast %814 : vector<1x6x2xf32> to vector<6x2xf32>
    %816 = vector.shape_cast %808 : vector<6x2xf32> to vector<1x6x2xf32>
    tpu.vector_store %arg49[%c4_511, %c0_512, %c0_513], %816 {strides = array<i32>} : memref<5x6x2xf32, #tpu.memory_space<vmem>>, vector<1x6x2xf32>,
    %c4_514 = arith.constant 4 : index
    %c0_515 = arith.constant 0 : index
    %c0_516 = arith.constant 0 : index
    %817 = vector.load %arg50[%c4_514, %c0_515, %c0_516] : memref<5x6x6xf32, #tpu.memory_space<vmem>>, vector<1x6x6xf32>
    %818 = vector.shape_cast %817 : vector<1x6x6xf32> to vector<6x6xf32>
    %819 = vector.shape_cast %813 : vector<6x6xf32> to vector<1x6x6xf32>
    tpu.vector_store %arg50[%c4_514, %c0_515, %c0_516], %819 {strides = array<i32>} : memref<5x6x6xf32, #tpu.memory_space<vmem>>, vector<1x6x6xf32>,
    %c4_517 = arith.constant 4 : index
    %c0_518 = arith.constant 0 : index
    %c0_519 = arith.constant 0 : index
    %820 = vector.load %arg5[%c4_517, %c0_518, %c0_519] : memref<5x6x2xf32, #tpu.memory_space<vmem>>, vector<1x6x2xf32>
    %821 = vector.shape_cast %820 : vector<1x6x2xf32> to vector<6x2xf32>
    %822 = arith.subf %808, %821 : vector<6x2xf32>
    %823 = arith.mulf %822, %822 : vector<6x2xf32>
    %824 = vector.shape_cast %823 : vector<6x2xf32> to vector<1x6x2xf32>
    %cst_520 = arith.constant dense<0.000000e+00> : vector<1xf32>
    %825 = vector.multi_reduction <add>, %824, %cst_520 [1, 2] : vector<1x6x2xf32> to vector<1xf32>
    %826 = vector.shape_cast %825 : vector<1xf32> to vector<1x1x1xf32>
    %827 = vector.extract %826[0, 0, 0] : f32 from vector<1x1x1xf32>
    %828 = vector.broadcast %827 : f32 to vector<1x1xf32>
    %829 = arith.addf %650, %828 : vector<1x1xf32>
    %c4_521 = arith.constant 4 : index
    %c0_522 = arith.constant 0 : index
    %c0_523 = arith.constant 0 : index
    %830 = vector.load %arg4[%c4_521, %c0_522, %c0_523] : memref<5x6x6xf32, #tpu.memory_space<vmem>>, vector<1x6x6xf32>
    %831 = vector.shape_cast %830 : vector<1x6x6xf32> to vector<6x6xf32>
    %cst_524 = arith.constant 0.000000e+00 : f32
    %832 = vector.broadcast %cst_524 : f32 to vector<6x6xf32>
    %833 = arith.cmpf ogt, %831, %832 : vector<6x6xf32>
    %cst_525 = arith.constant 2.000000e+00 : f32
    %cst_526 = arith.constant 1.000000e+00 : f32
    %834 = vector.broadcast %cst_525 : f32 to vector<6x6xf32>
    %835 = vector.broadcast %cst_526 : f32 to vector<6x6xf32>
    %836 = arith.select %833, %834, %835 : vector<6x6xi1>, vector<6x6xf32>
    %837 = arith.subf %813, %831 : vector<6x6xf32>
    %838 = arith.mulf %837, %836 : vector<6x6xf32>
    %839 = arith.mulf %838, %838 : vector<6x6xf32>
    %840 = vector.shape_cast %839 : vector<6x6xf32> to vector<1x6x6xf32>
    %cst_527 = arith.constant dense<0.000000e+00> : vector<1xf32>
    %841 = vector.multi_reduction <add>, %840, %cst_527 [1, 2] : vector<1x6x6xf32> to vector<1xf32>
    %842 = vector.shape_cast %841 : vector<1xf32> to vector<1x1x1xf32>
    %843 = vector.extract %842[0, 0, 0] : f32 from vector<1x1x1xf32>
    %844 = vector.broadcast %843 : f32 to vector<1x1xf32>
    %845 = arith.addf %666, %844 : vector<1x1xf32>
    %cst_528 = arith.constant 5.000000e-01 : f32
    %846 = vector.broadcast %cst_528 : f32 to vector<1x1xf32>
    %847 = arith.mulf %846, %829 : vector<1x1xf32>
    %c0_529 = arith.constant 0 : index
    %c0_530 = arith.constant 0 : index
    %848 = vector.load %arg51[%c0_529, %c0_530] : memref<1x1xf32, #tpu.memory_space<vmem>>, vector<1x1xf32>
    tpu.vector_store %arg51[%c0_529, %c0_530], %847 {strides = array<i32>} : memref<1x1xf32, #tpu.memory_space<vmem>>, vector<1x1xf32>,
    %cst_531 = arith.constant 5.000000e-01 : f32
    %849 = vector.broadcast %cst_531 : f32 to vector<1x1xf32>
    %850 = arith.mulf %849, %845 : vector<1x1xf32>
    %c0_532 = arith.constant 0 : index
    %c0_533 = arith.constant 0 : index
    %851 = vector.load %arg52[%c0_532, %c0_533] : memref<1x1xf32, #tpu.memory_space<vmem>>, vector<1x1xf32>
    tpu.vector_store %arg52[%c0_532, %c0_533], %850 {strides = array<i32>} : memref<1x1xf32, #tpu.memory_space<vmem>>, vector<1x1xf32>,
    return
  }
}

</mosaic_0001>

<llo_original>
// kernel: squeeze.4
$region0: #{squeeze.4}
  %s0 = inlined_call_operand.vmem [shape: f32[2,3,1,6], index: 0, kind: input, shape index: {}]
  %s1 = inlined_call_operand.vmem [shape: f32[6,6], index: 1, kind: output, shape index: {}]
  $region1: #{squeeze.4} parent=0
    #allocation0 [shape = 'u8[8192]{0}', space=vmem, size = 0x2000, scoped, tag = 'scoped mem for input reshape']
    %s3 = ssub.s32 16, 1
    %s4 = scalar_lea.vmem %s0, 4
    %v5 = vld [vmem:[%s4] sm:%s3]
    %s6 = scalar_lea.vmem [#allocation0], 8
    %7 = vst [vmem:[%s6] sm:%s3] %v5
    %v8 = vld [vmem:[%s0] sm:%s3]
    %9 = vst [vmem:[#allocation0] sm:%s3] %v8
    %v10 = vld [vmem:[#allocation0] sm:$0x7]
    %vm11 = vcmask 48128
    %12 = vst.msk [vmem:[%s1] sm:$0x7] %vm11, %v10
    %s13 = scalar_lea.vmem [#allocation0], 8
    %v14 = vld [vmem:[%s13] sm:$0x7]
    %vm15 = vcmask 48128
    %s16 = scalar_lea.vmem %s1, 3
    %17 = vst.msk [vmem:[%s16] sm:$0x7] %vm15, %v14

// kernel: ef_transformer_forward.1
$region0: #{ef_transformer_forward.1}
  #allocation0 [shape = 'u32[]', space=smem, size = 0x4, offset = 0x4, fixed_abs, tag = 'smem constant byte address 0x4 - core index']
  #allocation1 [shape = 'u32[72,128]{1,0:T(1,128)}', space=vmem, size = 0x9000, scoped, tag = 'internal scratch']
  %s0 = inlined_call_operand.smem [shape: u32[53], index: -1, kind: input, shape index: {}]
  %s1 = sld [smem:[%s0]]
  %s2 = scalar_lea.smem %s0, 1
  %s3 = sld [smem:[%s2]]
  %s4 = scalar_lea.smem %s0, 2
  %s5 = sld [smem:[%s4]]
  %s6 = scalar_lea.smem %s0, 3
  %s7 = sld [smem:[%s6]]
  %s8 = scalar_lea.smem %s0, 4
  %s9 = sld [smem:[%s8]]
  %s10 = scalar_lea.smem %s0, 5
  %s11 = sld [smem:[%s10]]
  %s12 = scalar_lea.smem %s0, 6
  %s13 = sld [smem:[%s12]]
  %s14 = scalar_lea.smem %s0, 7
  %s15 = sld [smem:[%s14]]
  %s16 = scalar_lea.smem %s0, 8
  %s17 = sld [smem:[%s16]]
  %s18 = scalar_lea.smem %s0, 9
  %s19 = sld [smem:[%s18]]
  %s20 = scalar_lea.smem %s0, 10
  %s21 = sld [smem:[%s20]]
  %s22 = scalar_lea.smem %s0, 11
  %s23 = sld [smem:[%s22]]
  %s24 = scalar_lea.smem %s0, 12
  %s25 = sld [smem:[%s24]]
  %s26 = scalar_lea.smem %s0, 13
  %s27 = sld [smem:[%s26]]
  %s28 = scalar_lea.smem %s0, 14
  %s29 = sld [smem:[%s28]]
  %s30 = scalar_lea.smem %s0, 15
  %s31 = sld [smem:[%s30]]
  %s32 = scalar_lea.smem %s0, 16
  %s33 = sld [smem:[%s32]]
  %s34 = scalar_lea.smem %s0, 17
  %s35 = sld [smem:[%s34]]
  %s36 = scalar_lea.smem %s0, 18
  %s37 = sld [smem:[%s36]]
  %s38 = scalar_lea.smem %s0, 19
  %s39 = sld [smem:[%s38]]
  %s40 = scalar_lea.smem %s0, 20
  %s41 = sld [smem:[%s40]]
  %s42 = scalar_lea.smem %s0, 21
  %s43 = sld [smem:[%s42]]
  %s44 = scalar_lea.smem %s0, 22
  %s45 = sld [smem:[%s44]]
  %s46 = scalar_lea.smem %s0, 23
  %s47 = sld [smem:[%s46]]
  %s48 = scalar_lea.smem %s0, 24
  %s49 = sld [smem:[%s48]]
  %s50 = scalar_lea.smem %s0, 25
  %s51 = sld [smem:[%s50]]
  %s52 = scalar_lea.smem %s0, 26
  %s53 = sld [smem:[%s52]]
  %s54 = scalar_lea.smem %s0, 27
  %s55 = sld [smem:[%s54]]
  %s56 = scalar_lea.smem %s0, 28
  %s57 = sld [smem:[%s56]]
  %s58 = scalar_lea.smem %s0, 29
  %s59 = sld [smem:[%s58]]
  %s60 = scalar_lea.smem %s0, 30
  %s61 = sld [smem:[%s60]]
  %s62 = scalar_lea.smem %s0, 31
  %s63 = sld [smem:[%s62]]
  %s64 = scalar_lea.smem %s0, 32
  %s65 = sld [smem:[%s64]]
  %s66 = scalar_lea.smem %s0, 33
  %s67 = sld [smem:[%s66]]
  %s68 = scalar_lea.smem %s0, 34
  %s69 = sld [smem:[%s68]]
  %s70 = scalar_lea.smem %s0, 35
  %s71 = sld [smem:[%s70]]
  %s72 = scalar_lea.smem %s0, 36
  %s73 = sld [smem:[%s72]]
  %s74 = scalar_lea.smem %s0, 37
  %s75 = sld [smem:[%s74]]
  %s76 = scalar_lea.smem %s0, 38
  %s77 = sld [smem:[%s76]]
  %s78 = scalar_lea.smem %s0, 39
  %s79 = sld [smem:[%s78]]
  %s80 = scalar_lea.smem %s0, 40
  %s81 = sld [smem:[%s80]]
  %s82 = scalar_lea.smem %s0, 41
  %s83 = sld [smem:[%s82]]
  %s84 = scalar_lea.smem %s0, 42
  %s85 = sld [smem:[%s84]]
  %s86 = scalar_lea.smem %s0, 43
  %s87 = sld [smem:[%s86]]
  %s88 = scalar_lea.smem %s0, 44
  %s89 = sld [smem:[%s88]]
  %s90 = scalar_lea.smem %s0, 45
  %s91 = sld [smem:[%s90]]
  %s92 = scalar_lea.smem %s0, 46
  %s93 = sld [smem:[%s92]]
  %s94 = scalar_lea.smem %s0, 47
  %s95 = sld [smem:[%s94]]
  %s96 = scalar_lea.smem %s0, 48
  %s97 = sld [smem:[%s96]]
  %s98 = scalar_lea.smem %s0, 49
  %s99 = sld [smem:[%s98]]
  %s100 = scalar_lea.smem %s0, 50
  %s101 = sld [smem:[%s100]]
  %s102 = scalar_lea.smem %s0, 51
  %s103 = sld [smem:[%s102]]
  %s104 = scalar_lea.smem %s0, 52
  %s105 = sld [smem:[%s104]]
  %106 = xla_tuple %s99, %s101, %s103, %s105
  %s107 = sld [smem:[#allocation0]]
  $region238: #{ef_transformer_forward.1} parent=0
    _
  %s109 = ssub.s32 1, %s107
  %s110 = scalar_select 0, %s109, %s107
  $region1: #{ef_transformer_forward.1} parent=0
    #allocation2 [shape = 'u8[512]{0}', space=vmem, size = 0x400, scoped, tag = 'input window, operand 46, single buffered']
    #allocation3 [shape = 's32[1]{0}', space=sflag, size = 0x4, scoped, tag = 'scoped memory for ef_transformer_forward.1']
    #allocation4 [shape = 's32[1]{0}', space=sflag, size = 0x4, scoped, tag = 'scoped memory for ef_transformer_forward.1']
    #allocation5 [shape = 'u8[512]{0}', space=vmem, size = 0x400, scoped, tag = 'input window, operand 48, single buffered']
    #allocation6 [shape = 's32[1]{0}', space=sflag, size = 0x4, scoped, tag = 'scoped memory for ef_transformer_forward.1']
    #allocation7 [shape = 'u8[512]{0}', space=vmem, size = 0x400, scoped, tag = 'output window, operand 2, single buffered']
    #allocation8 [shape = 'u8[512]{0}', space=vmem, size = 0x400, scoped, tag = 'output window, operand 3, single buffered']
    #allocation9 [shape = 's32[1]{0}', space=sflag, size = 0x4, scoped, tag = 'scoped memory for ef_transformer_forward.1']
    %111 = vsyncpa [#allocation3], 0
    %112 = vsyncpa [#allocation6], 0
    %113 = vsyncpa [#allocation4], 0
    %114 = vsyncpa [#allocation9], 0
    // Predicated region
    $region2: #{ef_transformer_forward.1} parent=1 // pred_check
      _
    $region3: #{ef_transformer_forward.1} parent=1 // pred_check_branch
      %116 = sbr.rel (0) target = $region5
    $region4: #{ef_transformer_forward.1} parent=1 // pred_region
      _
    $region5: #{ef_transformer_forward.1} parent=1 // pred_fallthru
      _
    // Predicated region
    $region6: #{ef_transformer_forward.1} parent=1 // pred_check
      _
    $region7: #{ef_transformer_forward.1} parent=1 // pred_check_branch
      %118 = sbr.rel (0) target = $region9
    $region8: #{ef_transformer_forward.1} parent=1 // pred_region
      _
    $region9: #{ef_transformer_forward.1} parent=1 // pred_fallthru
      _
    // Predicated region
    $region10: #{ef_transformer_forward.1} parent=1 // pred_check
      _
    $region11: #{ef_transformer_forward.1} parent=1 // pred_check_branch
      %120 = sbr.rel (0) target = $region13
    $region12: #{ef_transformer_forward.1} parent=1 // pred_region
      _
    $region13: #{ef_transformer_forward.1} parent=1 // pred_fallthru
      _
    // Predicated region
    $region14: #{ef_transformer_forward.1} parent=1 // pred_check
      _
    $region15: #{ef_transformer_forward.1} parent=1 // pred_check_branch
      %122 = sbr.rel (0) target = $region17
    $region16: #{ef_transformer_forward.1} parent=1 // pred_region
      _
    $region17: #{ef_transformer_forward.1} parent=1 // pred_fallthru
      _
    // Predicated region
    $region18: #{ef_transformer_forward.1} parent=1 // pred_check
      _
    $region19: #{ef_transformer_forward.1} parent=1 // pred_check_branch
      %124 = sbr.rel (0) target = $region21
    $region20: #{ef_transformer_forward.1} parent=1 // pred_region
      _
    $region21: #{ef_transformer_forward.1} parent=1 // pred_fallthru
      _
    // Predicated region
    $region22: #{ef_transformer_forward.1} parent=1 // pred_check
      _
    $region23: #{ef_transformer_forward.1} parent=1 // pred_check_branch
      %126 = sbr.rel (0) target = $region25
    $region24: #{ef_transformer_forward.1} parent=1 // pred_region
      _
    $region25: #{ef_transformer_forward.1} parent=1 // pred_fallthru
      _
    // Predicated region
    $region26: #{ef_transformer_forward.1} parent=1 // pred_check
      _
    $region27: #{ef_transformer_forward.1} parent=1 // pred_check_branch
      %128 = sbr.rel (0) target = $region29
    $region28: #{ef_transformer_forward.1} parent=1 // pred_region
      _
    $region29: #{ef_transformer_forward.1} parent=1 // pred_fallthru
      _
    // Predicated region
    $region30: #{ef_transformer_forward.1} parent=1 // pred_check
      _
    $region31: #{ef_transformer_forward.1} parent=1 // pred_check_branch
      %130 = sbr.rel (0) target = $region33
    $region32: #{ef_transformer_forward.1} parent=1 // pred_region
      _
    $region33: #{ef_transformer_forward.1} parent=1 // pred_fallthru
      _
    // Predicated region
    $region34: #{ef_transformer_forward.1} parent=1 // pred_check
      _
    $region35: #{ef_transformer_forward.1} parent=1 // pred_check_branch
      %132 = sbr.rel (0) target = $region37
    $region36: #{ef_transformer_forward.1} parent=1 // pred_region
      _
    $region37: #{ef_transformer_forward.1} parent=1 // pred_fallthru
      _
    // Predicated region
    $region38: #{ef_transformer_forward.1} parent=1 // pred_check
      _
    $region39: #{ef_transformer_forward.1} parent=1 // pred_check_branch
      %134 = sbr.rel (0) target = $region41
    $region40: #{ef_transformer_forward.1} parent=1 // pred_region
      _
    $region41: #{ef_transformer_forward.1} parent=1 // pred_fallthru
      _
    // Predicated region
    $region42: #{ef_transformer_forward.1} parent=1 // pred_check
      _
    $region43: #{ef_transformer_forward.1} parent=1 // pred_check_branch
      %136 = sbr.rel (0) target = $region45
    $region44: #{ef_transformer_forward.1} parent=1 // pred_region
      _
    $region45: #{ef_transformer_forward.1} parent=1 // pred_fallthru
      _
    // Predicated region
    $region46: #{ef_transformer_forward.1} parent=1 // pred_check
      _
    $region47: #{ef_transformer_forward.1} parent=1 // pred_check_branch
      %138 = sbr.rel (0) target = $region49
    $region48: #{ef_transformer_forward.1} parent=1 // pred_region
      _
    $region49: #{ef_transformer_forward.1} parent=1 // pred_fallthru
      _
    // Predicated region
    $region50: #{ef_transformer_forward.1} parent=1 // pred_check
      _
    $region51: #{ef_transformer_forward.1} parent=1 // pred_check_branch
      %140 = sbr.rel (0) target = $region53
    $region52: #{ef_transformer_forward.1} parent=1 // pred_region
      _
    $region53: #{ef_transformer_forward.1} parent=1 // pred_fallthru
      _
    // Predicated region
    $region54: #{ef_transformer_forward.1} parent=1 // pred_check
      _
    $region55: #{ef_transformer_forward.1} parent=1 // pred_check_branch
      %142 = sbr.rel (0) target = $region57
    $region56: #{ef_transformer_forward.1} parent=1 // pred_region
      _
    $region57: #{ef_transformer_forward.1} parent=1 // pred_fallthru
      _
    // Predicated region
    $region58: #{ef_transformer_forward.1} parent=1 // pred_check
      _
    $region59: #{ef_transformer_forward.1} parent=1 // pred_check_branch
      %144 = sbr.rel (0) target = $region61
    $region60: #{ef_transformer_forward.1} parent=1 // pred_region
      _
    $region61: #{ef_transformer_forward.1} parent=1 // pred_fallthru
      _
    // Predicated region
    $region62: #{ef_transformer_forward.1} parent=1 // pred_check
      _
    $region63: #{ef_transformer_forward.1} parent=1 // pred_check_branch
      %146 = sbr.rel (0) target = $region65
    $region64: #{ef_transformer_forward.1} parent=1 // pred_region
      _
    $region65: #{ef_transformer_forward.1} parent=1 // pred_fallthru
      _
    // Predicated region
    $region66: #{ef_transformer_forward.1} parent=1 // pred_check
      _
    $region67: #{ef_transformer_forward.1} parent=1 // pred_check_branch
      %148 = sbr.rel (0) target = $region69
    $region68: #{ef_transformer_forward.1} parent=1 // pred_region
      _
    $region69: #{ef_transformer_forward.1} parent=1 // pred_fallthru
      _
    // Predicated region
    $region70: #{ef_transformer_forward.1} parent=1 // pred_check
      _
    $region71: #{ef_transformer_forward.1} parent=1 // pred_check_branch
      %150 = sbr.rel (0) target = $region73
    $region72: #{ef_transformer_forward.1} parent=1 // pred_region
      _
    $region73: #{ef_transformer_forward.1} parent=1 // pred_fallthru
      _
    // Predicated region
    $region74: #{ef_transformer_forward.1} parent=1 // pred_check
      _
    $region75: #{ef_transformer_forward.1} parent=1 // pred_check_branch
      %152 = sbr.rel (0) target = $region77
    $region76: #{ef_transformer_forward.1} parent=1 // pred_region
      _
    $region77: #{ef_transformer_forward.1} parent=1 // pred_fallthru
      _
    // Predicated region
    $region78: #{ef_transformer_forward.1} parent=1 // pred_check
      _
    $region79: #{ef_transformer_forward.1} parent=1 // pred_check_branch
      %154 = sbr.rel (0) target = $region81
    $region80: #{ef_transformer_forward.1} parent=1 // pred_region
      _
    $region81: #{ef_transformer_forward.1} parent=1 // pred_fallthru
      _
    // Predicated region
    $region82: #{ef_transformer_forward.1} parent=1 // pred_check
      _
    $region83: #{ef_transformer_forward.1} parent=1 // pred_check_branch
      %156 = sbr.rel (0) target = $region85
    $region84: #{ef_transformer_forward.1} parent=1 // pred_region
      _
    $region85: #{ef_transformer_forward.1} parent=1 // pred_fallthru
      _
    // Predicated region
    $region86: #{ef_transformer_forward.1} parent=1 // pred_check
      _
    $region87: #{ef_transformer_forward.1} parent=1 // pred_check_branch
      %158 = sbr.rel (0) target = $region89
    $region88: #{ef_transformer_forward.1} parent=1 // pred_region
      _
    $region89: #{ef_transformer_forward.1} parent=1 // pred_fallthru
      _
    // Predicated region
    $region90: #{ef_transformer_forward.1} parent=1 // pred_check
      _
    $region91: #{ef_transformer_forward.1} parent=1 // pred_check_branch
      %160 = sbr.rel (0) target = $region93
    $region92: #{ef_transformer_forward.1} parent=1 // pred_region
      _
    $region93: #{ef_transformer_forward.1} parent=1 // pred_fallthru
      _
    // Predicated region
    $region94: #{ef_transformer_forward.1} parent=1 // pred_check
      _
    $region95: #{ef_transformer_forward.1} parent=1 // pred_check_branch
      %162 = sbr.rel (0) target = $region97
    $region96: #{ef_transformer_forward.1} parent=1 // pred_region
      _
    $region97: #{ef_transformer_forward.1} parent=1 // pred_fallthru
      _
    // Predicated region
    $region98: #{ef_transformer_forward.1} parent=1 // pred_check
      _
    $region99: #{ef_transformer_forward.1} parent=1 // pred_check_branch
      %164 = sbr.rel (0) target = $region101
    $region100: #{ef_transformer_forward.1} parent=1 // pred_region
      _
    $region101: #{ef_transformer_forward.1} parent=1 // pred_fallthru
      _
    // Predicated region
    $region102: #{ef_transformer_forward.1} parent=1 // pred_check
      _
    $region103: #{ef_transformer_forward.1} parent=1 // pred_check_branch
      %166 = sbr.rel (0) target = $region105
    $region104: #{ef_transformer_forward.1} parent=1 // pred_region
      _
    $region105: #{ef_transformer_forward.1} parent=1 // pred_fallthru
      _
    // Predicated region
    $region106: #{ef_transformer_forward.1} parent=1 // pred_check
      _
    $region107: #{ef_transformer_forward.1} parent=1 // pred_check_branch
      %168 = sbr.rel (0) target = $region109
    $region108: #{ef_transformer_forward.1} parent=1 // pred_region
      _
    $region109: #{ef_transformer_forward.1} parent=1 // pred_fallthru
      _
    // Predicated region
    $region110: #{ef_transformer_forward.1} parent=1 // pred_check
      _
    $region111: #{ef_transformer_forward.1} parent=1 // pred_check_branch
      %170 = sbr.rel (0) target = $region113
    $region112: #{ef_transformer_forward.1} parent=1 // pred_region
      _
    $region113: #{ef_transformer_forward.1} parent=1 // pred_fallthru
      _
    // Predicated region
    $region114: #{ef_transformer_forward.1} parent=1 // pred_check
      _
    $region115: #{ef_transformer_forward.1} parent=1 // pred_check_branch
      %172 = sbr.rel (0) target = $region117
    $region116: #{ef_transformer_forward.1} parent=1 // pred_region
      _
    $region117: #{ef_transformer_forward.1} parent=1 // pred_fallthru
      _
    // Predicated region
    $region118: #{ef_transformer_forward.1} parent=1 // pred_check
      _
    $region119: #{ef_transformer_forward.1} parent=1 // pred_check_branch
      %174 = sbr.rel (0) target = $region121
    $region120: #{ef_transformer_forward.1} parent=1 // pred_region
      _
    $region121: #{ef_transformer_forward.1} parent=1 // pred_fallthru
      _
    // Predicated region
    $region122: #{ef_transformer_forward.1} parent=1 // pred_check
      _
    $region123: #{ef_transformer_forward.1} parent=1 // pred_check_branch
      %176 = sbr.rel (0) target = $region125
    $region124: #{ef_transformer_forward.1} parent=1 // pred_region
      _
    $region125: #{ef_transformer_forward.1} parent=1 // pred_fallthru
      _
    // Predicated region
    $region126: #{ef_transformer_forward.1} parent=1 // pred_check
      _
    $region127: #{ef_transformer_forward.1} parent=1 // pred_check_branch
      %178 = sbr.rel (0) target = $region129
    $region128: #{ef_transformer_forward.1} parent=1 // pred_region
      _
    $region129: #{ef_transformer_forward.1} parent=1 // pred_fallthru
      _
    // Predicated region
    $region130: #{ef_transformer_forward.1} parent=1 // pred_check
      _
    $region131: #{ef_transformer_forward.1} parent=1 // pred_check_branch
      %180 = sbr.rel (0) target = $region133
    $region132: #{ef_transformer_forward.1} parent=1 // pred_region
      _
    $region133: #{ef_transformer_forward.1} parent=1 // pred_fallthru
      _
    // Predicated region
    $region134: #{ef_transformer_forward.1} parent=1 // pred_check
      _
    $region135: #{ef_transformer_forward.1} parent=1 // pred_check_branch
      %182 = sbr.rel (0) target = $region137
    $region136: #{ef_transformer_forward.1} parent=1 // pred_region
      _
    $region137: #{ef_transformer_forward.1} parent=1 // pred_fallthru
      _
    // Predicated region
    $region138: #{ef_transformer_forward.1} parent=1 // pred_check
      _
    $region139: #{ef_transformer_forward.1} parent=1 // pred_check_branch
      %184 = sbr.rel (0) target = $region141
    $region140: #{ef_transformer_forward.1} parent=1 // pred_region
      _
    $region141: #{ef_transformer_forward.1} parent=1 // pred_fallthru
      _
    // Predicated region
    $region142: #{ef_transformer_forward.1} parent=1 // pred_check
      _
    $region143: #{ef_transformer_forward.1} parent=1 // pred_check_branch
      %186 = sbr.rel (0) target = $region145
    $region144: #{ef_transformer_forward.1} parent=1 // pred_region
      _
    $region145: #{ef_transformer_forward.1} parent=1 // pred_fallthru
      _
    // Predicated region
    $region146: #{ef_transformer_forward.1} parent=1 // pred_check
      _
    $region147: #{ef_transformer_forward.1} parent=1 // pred_check_branch
      %188 = sbr.rel (0) target = $region149
    $region148: #{ef_transformer_forward.1} parent=1 // pred_region
      _
    $region149: #{ef_transformer_forward.1} parent=1 // pred_fallthru
      _
    // Predicated region
    $region150: #{ef_transformer_forward.1} parent=1 // pred_check
      _
    $region151: #{ef_transformer_forward.1} parent=1 // pred_check_branch
      %190 = sbr.rel (0) target = $region153
    $region152: #{ef_transformer_forward.1} parent=1 // pred_region
      _
    $region153: #{ef_transformer_forward.1} parent=1 // pred_fallthru
      _
    // Predicated region
    $region154: #{ef_transformer_forward.1} parent=1 // pred_check
      _
    $region155: #{ef_transformer_forward.1} parent=1 // pred_check_branch
      %192 = sbr.rel (0) target = $region157
    $region156: #{ef_transformer_forward.1} parent=1 // pred_region
      _
    $region157: #{ef_transformer_forward.1} parent=1 // pred_fallthru
      _
    // Predicated region
    $region158: #{ef_transformer_forward.1} parent=1 // pred_check
      _
    $region159: #{ef_transformer_forward.1} parent=1 // pred_check_branch
      %194 = sbr.rel (0) target = $region161
    $region160: #{ef_transformer_forward.1} parent=1 // pred_region
      _
    $region161: #{ef_transformer_forward.1} parent=1 // pred_fallthru
      _
    // Predicated region
    $region162: #{ef_transformer_forward.1} parent=1 // pred_check
      _
    $region163: #{ef_transformer_forward.1} parent=1 // pred_check_branch
      %196 = sbr.rel (0) target = $region165
    $region164: #{ef_transformer_forward.1} parent=1 // pred_region
      _
    $region165: #{ef_transformer_forward.1} parent=1 // pred_fallthru
      _
    // Predicated region
    $region166: #{ef_transformer_forward.1} parent=1 // pred_check
      _
    $region167: #{ef_transformer_forward.1} parent=1 // pred_check_branch
      %198 = sbr.rel (0) target = $region169
    $region168: #{ef_transformer_forward.1} parent=1 // pred_region
      _
    $region169: #{ef_transformer_forward.1} parent=1 // pred_fallthru
      _
    // Predicated region
    $region170: #{ef_transformer_forward.1} parent=1 // pred_check
      _
    $region171: #{ef_transformer_forward.1} parent=1 // pred_check_branch
      %200 = sbr.rel (0) target = $region173
    $region172: #{ef_transformer_forward.1} parent=1 // pred_region
      _
    $region173: #{ef_transformer_forward.1} parent=1 // pred_fallthru
      _
    // Predicated region
    $region174: #{ef_transformer_forward.1} parent=1 // pred_check
      _
    $region175: #{ef_transformer_forward.1} parent=1 // pred_check_branch
      %202 = sbr.rel (0) target = $region177
    $region176: #{ef_transformer_forward.1} parent=1 // pred_region
      _
    $region177: #{ef_transformer_forward.1} parent=1 // pred_fallthru
      _
    // Predicated region
    $region178: #{ef_transformer_forward.1} parent=1 // pred_check
      _
    $region179: #{ef_transformer_forward.1} parent=1 // pred_check_branch
      %204 = sbr.rel (0) target = $region181
    $region180: #{ef_transformer_forward.1} parent=1 // pred_region
      _
    $region181: #{ef_transformer_forward.1} parent=1 // pred_fallthru
      _
    // Predicated region
    $region182: #{ef_transformer_forward.1} parent=1 // pred_check
      _
    $region183: #{ef_transformer_forward.1} parent=1 // pred_check_branch
      %206 = sbr.rel (0) target = $region185
    $region184: #{ef_transformer_forward.1} parent=1 // pred_region
      _
    $region185: #{ef_transformer_forward.1} parent=1 // pred_fallthru
      _
    // Predicated region
    $region186: #{ef_transformer_forward.1} parent=1 // pred_check
      _
    $region187: #{ef_transformer_forward.1} parent=1 // pred_check_branch
      %208 = sbr.rel (0) target = $region189
    $region188: #{ef_transformer_forward.1} parent=1 // pred_region
      %210 = vsyncadd [#allocation3], 0
      %s212 = sshll.u32 %s93, 4
      %s213 = int_to_ptr.hbm [resolvable:$true] %s212
      %s214 = sshll.u32 [#allocation2], 4
      %s215 = int_to_ptr.vmem [resolvable:$true] %s214
      %217 = dma.hbm_to_vmem [thread:$0]  %s213, 16, %s215, [#allocation3]
    $region189: #{ef_transformer_forward.1} parent=1 // pred_fallthru
      _
    // Predicated region
    $region190: #{ef_transformer_forward.1} parent=1 // pred_check
      _
    $region191: #{ef_transformer_forward.1} parent=1 // pred_check_branch
      %219 = sbr.rel (0) target = $region193
    $region192: #{ef_transformer_forward.1} parent=1 // pred_region
      _
    $region193: #{ef_transformer_forward.1} parent=1 // pred_fallthru
      _
    // Predicated region
    $region194: #{ef_transformer_forward.1} parent=1 // pred_check
      _
    $region195: #{ef_transformer_forward.1} parent=1 // pred_check_branch
      %221 = sbr.rel (0) target = $region197
    $region196: #{ef_transformer_forward.1} parent=1 // pred_region
      %223 = vsyncadd [#allocation6], 0
      %s225 = sshll.u32 %s97, 4
      %s226 = int_to_ptr.hbm [resolvable:$true] %s225
      %s227 = sshll.u32 [#allocation5], 4
      %s228 = int_to_ptr.vmem [resolvable:$true] %s227
      %230 = dma.hbm_to_vmem [thread:$0]  %s226, 16, %s228, [#allocation6]
    $region197: #{ef_transformer_forward.1} parent=1 // pred_fallthru
      _
    // Predicated region
    $region198: #{ef_transformer_forward.1} parent=1 // pred_check
      _
    $region199: #{ef_transformer_forward.1} parent=1 // pred_check_branch
      %232 = sbr.rel (0) target = $region201
    $region200: #{ef_transformer_forward.1} parent=1 // pred_region
      %234 = dma.done [#allocation3], 16
    $region201: #{ef_transformer_forward.1} parent=1 // pred_fallthru
      _
    // Predicated region
    $region202: #{ef_transformer_forward.1} parent=1 // pred_check
      _
    $region203: #{ef_transformer_forward.1} parent=1 // pred_check_branch
      %236 = sbr.rel (0) target = $region205
    $region204: #{ef_transformer_forward.1} parent=1 // pred_region
      %238 = dma.done [#allocation6], 16
    $region205: #{ef_transformer_forward.1} parent=1 // pred_fallthru
      _
    %v239 = vld [vmem:[%s1] sm:$0xff]
    %v240 = vld [vmem:[%s1 + $0x8] sm:$0xff]
    %v241 = vld [vmem:[%s1 + $0x10] sm:$0xff]
    %v242 = vld [vmem:[%s1 + $0x18] sm:$0xff]
    %v243 = vld [vmem:[%s1 + $0x20] sm:$0xf]
    %v244 = vld [vmem:[%s17] sm:$0x3f]
    %v245 = vld [vmem:[%s3] sm:$0xff]
    %v246 = vld [vmem:[%s3 + $0x8] sm:$0xff]
    %v247 = vld [vmem:[%s3 + $0x10] sm:$0xff]
    %v248 = vld [vmem:[%s3 + $0x18] sm:$0xff]
    %v249 = vld [vmem:[%s3 + $0x20] sm:$0xf]
    %v250 = vld [vmem:[%s19] sm:$0x7]
    %vm251 = vcmask 23552
    %v253 = vsel %vm251, %v245, 0
    %v256 = vsel %vm251, %v246, 0
    %v259 = vsel %vm251, %v247, 0
    %v262 = vsel %vm251, %v248, 0
    %v265 = vsel %vm251, %v249, 0
    %vm267 = vcmask 1042432
    %v269 = vsel %vm267, %v250, 0
    %271 = vmatpush.msra.mxu0 0.0
    %272 = vmatpush.msra.mxu0 0.0
    %273 = vmatpush.msra.mxu0 0.0
    %274 = vmatpush.msra.mxu0 0.0
    %275 = vmatpush.msra.mxu0 0.0
    %276 = vmatpush.msra.mxu0 0.0
    %277 = vmatpush.msra.mxu0 0.0
    %278 = vmatpush.msra.mxu0 0.0
    %279 = vmatpush.msra.mxu0 0.0
    %280 = vmatpush.msra.mxu0 0.0
    %281 = vmatpush.msra.mxu0 0.0
    %282 = vmatpush.msra.mxu0 0.0
    %283 = vmatpush.msra.mxu0 0.0
    %284 = vmatpush.msra.mxu0 0.0
    %285 = vmatpush.msra.mxu0 0.0
    %286 = vmatpush.msra.mxu0 %v269
    %287 = vmatmul.f32.gmra.mxu0 %v253
    %v288 = vpop.f32.mrf.mxu0
    %v289 = vadd.f32 0.0, %v288
    %290 = vmatmul.f32.gmra.mxu0 %v256
    %v291 = vpop.f32.mrf.mxu0
    %v292 = vadd.f32 0.0, %v291
    %293 = vmatmul.f32.gmra.mxu0 %v259
    %v294 = vpop.f32.mrf.mxu0
    %v295 = vadd.f32 0.0, %v294
    %296 = vmatmul.f32.gmra.mxu0 %v262
    %v297 = vpop.f32.mrf.mxu0
    %v298 = vadd.f32 0.0, %v297
    %299 = vmatmul.f32.gmra.mxu0 %v265
    %v300 = vpop.f32.mrf.mxu0
    %v301 = vadd.f32 0.0, %v300
    %302 = vdwg.mxu0
    %vm303 = vcmask 48128
    %v305 = vsel %vm303, %v239, 0
    %v308 = vsel %vm303, %v240, 0
    %v311 = vsel %vm303, %v241, 0
    %v314 = vsel %vm303, %v242, 0
    %v317 = vsel %vm303, %v243, 0
    %vm319 = vcmask 1045504
    %v321 = vsel %vm319, %v244, 0
    %323 = vmatpush.msra.mxu0 0.0
    %324 = vmatpush.msra.mxu0 0.0
    %325 = vmatpush.msra.mxu0 0.0
    %326 = vmatpush.msra.mxu0 0.0
    %327 = vmatpush.msra.mxu0 0.0
    %328 = vmatpush.msra.mxu0 0.0
    %329 = vmatpush.msra.mxu0 0.0
    %330 = vmatpush.msra.mxu0 0.0
    %331 = vmatpush.msra.mxu0 0.0
    %332 = vmatpush.msra.mxu0 0.0
    %333 = vmatpush.msra.mxu0 0.0
    %334 = vmatpush.msra.mxu0 0.0
    %335 = vmatpush.msra.mxu0 0.0
    %336 = vmatpush.msra.mxu0 0.0
    %337 = vmatpush.msra.mxu0 0.0
    %338 = vmatpush.msra.mxu0 %v321
    %339 = vmatmul.f32.gmra.mxu0 %v305
    %v340 = vpop.f32.mrf.mxu0
    %v341 = vadd.f32 %v289, %v340
    %342 = vmatmul.f32.gmra.mxu0 %v308
    %v343 = vpop.f32.mrf.mxu0
    %v344 = vadd.f32 %v292, %v343
    %345 = vmatmul.f32.gmra.mxu0 %v311
    %v346 = vpop.f32.mrf.mxu0
    %v347 = vadd.f32 %v295, %v346
    %348 = vmatmul.f32.gmra.mxu0 %v314
    %v349 = vpop.f32.mrf.mxu0
    %v350 = vadd.f32 %v298, %v349
    %351 = vmatmul.f32.gmra.mxu0 %v317
    %v352 = vpop.f32.mrf.mxu0
    %v353 = vadd.f32 %v301, %v352
    %354 = vdwg.mxu0
    %v355 = vld [vmem:[%s25] sm:$0x1]
    %v357 = vperm.slane %v355, 0
    %v359 = vadd.f32 %v341, %v357
    %v360 = vadd.f32 %v344, %v357
    %v361 = vadd.f32 %v347, %v357
    %v362 = vadd.f32 %v350, %v357
    %v363 = vadd.f32 %v353, %v357
    %v364 = vmax.f32 %v359, 0.0
    %v365 = vmax.f32 %v360, 0.0
    %v366 = vmax.f32 %v361, 0.0
    %v367 = vmax.f32 %v362, 0.0
    %v368 = vmax.f32 %v363, 0.0
    %v369 = vld [vmem:[%s5] sm:$0x3f]
    %v370 = vld [vmem:[%s7] sm:$0x3f]
    %v372 = vsel %vm251, %v370, 0
    %374 = vmatpush.msra.mxu0 0.0
    %375 = vmatpush.msra.mxu0 0.0
    %376 = vmatpush.msra.mxu0 0.0
    %377 = vmatpush.msra.mxu0 0.0
    %378 = vmatpush.msra.mxu0 0.0
    %379 = vmatpush.msra.mxu0 0.0
    %380 = vmatpush.msra.mxu0 0.0
    %381 = vmatpush.msra.mxu0 0.0
    %382 = vmatpush.msra.mxu0 0.0
    %383 = vmatpush.msra.mxu0 0.0
    %384 = vmatpush.msra.mxu0 0.0
    %385 = vmatpush.msra.mxu0 0.0
    %386 = vmatpush.msra.mxu0 0.0
    %387 = vmatpush.msra.mxu0 0.0
    %388 = vmatpush.msra.mxu0 0.0
    %389 = vmatpush.msra.mxu0 %v269
    %390 = vmatmul.f32.gmra.mxu0 %v372
    %v391 = vpop.f32.mrf.mxu0
    %v392 = vadd.f32 0.0, %v391
    %393 = vdwg.mxu0
    %v395 = vsel %vm303, %v369, 0
    %397 = vmatpush.msra.mxu0 0.0
    %398 = vmatpush.msra.mxu0 0.0
    %399 = vmatpush.msra.mxu0 0.0
    %400 = vmatpush.msra.mxu0 0.0
    %401 = vmatpush.msra.mxu0 0.0
    %402 = vmatpush.msra.mxu0 0.0
    %403 = vmatpush.msra.mxu0 0.0
    %404 = vmatpush.msra.mxu0 0.0
    %405 = vmatpush.msra.mxu0 0.0
    %406 = vmatpush.msra.mxu0 0.0
    %407 = vmatpush.msra.mxu0 0.0
    %408 = vmatpush.msra.mxu0 0.0
    %409 = vmatpush.msra.mxu0 0.0
    %410 = vmatpush.msra.mxu0 0.0
    %411 = vmatpush.msra.mxu0 0.0
    %412 = vmatpush.msra.mxu0 %v321
    %413 = vmatmul.f32.gmra.mxu0 %v395
    %v414 = vpop.f32.mrf.mxu0
    %v415 = vadd.f32 %v392, %v414
    %416 = vdwg.mxu0
    %v417 = vadd.f32 %v415, %v357
    %v418 = vmax.f32 %v417, 0.0
    %v419 = vld [vmem:[%s27] sm:$0xff]
    %v420 = vld [vmem:[%s27 + $0x8] sm:$0xff]
    %v421 = vld [vmem:[%s27 + $0x10] sm:$0xff]
    %v422 = vld [vmem:[%s27 + $0x18] sm:$0xff]
    %v423 = vld [vmem:[%s29] sm:$0x1]
    %v425 = vperm.slane %v423, 0
    %vm427 = vcmask 261120
    %v429 = vsel %vm427, %v364, 0
    %v432 = vsel %vm427, %v365, 0
    %v435 = vsel %vm427, %v366, 0
    %v438 = vsel %vm427, %v367, 0
    %v441 = vsel %vm427, %v368, 0
    %443 = vmatpush.msra.mxu0 0.0
    %444 = vmatpush.msra.mxu0 0.0
    %445 = vmatpush.msra.mxu0 0.0
    %446 = vmatpush.msra.mxu0 0.0
    %447 = vmatpush.msra.mxu0 0.0
    %448 = vmatpush.msra.mxu0 0.0
    %449 = vmatpush.msra.mxu0 0.0
    %450 = vmatpush.msra.mxu0 0.0
    %451 = vmatpush.msra.mxu0 0.0
    %452 = vmatpush.msra.mxu0 0.0
    %453 = vmatpush.msra.mxu0 0.0
    %454 = vmatpush.msra.mxu0 0.0
    %455 = vmatpush.msra.mxu0 %v422
    %456 = vmatpush.msra.mxu0 %v421
    %457 = vmatpush.msra.mxu0 %v420
    %458 = vmatpush.msra.mxu0 %v419
    %459 = vmatmul.f32.gmra.mxu0 %v429
    %v460 = vpop.f32.mrf.mxu0
    %v461 = vadd.f32 %v425, %v460
    %462 = vmatmul.f32.gmra.mxu0 %v432
    %v463 = vpop.f32.mrf.mxu0
    %v464 = vadd.f32 %v425, %v463
    %465 = vmatmul.f32.gmra.mxu0 %v435
    %v466 = vpop.f32.mrf.mxu0
    %v467 = vadd.f32 %v425, %v466
    %468 = vmatmul.f32.gmra.mxu0 %v438
    %v469 = vpop.f32.mrf.mxu0
    %v470 = vadd.f32 %v425, %v469
    %471 = vmatmul.f32.gmra.mxu0 %v441
    %v472 = vpop.f32.mrf.mxu0
    %v473 = vadd.f32 %v425, %v472
    %474 = vdwg.mxu0
    %v475 = vld [vmem:[%s31] sm:$0xff]
    %v476 = vld [vmem:[%s31 + $0x8] sm:$0xff]
    %v477 = vld [vmem:[%s31 + $0x10] sm:$0xff]
    %v478 = vld [vmem:[%s31 + $0x18] sm:$0xff]
    %v479 = vld [vmem:[%s33] sm:$0x1]
    %v481 = vperm.slane %v479, 0
    %483 = vmatpush.msra.mxu0 0.0
    %484 = vmatpush.msra.mxu0 0.0
    %485 = vmatpush.msra.mxu0 0.0
    %486 = vmatpush.msra.mxu0 0.0
    %487 = vmatpush.msra.mxu0 0.0
    %488 = vmatpush.msra.mxu0 0.0
    %489 = vmatpush.msra.mxu0 0.0
    %490 = vmatpush.msra.mxu0 0.0
    %491 = vmatpush.msra.mxu0 0.0
    %492 = vmatpush.msra.mxu0 0.0
    %493 = vmatpush.msra.mxu0 0.0
    %494 = vmatpush.msra.mxu0 0.0
    %495 = vmatpush.msra.mxu0 %v478
    %496 = vmatpush.msra.mxu0 %v477
    %497 = vmatpush.msra.mxu0 %v476
    %498 = vmatpush.msra.mxu0 %v475
    %499 = vmatmul.f32.gmra.mxu0 %v429
    %v500 = vpop.f32.mrf.mxu0
    %v501 = vadd.f32 %v481, %v500
    %502 = vmatmul.f32.gmra.mxu0 %v432
    %v503 = vpop.f32.mrf.mxu0
    %v504 = vadd.f32 %v481, %v503
    %505 = vmatmul.f32.gmra.mxu0 %v435
    %v506 = vpop.f32.mrf.mxu0
    %v507 = vadd.f32 %v481, %v506
    %508 = vmatmul.f32.gmra.mxu0 %v438
    %v509 = vpop.f32.mrf.mxu0
    %v510 = vadd.f32 %v481, %v509
    %511 = vmatmul.f32.gmra.mxu0 %v441
    %v512 = vpop.f32.mrf.mxu0
    %v513 = vadd.f32 %v481, %v512
    %514 = vdwg.mxu0
    %v515 = vld [vmem:[%s35] sm:$0xff]
    %v516 = vld [vmem:[%s35 + $0x8] sm:$0xff]
    %v517 = vld [vmem:[%s35 + $0x10] sm:$0xff]
    %v518 = vld [vmem:[%s35 + $0x18] sm:$0xff]
    %v519 = vld [vmem:[%s37] sm:$0x1]
    %v521 = vperm.slane %v519, 0
    %523 = vmatpush.msra.mxu0 0.0
    %524 = vmatpush.msra.mxu0 0.0
    %525 = vmatpush.msra.mxu0 0.0
    %526 = vmatpush.msra.mxu0 0.0
    %527 = vmatpush.msra.mxu0 0.0
    %528 = vmatpush.msra.mxu0 0.0
    %529 = vmatpush.msra.mxu0 0.0
    %530 = vmatpush.msra.mxu0 0.0
    %531 = vmatpush.msra.mxu0 0.0
    %532 = vmatpush.msra.mxu0 0.0
    %533 = vmatpush.msra.mxu0 0.0
    %534 = vmatpush.msra.mxu0 0.0
    %535 = vmatpush.msra.mxu0 %v518
    %536 = vmatpush.msra.mxu0 %v517
    %537 = vmatpush.msra.mxu0 %v516
    %538 = vmatpush.msra.mxu0 %v515
    %539 = vmatmul.f32.gmra.mxu0 %v429
    %v540 = vpop.f32.mrf.mxu0
    %v541 = vadd.f32 %v521, %v540
    %542 = vmatmul.f32.gmra.mxu0 %v432
    %v543 = vpop.f32.mrf.mxu0
    %v544 = vadd.f32 %v521, %v543
    %545 = vmatmul.f32.gmra.mxu0 %v435
    %v546 = vpop.f32.mrf.mxu0
    %v547 = vadd.f32 %v521, %v546
    %548 = vmatmul.f32.gmra.mxu0 %v438
    %v549 = vpop.f32.mrf.mxu0
    %v550 = vadd.f32 %v521, %v549
    %551 = vmatmul.f32.gmra.mxu0 %v441
    %v552 = vpop.f32.mrf.mxu0
    %v553 = vadd.f32 %v521, %v552
    %554 = vdwg.mxu0
    %v556 = vsel %vm427, %v461, 0
    %v559 = vsel %vm427, %v464, 0
    %v562 = vsel %vm427, %v467, 0
    %v565 = vsel %vm427, %v470, 0
    %v568 = vsel %vm427, %v473, 0
    %v571 = vsel %vm427, %v501, 0
    %v574 = vsel %vm427, %v504, 0
    %v577 = vsel %vm427, %v507, 0
    %v580 = vsel %vm427, %v510, 0
    %v583 = vsel %vm427, %v513, 0
    %585 = vmatpush.xpose.msra.mxu0 0.0
    %586 = vmatpush.xpose.msra.mxu0 0.0
    %587 = vmatpush.xpose.msra.mxu0 0.0
    %588 = vmatpush.xpose.msra.mxu0 0.0
    %589 = vmatpush.xpose.msra.mxu0 0.0
    %590 = vmatpush.xpose.msra.mxu0 0.0
    %591 = vmatpush.xpose.msra.mxu0 0.0
    %592 = vmatpush.xpose.msra.mxu0 0.0
    %593 = vmatpush.xpose.msra.mxu0 0.0
    %594 = vmatpush.xpose.msra.mxu0 0.0
    %595 = vmatpush.xpose.msra.mxu0 0.0
    %596 = vmatpush.xpose.msra.mxu0 %v583
    %597 = vmatpush.xpose.msra.mxu0 %v580
    %598 = vmatpush.xpose.msra.mxu0 %v577
    %599 = vmatpush.xpose.msra.mxu0 %v574
    %600 = vmatpush.xpose.msra.mxu0 %v571
    %601 = vmatmul.f32.gmra.mxu0 %v556
    %v602 = vpop.f32.mrf.mxu0
    %v603 = vadd.f32 0.0, %v602
    %604 = vmatmul.f32.gmra.mxu0 %v559
    %v605 = vpop.f32.mrf.mxu0
    %v606 = vadd.f32 0.0, %v605
    %607 = vmatmul.f32.gmra.mxu0 %v562
    %v608 = vpop.f32.mrf.mxu0
    %v609 = vadd.f32 0.0, %v608
    %610 = vmatmul.f32.gmra.mxu0 %v565
    %v611 = vpop.f32.mrf.mxu0
    %v612 = vadd.f32 0.0, %v611
    %613 = vmatmul.f32.gmra.mxu0 %v568
    %v614 = vpop.f32.mrf.mxu0
    %v615 = vadd.f32 0.0, %v614
    %616 = vdwg.mxu0
    %v617 = vmul.f32 %v603, 0.17677669
    %v618 = vmul.f32 %v606, 0.17677669
    %v619 = vmul.f32 %v609, 0.17677669
    %v620 = vmul.f32 %v612, 0.17677669
    %v621 = vmul.f32 %v615, 0.17677669
    %v622 = vld [vmem:[%s13] sm:$0xff]
    %v623 = vld [vmem:[%s13 + $0x8] sm:$0xff]
    %v624 = vld [vmem:[%s13 + $0x10] sm:$0xff]
    %v625 = vld [vmem:[%s13 + $0x18] sm:$0xff]
    %v626 = vld [vmem:[%s13 + $0x20] sm:$0xf]
    %v627 = vadd.f32 %v617, %v622
    %v628 = vadd.f32 %v618, %v623
    %v629 = vadd.f32 %v619, %v624
    %v630 = vadd.f32 %v620, %v625
    %v631 = vadd.f32 %v621, %v626
    %vm632 = vcmask 293888
    %v633 = vsel %vm632, %v627, -inf
    %634 = vmax.xlane.f32.xlu0 %v633
    %v635 = vpop.xlane.xlu0 %634
    %v636 = vsel %vm632, %v628, -inf
    %637 = vmax.xlane.f32.xlu0 %v636
    %v638 = vpop.xlane.xlu0 %637
    %v639 = vsel %vm632, %v629, -inf
    %640 = vmax.xlane.f32.xlu0 %v639
    %v641 = vpop.xlane.xlu0 %640
    %v642 = vsel %vm632, %v630, -inf
    %643 = vmax.xlane.f32.xlu0 %v642
    %v644 = vpop.xlane.xlu0 %643
    %vm645 = vcmask 289792
    %v646 = vsel %vm645, %v631, -inf
    %647 = vmax.xlane.f32.xlu0 %v646
    %v648 = vpop.xlane.xlu0 %647
    %v649 = vsub.f32 %v627, %v635
    %v650 = vsub.f32 %v628, %v638
    %v651 = vsub.f32 %v629, %v641
    %v652 = vsub.f32 %v630, %v644
    %v653 = vsub.f32 %v631, %v648
    %v654 = vmul.f32 %v649, 1.442695
    %v655 = vpow.pop %v654
    %v656 = vmul.f32 %v650, 1.442695
    %v657 = vpow.pop %v656
    %v658 = vmul.f32 %v651, 1.442695
    %v659 = vpow.pop %v658
    %v660 = vmul.f32 %v652, 1.442695
    %v661 = vpow.pop %v660
    %v662 = vmul.f32 %v653, 1.442695
    %v663 = vpow.pop %v662
    %v664 = vsel %vm632, %v655, 0.0
    %665 = vadd.xlane.f32.xlu0 %v664
    %v666 = vpop.xlane.xlu0 %665
    %v667 = vsel %vm632, %v657, 0.0
    %668 = vadd.xlane.f32.xlu0 %v667
    %v669 = vpop.xlane.xlu0 %668
    %v670 = vsel %vm632, %v659, 0.0
    %671 = vadd.xlane.f32.xlu0 %v670
    %v672 = vpop.xlane.xlu0 %671
    %v673 = vsel %vm632, %v661, 0.0
    %674 = vadd.xlane.f32.xlu0 %v673
    %v675 = vpop.xlane.xlu0 %674
    %v676 = vsel %vm645, %v663, 0.0
    %677 = vadd.xlane.f32.xlu0 %v676
    %v678 = vpop.xlane.xlu0 %677
    %v679 = vrcp.pop %v666
    %v680 = vrcp.pop %v669
    %v681 = vrcp.pop %v672
    %v682 = vrcp.pop %v675
    %v683 = vrcp.pop %v678
    %v684 = vmul.f32 %v655, %v679
    %v685 = vmul.f32 %v657, %v680
    %v686 = vmul.f32 %v659, %v681
    %v687 = vmul.f32 %v661, %v682
    %v688 = vmul.f32 %v663, %v683
    %v690 = vsel %vm632, %v684, 0
    %v693 = vsel %vm632, %v685, 0
    %v696 = vsel %vm632, %v686, 0
    %v699 = vsel %vm632, %v687, 0
    %v702 = vsel %vm632, %v688, 0
    %vm704 = vcmask 1043456
    %v706 = vsel %vm704, %v553, 0
    %708 = vmatpush.msra.mxu0 0.0
    %709 = vmatpush.msra.mxu0 0.0
    %710 = vmatpush.msra.mxu0 0.0
    %711 = vmatpush.msra.mxu0 0.0
    %712 = vmatpush.msra.mxu0 0.0
    %713 = vmatpush.msra.mxu0 0.0
    %714 = vmatpush.msra.mxu0 0.0
    %715 = vmatpush.msra.mxu0 0.0
    %716 = vmatpush.msra.mxu0 0.0
    %717 = vmatpush.msra.mxu0 0.0
    %718 = vmatpush.msra.mxu0 0.0
    %719 = vmatpush.msra.mxu0 %v706
    %720 = vmatpush.msra.mxu0 %v550
    %721 = vmatpush.msra.mxu0 %v547
    %722 = vmatpush.msra.mxu0 %v544
    %723 = vmatpush.msra.mxu0 %v541
    %724 = vmatmul.f32.gmra.mxu0 %v690
    %v725 = vpop.f32.mrf.mxu0
    %v726 = vadd.f32 0.0, %v725
    %727 = vmatmul.f32.gmra.mxu0 %v693
    %v728 = vpop.f32.mrf.mxu0
    %v729 = vadd.f32 0.0, %v728
    %730 = vmatmul.f32.gmra.mxu0 %v696
    %v731 = vpop.f32.mrf.mxu0
    %v732 = vadd.f32 0.0, %v731
    %733 = vmatmul.f32.gmra.mxu0 %v699
    %v734 = vpop.f32.mrf.mxu0
    %v735 = vadd.f32 0.0, %v734
    %736 = vmatmul.f32.gmra.mxu0 %v702
    %v737 = vpop.f32.mrf.mxu0
    %v738 = vadd.f32 0.0, %v737
    %739 = vdwg.mxu0
    %v740 = vld [vmem:[%s39] sm:$0xff]
    %v741 = vld [vmem:[%s39 + $0x8] sm:$0xff]
    %v742 = vld [vmem:[%s39 + $0x10] sm:$0xff]
    %v743 = vld [vmem:[%s39 + $0x18] sm:$0xff]
    %v744 = vld [vmem:[%s41] sm:$0x1]
    %v746 = vperm.slane %v744, 0
    %v749 = vsel %vm427, %v726, 0
    %v752 = vsel %vm427, %v729, 0
    %v755 = vsel %vm427, %v732, 0
    %v758 = vsel %vm427, %v735, 0
    %v761 = vsel %vm427, %v738, 0
    %763 = vmatpush.msra.mxu0 0.0
    %764 = vmatpush.msra.mxu0 0.0
    %765 = vmatpush.msra.mxu0 0.0
    %766 = vmatpush.msra.mxu0 0.0
    %767 = vmatpush.msra.mxu0 0.0
    %768 = vmatpush.msra.mxu0 0.0
    %769 = vmatpush.msra.mxu0 0.0
    %770 = vmatpush.msra.mxu0 0.0
    %771 = vmatpush.msra.mxu0 0.0
    %772 = vmatpush.msra.mxu0 0.0
    %773 = vmatpush.msra.mxu0 0.0
    %774 = vmatpush.msra.mxu0 0.0
    %775 = vmatpush.msra.mxu0 %v743
    %776 = vmatpush.msra.mxu0 %v742
    %777 = vmatpush.msra.mxu0 %v741
    %778 = vmatpush.msra.mxu0 %v740
    %779 = vmatmul.f32.gmra.mxu0 %v749
    %v780 = vpop.f32.mrf.mxu0
    %v781 = vadd.f32 %v746, %v780
    %782 = vmatmul.f32.gmra.mxu0 %v752
    %v783 = vpop.f32.mrf.mxu0
    %v784 = vadd.f32 %v746, %v783
    %785 = vmatmul.f32.gmra.mxu0 %v755
    %v786 = vpop.f32.mrf.mxu0
    %v787 = vadd.f32 %v746, %v786
    %788 = vmatmul.f32.gmra.mxu0 %v758
    %v789 = vpop.f32.mrf.mxu0
    %v790 = vadd.f32 %v746, %v789
    %791 = vmatmul.f32.gmra.mxu0 %v761
    %v792 = vpop.f32.mrf.mxu0
    %v793 = vadd.f32 %v746, %v792
    %794 = vdwg.mxu0
    %v795 = vadd.f32 %v364, %v781
    %v796 = vadd.f32 %v365, %v784
    %v797 = vadd.f32 %v366, %v787
    %v798 = vadd.f32 %v367, %v790
    %v799 = vadd.f32 %v368, %v793
    %v800 = vld [vmem:[%s43] sm:$0xff]
    %v801 = vld [vmem:[%s43 + $0x8] sm:$0xff]
    %v802 = vld [vmem:[%s43 + $0x10] sm:$0xff]
    %v803 = vld [vmem:[%s43 + $0x18] sm:$0xff]
    %v804 = vld [vmem:[%s45] sm:$0x1]
    %v806 = vperm.slane %v804, 0
    %v809 = vsel %vm427, %v795, 0
    %v812 = vsel %vm427, %v796, 0
    %v815 = vsel %vm427, %v797, 0
    %v818 = vsel %vm427, %v798, 0
    %v821 = vsel %vm427, %v799, 0
    %823 = vmatpush.msra.mxu0 0.0
    %824 = vmatpush.msra.mxu0 0.0
    %825 = vmatpush.msra.mxu0 0.0
    %826 = vmatpush.msra.mxu0 0.0
    %827 = vmatpush.msra.mxu0 0.0
    %828 = vmatpush.msra.mxu0 0.0
    %829 = vmatpush.msra.mxu0 0.0
    %830 = vmatpush.msra.mxu0 0.0
    %831 = vmatpush.msra.mxu0 0.0
    %832 = vmatpush.msra.mxu0 0.0
    %833 = vmatpush.msra.mxu0 0.0
    %834 = vmatpush.msra.mxu0 0.0
    %835 = vmatpush.msra.mxu0 %v803
    %836 = vmatpush.msra.mxu0 %v802
    %837 = vmatpush.msra.mxu0 %v801
    %838 = vmatpush.msra.mxu0 %v800
    %839 = vmatmul.f32.gmra.mxu0 %v809
    %v840 = vpop.f32.mrf.mxu0
    %v841 = vadd.f32 %v806, %v840
    %842 = vmatmul.f32.gmra.mxu0 %v812
    %v843 = vpop.f32.mrf.mxu0
    %v844 = vadd.f32 %v806, %v843
    %845 = vmatmul.f32.gmra.mxu0 %v815
    %v846 = vpop.f32.mrf.mxu0
    %v847 = vadd.f32 %v806, %v846
    %848 = vmatmul.f32.gmra.mxu0 %v818
    %v849 = vpop.f32.mrf.mxu0
    %v850 = vadd.f32 %v806, %v849
    %851 = vmatmul.f32.gmra.mxu0 %v821
    %v852 = vpop.f32.mrf.mxu0
    %v853 = vadd.f32 %v806, %v852
    %854 = vdwg.mxu0
    %v855 = vmax.f32 %v841, 0.0
    %v856 = vmax.f32 %v844, 0.0
    %v857 = vmax.f32 %v847, 0.0
    %v858 = vmax.f32 %v850, 0.0
    %v859 = vmax.f32 %v853, 0.0
    %v860 = vld [vmem:[%s47] sm:$0xff]
    %v861 = vld [vmem:[%s47 + $0x8] sm:$0xff]
    %v862 = vld [vmem:[%s47 + $0x10] sm:$0xff]
    %v863 = vld [vmem:[%s47 + $0x18] sm:$0xff]
    %v864 = vld [vmem:[%s47 + $0x20] sm:$0xff]
    %v865 = vld [vmem:[%s47 + $0x28] sm:$0xff]
    %v866 = vld [vmem:[%s47 + $0x30] sm:$0xff]
    %v867 = vld [vmem:[%s47 + $0x38] sm:$0xff]
    %v868 = vld [vmem:[%s49] sm:$0x1]
    %v870 = vperm.slane %v868, 0
    %vm872 = vcmask 523264
    %v874 = vsel %vm872, %v855, 0
    %v877 = vsel %vm872, %v856, 0
    %v880 = vsel %vm872, %v857, 0
    %v883 = vsel %vm872, %v858, 0
    %v886 = vsel %vm872, %v859, 0
    %888 = vmatpush.msra.mxu0 0.0
    %889 = vmatpush.msra.mxu0 0.0
    %890 = vmatpush.msra.mxu0 0.0
    %891 = vmatpush.msra.mxu0 0.0
    %892 = vmatpush.msra.mxu0 0.0
    %893 = vmatpush.msra.mxu0 0.0
    %894 = vmatpush.msra.mxu0 0.0
    %895 = vmatpush.msra.mxu0 0.0
    %896 = vmatpush.msra.mxu0 %v867
    %897 = vmatpush.msra.mxu0 %v866
    %898 = vmatpush.msra.mxu0 %v865
    %899 = vmatpush.msra.mxu0 %v864
    %900 = vmatpush.msra.mxu0 %v863
    %901 = vmatpush.msra.mxu0 %v862
    %902 = vmatpush.msra.mxu0 %v861
    %903 = vmatpush.msra.mxu0 %v860
    %904 = vmatmul.f32.gmra.mxu0 %v874
    %v905 = vpop.f32.mrf.mxu0
    %v906 = vadd.f32 %v870, %v905
    %907 = vmatmul.f32.gmra.mxu0 %v877
    %v908 = vpop.f32.mrf.mxu0
    %v909 = vadd.f32 %v870, %v908
    %910 = vmatmul.f32.gmra.mxu0 %v880
    %v911 = vpop.f32.mrf.mxu0
    %v912 = vadd.f32 %v870, %v911
    %913 = vmatmul.f32.gmra.mxu0 %v883
    %v914 = vpop.f32.mrf.mxu0
    %v915 = vadd.f32 %v870, %v914
    %916 = vmatmul.f32.gmra.mxu0 %v886
    %v917 = vpop.f32.mrf.mxu0
    %v918 = vadd.f32 %v870, %v917
    %919 = vdwg.mxu0
    %v920 = vadd.f32 %v795, %v906
    %v921 = vadd.f32 %v796, %v909
    %v922 = vadd.f32 %v797, %v912
    %v923 = vadd.f32 %v798, %v915
    %v924 = vadd.f32 %v799, %v918
    %v925 = vld [vmem:[%s71] sm:$0xff]
    %v926 = vld [vmem:[%s71 + $0x8] sm:$0xff]
    %v927 = vld [vmem:[%s71 + $0x10] sm:$0xff]
    %v928 = vld [vmem:[%s71 + $0x18] sm:$0xff]
    %v929 = vld [vmem:[%s73] sm:$0x1]
    %v931 = vperm.slane %v929, 0
    %v934 = vsel %vm427, %v920, 0
    %v937 = vsel %vm427, %v921, 0
    %v940 = vsel %vm427, %v922, 0
    %v943 = vsel %vm427, %v923, 0
    %v946 = vsel %vm427, %v924, 0
    %948 = vmatpush.msra.mxu0 0.0
    %949 = vmatpush.msra.mxu0 0.0
    %950 = vmatpush.msra.mxu0 0.0
    %951 = vmatpush.msra.mxu0 0.0
    %952 = vmatpush.msra.mxu0 0.0
    %953 = vmatpush.msra.mxu0 0.0
    %954 = vmatpush.msra.mxu0 0.0
    %955 = vmatpush.msra.mxu0 0.0
    %956 = vmatpush.msra.mxu0 0.0
    %957 = vmatpush.msra.mxu0 0.0
    %958 = vmatpush.msra.mxu0 0.0
    %959 = vmatpush.msra.mxu0 0.0
    %960 = vmatpush.msra.mxu0 %v928
    %961 = vmatpush.msra.mxu0 %v927
    %962 = vmatpush.msra.mxu0 %v926
    %963 = vmatpush.msra.mxu0 %v925
    %964 = vmatmul.f32.gmra.mxu0 %v934
    %v965 = vpop.f32.mrf.mxu0
    %v966 = vadd.f32 %v931, %v965
    %967 = vmatmul.f32.gmra.mxu0 %v937
    %v968 = vpop.f32.mrf.mxu0
    %v969 = vadd.f32 %v931, %v968
    %970 = vmatmul.f32.gmra.mxu0 %v940
    %v971 = vpop.f32.mrf.mxu0
    %v972 = vadd.f32 %v931, %v971
    %973 = vmatmul.f32.gmra.mxu0 %v943
    %v974 = vpop.f32.mrf.mxu0
    %v975 = vadd.f32 %v931, %v974
    %976 = vmatmul.f32.gmra.mxu0 %v946
    %v977 = vpop.f32.mrf.mxu0
    %v978 = vadd.f32 %v931, %v977
    %979 = vdwg.mxu0
    %v980 = vld [vmem:[%s75] sm:$0xff]
    %v981 = vld [vmem:[%s75 + $0x8] sm:$0xff]
    %v982 = vld [vmem:[%s75 + $0x10] sm:$0xff]
    %v983 = vld [vmem:[%s75 + $0x18] sm:$0xff]
    %v984 = vld [vmem:[%s77] sm:$0x1]
    %v986 = vperm.slane %v984, 0
    %988 = vmatpush.msra.mxu0 0.0
    %989 = vmatpush.msra.mxu0 0.0
    %990 = vmatpush.msra.mxu0 0.0
    %991 = vmatpush.msra.mxu0 0.0
    %992 = vmatpush.msra.mxu0 0.0
    %993 = vmatpush.msra.mxu0 0.0
    %994 = vmatpush.msra.mxu0 0.0
    %995 = vmatpush.msra.mxu0 0.0
    %996 = vmatpush.msra.mxu0 0.0
    %997 = vmatpush.msra.mxu0 0.0
    %998 = vmatpush.msra.mxu0 0.0
    %999 = vmatpush.msra.mxu0 0.0
    %1000 = vmatpush.msra.mxu0 %v983
    %1001 = vmatpush.msra.mxu0 %v982
    %1002 = vmatpush.msra.mxu0 %v981
    %1003 = vmatpush.msra.mxu0 %v980
    %1004 = vmatmul.f32.gmra.mxu0 %v934
    %v1005 = vpop.f32.mrf.mxu0
    %v1006 = vadd.f32 %v986, %v1005
    %1007 = vmatmul.f32.gmra.mxu0 %v937
    %v1008 = vpop.f32.mrf.mxu0
    %v1009 = vadd.f32 %v986, %v1008
    %1010 = vmatmul.f32.gmra.mxu0 %v940
    %v1011 = vpop.f32.mrf.mxu0
    %v1012 = vadd.f32 %v986, %v1011
    %1013 = vmatmul.f32.gmra.mxu0 %v943
    %v1014 = vpop.f32.mrf.mxu0
    %v1015 = vadd.f32 %v986, %v1014
    %1016 = vmatmul.f32.gmra.mxu0 %v946
    %v1017 = vpop.f32.mrf.mxu0
    %v1018 = vadd.f32 %v986, %v1017
    %1019 = vdwg.mxu0
    %v1020 = vld [vmem:[%s55] sm:$0xff]
    %v1021 = vld [vmem:[%s55 + $0x8] sm:$0xff]
    %v1022 = vld [vmem:[%s55 + $0x10] sm:$0xff]
    %v1023 = vld [vmem:[%s55 + $0x18] sm:$0xff]
    %v1024 = vld [vmem:[%s57] sm:$0x1]
    %v1026 = vperm.slane %v1024, 0
    %v1029 = vsel %vm427, %v418, 0
    %1031 = vmatpush.msra.mxu0 0.0
    %1032 = vmatpush.msra.mxu0 0.0
    %1033 = vmatpush.msra.mxu0 0.0
    %1034 = vmatpush.msra.mxu0 0.0
    %1035 = vmatpush.msra.mxu0 0.0
    %1036 = vmatpush.msra.mxu0 0.0
    %1037 = vmatpush.msra.mxu0 0.0
    %1038 = vmatpush.msra.mxu0 0.0
    %1039 = vmatpush.msra.mxu0 0.0
    %1040 = vmatpush.msra.mxu0 0.0
    %1041 = vmatpush.msra.mxu0 0.0
    %1042 = vmatpush.msra.mxu0 0.0
    %1043 = vmatpush.msra.mxu0 %v1023
    %1044 = vmatpush.msra.mxu0 %v1022
    %1045 = vmatpush.msra.mxu0 %v1021
    %1046 = vmatpush.msra.mxu0 %v1020
    %1047 = vmatmul.f32.gmra.mxu0 %v1029
    %v1048 = vpop.f32.mrf.mxu0
    %v1049 = vadd.f32 %v1026, %v1048
    %1050 = vdwg.mxu0
    %v1051 = vld [vmem:[%s59] sm:$0xff]
    %v1052 = vld [vmem:[%s59 + $0x8] sm:$0xff]
    %v1053 = vld [vmem:[%s59 + $0x10] sm:$0xff]
    %v1054 = vld [vmem:[%s59 + $0x18] sm:$0xff]
    %v1055 = vld [vmem:[%s61] sm:$0x1]
    %v1057 = vperm.slane %v1055, 0
    %1059 = vmatpush.msra.mxu0 0.0
    %1060 = vmatpush.msra.mxu0 0.0
    %1061 = vmatpush.msra.mxu0 0.0
    %1062 = vmatpush.msra.mxu0 0.0
    %1063 = vmatpush.msra.mxu0 0.0
    %1064 = vmatpush.msra.mxu0 0.0
    %1065 = vmatpush.msra.mxu0 0.0
    %1066 = vmatpush.msra.mxu0 0.0
    %1067 = vmatpush.msra.mxu0 0.0
    %1068 = vmatpush.msra.mxu0 0.0
    %1069 = vmatpush.msra.mxu0 0.0
    %1070 = vmatpush.msra.mxu0 0.0
    %1071 = vmatpush.msra.mxu0 %v1054
    %1072 = vmatpush.msra.mxu0 %v1053
    %1073 = vmatpush.msra.mxu0 %v1052
    %1074 = vmatpush.msra.mxu0 %v1051
    %1075 = vmatmul.f32.gmra.mxu0 %v1029
    %v1076 = vpop.f32.mrf.mxu0
    %v1077 = vadd.f32 %v1057, %v1076
    %1078 = vdwg.mxu0
    %v1079 = vld [vmem:[%s51] sm:$0xff]
    %v1080 = vld [vmem:[%s51 + $0x8] sm:$0xff]
    %v1081 = vld [vmem:[%s51 + $0x10] sm:$0xff]
    %v1082 = vld [vmem:[%s51 + $0x18] sm:$0xff]
    %v1083 = vld [vmem:[%s53] sm:$0x1]
    %v1085 = vperm.slane %v1083, 0
    %1087 = vmatpush.msra.mxu0 0.0
    %1088 = vmatpush.msra.mxu0 0.0
    %1089 = vmatpush.msra.mxu0 0.0
    %1090 = vmatpush.msra.mxu0 0.0
    %1091 = vmatpush.msra.mxu0 0.0
    %1092 = vmatpush.msra.mxu0 0.0
    %1093 = vmatpush.msra.mxu0 0.0
    %1094 = vmatpush.msra.mxu0 0.0
    %1095 = vmatpush.msra.mxu0 0.0
    %1096 = vmatpush.msra.mxu0 0.0
    %1097 = vmatpush.msra.mxu0 0.0
    %1098 = vmatpush.msra.mxu0 0.0
    %1099 = vmatpush.msra.mxu0 %v1082
    %1100 = vmatpush.msra.mxu0 %v1081
    %1101 = vmatpush.msra.mxu0 %v1080
    %1102 = vmatpush.msra.mxu0 %v1079
    %1103 = vmatmul.f32.gmra.mxu0 %v1029
    %v1104 = vpop.f32.mrf.mxu0
    %v1105 = vadd.f32 %v1085, %v1104
    %1106 = vdwg.mxu0
    %v1107 = vmul.f32 %v1105, %v1049
    %vm1108 = vcmask 259072
    %v1109 = vsel %vm1108, %v1107, 0.0
    %1110 = vadd.xlane.f32.xlu0 %v1109
    %v1111 = vpop.xlane.xlu0 %1110
    %v1112 = vmul.f32 %v1111, 0.17677669
    %v1113 = vsub.f32 %v1112, %v1112
    %v1114 = vmul.f32 %v1113, 1.442695
    %v1115 = vpow.pop %v1114
    %v1116 = vmul.f32 %v1115, %v1077
    %v1117 = vrcp.pop %v1115
    %v1118 = vmul.f32 %v1116, %v1117
    %v1119 = vld [vmem:[%s63] sm:$0xff]
    %v1120 = vld [vmem:[%s63 + $0x8] sm:$0xff]
    %v1121 = vld [vmem:[%s63 + $0x10] sm:$0xff]
    %v1122 = vld [vmem:[%s63 + $0x18] sm:$0xff]
    %v1123 = vld [vmem:[%s65] sm:$0x1]
    %v1125 = vperm.slane %v1123, 0
    %v1128 = vsel %vm427, %v1118, 0
    %1130 = vmatpush.msra.mxu0 0.0
    %1131 = vmatpush.msra.mxu0 0.0
    %1132 = vmatpush.msra.mxu0 0.0
    %1133 = vmatpush.msra.mxu0 0.0
    %1134 = vmatpush.msra.mxu0 0.0
    %1135 = vmatpush.msra.mxu0 0.0
    %1136 = vmatpush.msra.mxu0 0.0
    %1137 = vmatpush.msra.mxu0 0.0
    %1138 = vmatpush.msra.mxu0 0.0
    %1139 = vmatpush.msra.mxu0 0.0
    %1140 = vmatpush.msra.mxu0 0.0
    %1141 = vmatpush.msra.mxu0 0.0
    %1142 = vmatpush.msra.mxu0 %v1122
    %1143 = vmatpush.msra.mxu0 %v1121
    %1144 = vmatpush.msra.mxu0 %v1120
    %1145 = vmatpush.msra.mxu0 %v1119
    %1146 = vmatmul.f32.gmra.mxu0 %v1128
    %v1147 = vpop.f32.mrf.mxu0
    %v1148 = vadd.f32 %v1125, %v1147
    %1149 = vdwg.mxu0
    %v1150 = vadd.f32 %v1148, %v418
    %v1151 = vld [vmem:[%s67] sm:$0xff]
    %v1152 = vld [vmem:[%s67 + $0x8] sm:$0xff]
    %v1153 = vld [vmem:[%s67 + $0x10] sm:$0xff]
    %v1154 = vld [vmem:[%s67 + $0x18] sm:$0xff]
    %v1155 = vld [vmem:[%s69] sm:$0x1]
    %v1157 = vperm.slane %v1155, 0
    %v1160 = vsel %vm427, %v1150, 0
    %1162 = vmatpush.msra.mxu0 0.0
    %1163 = vmatpush.msra.mxu0 0.0
    %1164 = vmatpush.msra.mxu0 0.0
    %1165 = vmatpush.msra.mxu0 0.0
    %1166 = vmatpush.msra.mxu0 0.0
    %1167 = vmatpush.msra.mxu0 0.0
    %1168 = vmatpush.msra.mxu0 0.0
    %1169 = vmatpush.msra.mxu0 0.0
    %1170 = vmatpush.msra.mxu0 0.0
    %1171 = vmatpush.msra.mxu0 0.0
    %1172 = vmatpush.msra.mxu0 0.0
    %1173 = vmatpush.msra.mxu0 0.0
    %1174 = vmatpush.msra.mxu0 %v1154
    %1175 = vmatpush.msra.mxu0 %v1153
    %1176 = vmatpush.msra.mxu0 %v1152
    %1177 = vmatpush.msra.mxu0 %v1151
    %1178 = vmatmul.f32.gmra.mxu0 %v1160
    %v1179 = vpop.f32.mrf.mxu0
    %v1180 = vadd.f32 %v1157, %v1179
    %1181 = vdwg.mxu0
    %v1183 = vsel %vm427, %v1180, 0
    %v1186 = vsel %vm427, %v966, 0
    %v1189 = vsel %vm427, %v969, 0
    %v1192 = vsel %vm427, %v972, 0
    %v1195 = vsel %vm427, %v975, 0
    %v1198 = vsel %vm427, %v978, 0
    %1200 = vmatpush.xpose.msra.mxu0 0.0
    %1201 = vmatpush.xpose.msra.mxu0 0.0
    %1202 = vmatpush.xpose.msra.mxu0 0.0
    %1203 = vmatpush.xpose.msra.mxu0 0.0
    %1204 = vmatpush.xpose.msra.mxu0 0.0
    %1205 = vmatpush.xpose.msra.mxu0 0.0
    %1206 = vmatpush.xpose.msra.mxu0 0.0
    %1207 = vmatpush.xpose.msra.mxu0 0.0
    %1208 = vmatpush.xpose.msra.mxu0 0.0
    %1209 = vmatpush.xpose.msra.mxu0 0.0
    %1210 = vmatpush.xpose.msra.mxu0 0.0
    %1211 = vmatpush.xpose.msra.mxu0 %v1198
    %1212 = vmatpush.xpose.msra.mxu0 %v1195
    %1213 = vmatpush.xpose.msra.mxu0 %v1192
    %1214 = vmatpush.xpose.msra.mxu0 %v1189
    %1215 = vmatpush.xpose.msra.mxu0 %v1186
    %1216 = vmatmul.f32.gmra.mxu0 %v1183
    %v1217 = vpop.f32.mrf.mxu0
    %v1218 = vadd.f32 0.0, %v1217
    %1219 = vdwg.mxu0
    %v1220 = vmul.f32 %v1218, 0.17677669
    %v1221 = vld [vmem:[%s15] sm:$0x3f]
    %v1222 = vadd.f32 %v1220, %v1221
    %vm1223 = vcmask 291840
    %v1224 = vsel %vm1223, %v1222, -inf
    %1225 = vmax.xlane.f32.xlu0 %v1224
    %v1226 = vpop.xlane.xlu0 %1225
    %v1227 = vsub.f32 %v1222, %v1226
    %v1228 = vmul.f32 %v1227, 1.442695
    %v1229 = vpow.pop %v1228
    %v1230 = vsel %vm1223, %v1229, 0.0
    %1231 = vadd.xlane.f32.xlu0 %v1230
    %v1232 = vpop.xlane.xlu0 %1231
    %v1233 = vrcp.pop %v1232
    %v1234 = vmul.f32 %v1229, %v1233
    %v1236 = vsel %vm632, %v1234, 0
    %v1239 = vsel %vm704, %v1018, 0
    %1241 = vmatpush.msra.mxu0 0.0
    %1242 = vmatpush.msra.mxu0 0.0
    %1243 = vmatpush.msra.mxu0 0.0
    %1244 = vmatpush.msra.mxu0 0.0
    %1245 = vmatpush.msra.mxu0 0.0
    %1246 = vmatpush.msra.mxu0 0.0
    %1247 = vmatpush.msra.mxu0 0.0
    %1248 = vmatpush.msra.mxu0 0.0
    %1249 = vmatpush.msra.mxu0 0.0
    %1250 = vmatpush.msra.mxu0 0.0
    %1251 = vmatpush.msra.mxu0 0.0
    %1252 = vmatpush.msra.mxu0 %v1239
    %1253 = vmatpush.msra.mxu0 %v1015
    %1254 = vmatpush.msra.mxu0 %v1012
    %1255 = vmatpush.msra.mxu0 %v1009
    %1256 = vmatpush.msra.mxu0 %v1006
    %1257 = vmatmul.f32.gmra.mxu0 %v1236
    %v1258 = vpop.f32.mrf.mxu0
    %v1259 = vadd.f32 0.0, %v1258
    %1260 = vdwg.mxu0
    %v1261 = vld [vmem:[%s79] sm:$0xff]
    %v1262 = vld [vmem:[%s79 + $0x8] sm:$0xff]
    %v1263 = vld [vmem:[%s79 + $0x10] sm:$0xff]
    %v1264 = vld [vmem:[%s79 + $0x18] sm:$0xff]
    %v1265 = vld [vmem:[%s81] sm:$0x1]
    %v1267 = vperm.slane %v1265, 0
    %v1270 = vsel %vm427, %v1259, 0
    %1272 = vmatpush.msra.mxu0 0.0
    %1273 = vmatpush.msra.mxu0 0.0
    %1274 = vmatpush.msra.mxu0 0.0
    %1275 = vmatpush.msra.mxu0 0.0
    %1276 = vmatpush.msra.mxu0 0.0
    %1277 = vmatpush.msra.mxu0 0.0
    %1278 = vmatpush.msra.mxu0 0.0
    %1279 = vmatpush.msra.mxu0 0.0
    %1280 = vmatpush.msra.mxu0 0.0
    %1281 = vmatpush.msra.mxu0 0.0
    %1282 = vmatpush.msra.mxu0 0.0
    %1283 = vmatpush.msra.mxu0 0.0
    %1284 = vmatpush.msra.mxu0 %v1264
    %1285 = vmatpush.msra.mxu0 %v1263
    %1286 = vmatpush.msra.mxu0 %v1262
    %1287 = vmatpush.msra.mxu0 %v1261
    %1288 = vmatmul.f32.gmra.mxu0 %v1270
    %v1289 = vpop.f32.mrf.mxu0
    %v1290 = vadd.f32 %v1267, %v1289
    %1291 = vdwg.mxu0
    %v1292 = vadd.f32 %v1150, %v1290
    %v1293 = vld [vmem:[%s83] sm:$0xff]
    %v1294 = vld [vmem:[%s83 + $0x8] sm:$0xff]
    %v1295 = vld [vmem:[%s83 + $0x10] sm:$0xff]
    %v1296 = vld [vmem:[%s83 + $0x18] sm:$0xff]
    %v1297 = vld [vmem:[%s85] sm:$0x1]
    %v1299 = vperm.slane %v1297, 0
    %v1302 = vsel %vm427, %v1292, 0
    %1304 = vmatpush.msra.mxu0 0.0
    %1305 = vmatpush.msra.mxu0 0.0
    %1306 = vmatpush.msra.mxu0 0.0
    %1307 = vmatpush.msra.mxu0 0.0
    %1308 = vmatpush.msra.mxu0 0.0
    %1309 = vmatpush.msra.mxu0 0.0
    %1310 = vmatpush.msra.mxu0 0.0
    %1311 = vmatpush.msra.mxu0 0.0
    %1312 = vmatpush.msra.mxu0 0.0
    %1313 = vmatpush.msra.mxu0 0.0
    %1314 = vmatpush.msra.mxu0 0.0
    %1315 = vmatpush.msra.mxu0 0.0
    %1316 = vmatpush.msra.mxu0 %v1296
    %1317 = vmatpush.msra.mxu0 %v1295
    %1318 = vmatpush.msra.mxu0 %v1294
    %1319 = vmatpush.msra.mxu0 %v1293
    %1320 = vmatmul.f32.gmra.mxu0 %v1302
    %v1321 = vpop.f32.mrf.mxu0
    %v1322 = vadd.f32 %v1299, %v1321
    %1323 = vdwg.mxu0
    %v1324 = vmax.f32 %v1322, 0.0
    %v1325 = vld [vmem:[%s87] sm:$0xff]
    %v1326 = vld [vmem:[%s87 + $0x8] sm:$0xff]
    %v1327 = vld [vmem:[%s87 + $0x10] sm:$0xff]
    %v1328 = vld [vmem:[%s87 + $0x18] sm:$0xff]
    %v1329 = vld [vmem:[%s87 + $0x20] sm:$0xff]
    %v1330 = vld [vmem:[%s87 + $0x28] sm:$0xff]
    %v1331 = vld [vmem:[%s87 + $0x30] sm:$0xff]
    %v1332 = vld [vmem:[%s87 + $0x38] sm:$0xff]
    %v1333 = vld [vmem:[%s89] sm:$0x1]
    %v1335 = vperm.slane %v1333, 0
    %v1338 = vsel %vm872, %v1324, 0
    %1340 = vmatpush.msra.mxu0 0.0
    %1341 = vmatpush.msra.mxu0 0.0
    %1342 = vmatpush.msra.mxu0 0.0
    %1343 = vmatpush.msra.mxu0 0.0
    %1344 = vmatpush.msra.mxu0 0.0
    %1345 = vmatpush.msra.mxu0 0.0
    %1346 = vmatpush.msra.mxu0 0.0
    %1347 = vmatpush.msra.mxu0 0.0
    %1348 = vmatpush.msra.mxu0 %v1332
    %1349 = vmatpush.msra.mxu0 %v1331
    %1350 = vmatpush.msra.mxu0 %v1330
    %1351 = vmatpush.msra.mxu0 %v1329
    %1352 = vmatpush.msra.mxu0 %v1328
    %1353 = vmatpush.msra.mxu0 %v1327
    %1354 = vmatpush.msra.mxu0 %v1326
    %1355 = vmatpush.msra.mxu0 %v1325
    %1356 = vmatmul.f32.gmra.mxu0 %v1338
    %v1357 = vpop.f32.mrf.mxu0
    %v1358 = vadd.f32 %v1335, %v1357
    %1359 = vdwg.mxu0
    %v1360 = vadd.f32 %v1292, %v1358
    %v1361 = vld [vmem:[%s91] sm:$0xff]
    %v1362 = vld [vmem:[%s91 + $0x8] sm:$0xff]
    %v1363 = vld [vmem:[%s91 + $0x10] sm:$0xff]
    %v1364 = vld [vmem:[%s91 + $0x18] sm:$0xff]
    %v1365 = vld [vmem:[#allocation2] sm:$0x1]
    %v1367 = vperm.slane %v1365, 0
    %v1370 = vsel %vm427, %v1360, 0
    %1372 = vmatpush.msra.mxu0 0.0
    %1373 = vmatpush.msra.mxu0 0.0
    %1374 = vmatpush.msra.mxu0 0.0
    %1375 = vmatpush.msra.mxu0 0.0
    %1376 = vmatpush.msra.mxu0 0.0
    %1377 = vmatpush.msra.mxu0 0.0
    %1378 = vmatpush.msra.mxu0 0.0
    %1379 = vmatpush.msra.mxu0 0.0
    %1380 = vmatpush.msra.mxu0 0.0
    %1381 = vmatpush.msra.mxu0 0.0
    %1382 = vmatpush.msra.mxu0 0.0
    %1383 = vmatpush.msra.mxu0 0.0
    %1384 = vmatpush.msra.mxu0 %v1364
    %1385 = vmatpush.msra.mxu0 %v1363
    %1386 = vmatpush.msra.mxu0 %v1362
    %1387 = vmatpush.msra.mxu0 %v1361
    %1388 = vmatmul.f32.gmra.mxu0 %v1370
    %v1389 = vpop.f32.mrf.mxu0
    %v1390 = vadd.f32 %v1367, %v1389
    %1391 = vdwg.mxu0
    %v1392 = vld [vmem:[%s95] sm:$0xff]
    %v1393 = vld [vmem:[%s95 + $0x8] sm:$0xff]
    %v1394 = vld [vmem:[%s95 + $0x10] sm:$0xff]
    %v1395 = vld [vmem:[%s95 + $0x18] sm:$0xff]
    %v1396 = vld [vmem:[#allocation5] sm:$0x1]
    %v1398 = vperm.slane %v1396, 0
    %1400 = vmatpush.msra.mxu0 0.0
    %1401 = vmatpush.msra.mxu0 0.0
    %1402 = vmatpush.msra.mxu0 0.0
    %1403 = vmatpush.msra.mxu0 0.0
    %1404 = vmatpush.msra.mxu0 0.0
    %1405 = vmatpush.msra.mxu0 0.0
    %1406 = vmatpush.msra.mxu0 0.0
    %1407 = vmatpush.msra.mxu0 0.0
    %1408 = vmatpush.msra.mxu0 0.0
    %1409 = vmatpush.msra.mxu0 0.0
    %1410 = vmatpush.msra.mxu0 0.0
    %1411 = vmatpush.msra.mxu0 0.0
    %1412 = vmatpush.msra.mxu0 %v1395
    %1413 = vmatpush.msra.mxu0 %v1394
    %1414 = vmatpush.msra.mxu0 %v1393
    %1415 = vmatpush.msra.mxu0 %v1392
    %1416 = vmatmul.f32.gmra.mxu0 %v1370
    %v1417 = vpop.f32.mrf.mxu0
    %v1418 = vadd.f32 %v1398, %v1417
    %1419 = vdwg.mxu0
    %vm1420 = vcmask 13312
    %1421 = vst.msk [vmem:[%s99] sm:$0x3f] %vm1420, %v1390
    %vm1422 = vcmask 46080
    %1423 = vst.msk [vmem:[%s101] sm:$0x3f] %vm1422, %v1418
    %v1424 = vld [vmem:[%s11] sm:$0x3f]
    %v1425 = vsub.f32 %v1390, %v1424
    %v1426 = vmul.f32 %v1425, %v1425
    %v1427 = vsel %vm1420, %v1426, 0.0
    %1428 = vadd.xlane.f32.xlu0 %v1427
    %v1429 = vpop.xlane.xlu0 %1428
    %v1430 = vrot.slane %v1429, 4
    %v1431 = vadd.f32 %v1429, %v1430
    %v1432 = vrot.slane %v1431, 2
    %v1433 = vadd.f32 %v1431, %v1432
    %v1434 = vrot.slane %v1433, 1
    %v1435 = vadd.f32 %v1433, %v1434
    %s1436 = vtos %v1435
    %v1437 = vstv %s1436
    %v1438 = vadd.f32 %v1437, 0.0
    %v1439 = vld [vmem:[%s9] sm:$0x3f]
    %vm1440 = vcmp.gt.f32.partialorder %v1439, 0.0
    %v1441 = vsel %vm1440, 2.0, 1.0
    %v1442 = vsub.f32 %v1418, %v1439
    %v1443 = vmul.f32 %v1442, %v1441
    %v1444 = vmul.f32 %v1443, %v1443
    %v1445 = vsel %vm1422, %v1444, 0.0
    %1446 = vadd.xlane.f32.xlu0 %v1445
    %v1447 = vpop.xlane.xlu0 %1446
    %v1448 = vrot.slane %v1447, 4
    %v1449 = vadd.f32 %v1447, %v1448
    %v1450 = vrot.slane %v1449, 2
    %v1451 = vadd.f32 %v1449, %v1450
    %v1452 = vrot.slane %v1451, 1
    %v1453 = vadd.f32 %v1451, %v1452
    %s1454 = vtos %v1453
    %v1455 = vstv %s1454
    %v1456 = vadd.f32 %v1455, 0.0
    %v1457 = vld [vmem:[%s17] sm:$0x3f]
    %v1458 = vld [vmem:[%s21] sm:$0x3]
    %vm1459 = vcmask 15360
    %v1461 = vsel %vm1459, %v1390, 0
    %vm1463 = vcmask 1041408
    %v1465 = vsel %vm1463, %v1458, 0
    %1467 = vmatpush.msra.mxu0 0.0
    %1468 = vmatpush.msra.mxu0 0.0
    %1469 = vmatpush.msra.mxu0 0.0
    %1470 = vmatpush.msra.mxu0 0.0
    %1471 = vmatpush.msra.mxu0 0.0
    %1472 = vmatpush.msra.mxu0 0.0
    %1473 = vmatpush.msra.mxu0 0.0
    %1474 = vmatpush.msra.mxu0 0.0
    %1475 = vmatpush.msra.mxu0 0.0
    %1476 = vmatpush.msra.mxu0 0.0
    %1477 = vmatpush.msra.mxu0 0.0
    %1478 = vmatpush.msra.mxu0 0.0
    %1479 = vmatpush.msra.mxu0 0.0
    %1480 = vmatpush.msra.mxu0 0.0
    %1481 = vmatpush.msra.mxu0 0.0
    %1482 = vmatpush.msra.mxu0 %v1465
    %1483 = vmatmul.f32.gmra.mxu0 %v1461
    %v1484 = vpop.f32.mrf.mxu0
    %v1485 = vadd.f32 0.0, %v1484
    %1486 = vdwg.mxu0
    %v1488 = vsel %vm303, %v1418, 0
    %v1491 = vsel %vm319, %v1457, 0
    %1493 = vmatpush.msra.mxu0 0.0
    %1494 = vmatpush.msra.mxu0 0.0
    %1495 = vmatpush.msra.mxu0 0.0
    %1496 = vmatpush.msra.mxu0 0.0
    %1497 = vmatpush.msra.mxu0 0.0
    %1498 = vmatpush.msra.mxu0 0.0
    %1499 = vmatpush.msra.mxu0 0.0
    %1500 = vmatpush.msra.mxu0 0.0
    %1501 = vmatpush.msra.mxu0 0.0
    %1502 = vmatpush.msra.mxu0 0.0
    %1503 = vmatpush.msra.mxu0 0.0
    %1504 = vmatpush.msra.mxu0 0.0
    %1505 = vmatpush.msra.mxu0 0.0
    %1506 = vmatpush.msra.mxu0 0.0
    %1507 = vmatpush.msra.mxu0 0.0
    %1508 = vmatpush.msra.mxu0 %v1491
    %1509 = vmatmul.f32.gmra.mxu0 %v1488
    %v1510 = vpop.f32.mrf.mxu0
    %v1511 = vadd.f32 %v1485, %v1510
    %1512 = vdwg.mxu0
    %v1513 = vld [vmem:[%s23] sm:$0x1]
    %v1514 = vmul.f32 %v1513, 0.1
    %v1516 = vperm.slane %v1514, 0
    %v1518 = vadd.f32 %v1511, %v1516
    %v1519 = vld [vmem:[%s25] sm:$0x1]
    %v1521 = vperm.slane %v1519, 0
    %v1523 = vadd.f32 %v1518, %v1521
    %v1524 = vmax.f32 %v1523, 0.0
    %v1525 = vld [vmem:[%s55] sm:$0xff]
    %v1526 = vld [vmem:[%s55 + $0x8] sm:$0xff]
    %v1527 = vld [vmem:[%s55 + $0x10] sm:$0xff]
    %v1528 = vld [vmem:[%s55 + $0x18] sm:$0xff]
    %v1529 = vld [vmem:[%s57] sm:$0x1]
    %v1531 = vperm.slane %v1529, 0
    %v1534 = vsel %vm427, %v1524, 0
    %1536 = vmatpush.msra.mxu0 0.0
    %1537 = vmatpush.msra.mxu0 0.0
    %1538 = vmatpush.msra.mxu0 0.0
    %1539 = vmatpush.msra.mxu0 0.0
    %1540 = vmatpush.msra.mxu0 0.0
    %1541 = vmatpush.msra.mxu0 0.0
    %1542 = vmatpush.msra.mxu0 0.0
    %1543 = vmatpush.msra.mxu0 0.0
    %1544 = vmatpush.msra.mxu0 0.0
    %1545 = vmatpush.msra.mxu0 0.0
    %1546 = vmatpush.msra.mxu0 0.0
    %1547 = vmatpush.msra.mxu0 0.0
    %1548 = vmatpush.msra.mxu0 %v1528
    %1549 = vmatpush.msra.mxu0 %v1527
    %1550 = vmatpush.msra.mxu0 %v1526
    %1551 = vmatpush.msra.mxu0 %v1525
    %1552 = vmatmul.f32.gmra.mxu0 %v1534
    %v1553 = vpop.f32.mrf.mxu0
    %v1554 = vadd.f32 %v1531, %v1553
    %1555 = vdwg.mxu0
    %v1556 = vld [vmem:[%s59] sm:$0xff]
    %v1557 = vld [vmem:[%s59 + $0x8] sm:$0xff]
    %v1558 = vld [vmem:[%s59 + $0x10] sm:$0xff]
    %v1559 = vld [vmem:[%s59 + $0x18] sm:$0xff]
    %v1560 = vld [vmem:[%s61] sm:$0x1]
    %v1562 = vperm.slane %v1560, 0
    %1564 = vmatpush.msra.mxu0 0.0
    %1565 = vmatpush.msra.mxu0 0.0
    %1566 = vmatpush.msra.mxu0 0.0
    %1567 = vmatpush.msra.mxu0 0.0
    %1568 = vmatpush.msra.mxu0 0.0
    %1569 = vmatpush.msra.mxu0 0.0
    %1570 = vmatpush.msra.mxu0 0.0
    %1571 = vmatpush.msra.mxu0 0.0
    %1572 = vmatpush.msra.mxu0 0.0
    %1573 = vmatpush.msra.mxu0 0.0
    %1574 = vmatpush.msra.mxu0 0.0
    %1575 = vmatpush.msra.mxu0 0.0
    %1576 = vmatpush.msra.mxu0 %v1559
    %1577 = vmatpush.msra.mxu0 %v1558
    %1578 = vmatpush.msra.mxu0 %v1557
    %1579 = vmatpush.msra.mxu0 %v1556
    %1580 = vmatmul.f32.gmra.mxu0 %v1534
    %v1581 = vpop.f32.mrf.mxu0
    %v1582 = vadd.f32 %v1562, %v1581
    %1583 = vdwg.mxu0
    %v1584 = vld [vmem:[%s51] sm:$0xff]
    %v1585 = vld [vmem:[%s51 + $0x8] sm:$0xff]
    %v1586 = vld [vmem:[%s51 + $0x10] sm:$0xff]
    %v1587 = vld [vmem:[%s51 + $0x18] sm:$0xff]
    %v1588 = vld [vmem:[%s53] sm:$0x1]
    %v1590 = vperm.slane %v1588, 0
    %1592 = vmatpush.msra.mxu0 0.0
    %1593 = vmatpush.msra.mxu0 0.0
    %1594 = vmatpush.msra.mxu0 0.0
    %1595 = vmatpush.msra.mxu0 0.0
    %1596 = vmatpush.msra.mxu0 0.0
    %1597 = vmatpush.msra.mxu0 0.0
    %1598 = vmatpush.msra.mxu0 0.0
    %1599 = vmatpush.msra.mxu0 0.0
    %1600 = vmatpush.msra.mxu0 0.0
    %1601 = vmatpush.msra.mxu0 0.0
    %1602 = vmatpush.msra.mxu0 0.0
    %1603 = vmatpush.msra.mxu0 0.0
    %1604 = vmatpush.msra.mxu0 %v1587
    %1605 = vmatpush.msra.mxu0 %v1586
    %1606 = vmatpush.msra.mxu0 %v1585
    %1607 = vmatpush.msra.mxu0 %v1584
    %1608 = vmatmul.f32.gmra.mxu0 %v1534
    %v1609 = vpop.f32.mrf.mxu0
    %v1610 = vadd.f32 %v1590, %v1609
    %1611 = vdwg.mxu0
    %v1612 = vmul.f32 %v1610, %v1049
    %v1613 = vsel %vm1108, %v1612, 0.0
    %1614 = vadd.xlane.f32.xlu0 %v1613
    %v1615 = vpop.xlane.xlu0 %1614
    %v1616 = vmul.f32 %v1615, 0.17677669
    %v1617 = vmul.f32 %v1610, %v1554
    %v1618 = vsel %vm1108, %v1617, 0.0
    %1619 = vadd.xlane.f32.xlu0 %v1618
    %v1620 = vpop.xlane.xlu0 %1619
    %v1621 = vmul.f32 %v1620, 0.17677669
    %v1622 = vmax.f32 %v1616, %v1621
    %v1623 = vsub.f32 %v1616, %v1622
    %v1624 = vmul.f32 %v1623, 1.442695
    %v1625 = vpow.pop %v1624
    %v1626 = vsub.f32 %v1621, %v1622
    %v1627 = vmul.f32 %v1626, 1.442695
    %v1628 = vpow.pop %v1627
    %v1629 = vadd.f32 %v1625, %v1628
    %v1630 = vmul.f32 %v1625, %v1077
    %v1631 = vmul.f32 %v1628, %v1582
    %v1632 = vadd.f32 %v1630, %v1631
    %v1633 = vrcp.pop %v1629
    %v1634 = vmul.f32 %v1632, %v1633
    %v1635 = vld [vmem:[%s63] sm:$0xff]
    %v1636 = vld [vmem:[%s63 + $0x8] sm:$0xff]
    %v1637 = vld [vmem:[%s63 + $0x10] sm:$0xff]
    %v1638 = vld [vmem:[%s63 + $0x18] sm:$0xff]
    %v1639 = vld [vmem:[%s65] sm:$0x1]
    %v1641 = vperm.slane %v1639, 0
    %v1644 = vsel %vm427, %v1634, 0
    %1646 = vmatpush.msra.mxu0 0.0
    %1647 = vmatpush.msra.mxu0 0.0
    %1648 = vmatpush.msra.mxu0 0.0
    %1649 = vmatpush.msra.mxu0 0.0
    %1650 = vmatpush.msra.mxu0 0.0
    %1651 = vmatpush.msra.mxu0 0.0
    %1652 = vmatpush.msra.mxu0 0.0
    %1653 = vmatpush.msra.mxu0 0.0
    %1654 = vmatpush.msra.mxu0 0.0
    %1655 = vmatpush.msra.mxu0 0.0
    %1656 = vmatpush.msra.mxu0 0.0
    %1657 = vmatpush.msra.mxu0 0.0
    %1658 = vmatpush.msra.mxu0 %v1638
    %1659 = vmatpush.msra.mxu0 %v1637
    %1660 = vmatpush.msra.mxu0 %v1636
    %1661 = vmatpush.msra.mxu0 %v1635
    %1662 = vmatmul.f32.gmra.mxu0 %v1644
    %v1663 = vpop.f32.mrf.mxu0
    %v1664 = vadd.f32 %v1641, %v1663
    %1665 = vdwg.mxu0
    %v1666 = vadd.f32 %v1664, %v1524
    %v1667 = vld [vmem:[%s67] sm:$0xff]
    %v1668 = vld [vmem:[%s67 + $0x8] sm:$0xff]
    %v1669 = vld [vmem:[%s67 + $0x10] sm:$0xff]
    %v1670 = vld [vmem:[%s67 + $0x18] sm:$0xff]
    %v1671 = vld [vmem:[%s69] sm:$0x1]
    %v1673 = vperm.slane %v1671, 0
    %v1676 = vsel %vm427, %v1666, 0
    %1678 = vmatpush.msra.mxu0 0.0
    %1679 = vmatpush.msra.mxu0 0.0
    %1680 = vmatpush.msra.mxu0 0.0
    %1681 = vmatpush.msra.mxu0 0.0
    %1682 = vmatpush.msra.mxu0 0.0
    %1683 = vmatpush.msra.mxu0 0.0
    %1684 = vmatpush.msra.mxu0 0.0
    %1685 = vmatpush.msra.mxu0 0.0
    %1686 = vmatpush.msra.mxu0 0.0
    %1687 = vmatpush.msra.mxu0 0.0
    %1688 = vmatpush.msra.mxu0 0.0
    %1689 = vmatpush.msra.mxu0 0.0
    %1690 = vmatpush.msra.mxu0 %v1670
    %1691 = vmatpush.msra.mxu0 %v1669
    %1692 = vmatpush.msra.mxu0 %v1668
    %1693 = vmatpush.msra.mxu0 %v1667
    %1694 = vmatmul.f32.gmra.mxu0 %v1676
    %v1695 = vpop.f32.mrf.mxu0
    %v1696 = vadd.f32 %v1673, %v1695
    %1697 = vdwg.mxu0
    %v1699 = vsel %vm427, %v1696, 0
    %1701 = vmatpush.xpose.msra.mxu0 0.0
    %1702 = vmatpush.xpose.msra.mxu0 0.0
    %1703 = vmatpush.xpose.msra.mxu0 0.0
    %1704 = vmatpush.xpose.msra.mxu0 0.0
    %1705 = vmatpush.xpose.msra.mxu0 0.0
    %1706 = vmatpush.xpose.msra.mxu0 0.0
    %1707 = vmatpush.xpose.msra.mxu0 0.0
    %1708 = vmatpush.xpose.msra.mxu0 0.0
    %1709 = vmatpush.xpose.msra.mxu0 0.0
    %1710 = vmatpush.xpose.msra.mxu0 0.0
    %1711 = vmatpush.xpose.msra.mxu0 0.0
    %1712 = vmatpush.xpose.msra.mxu0 %v1198
    %1713 = vmatpush.xpose.msra.mxu0 %v1195
    %1714 = vmatpush.xpose.msra.mxu0 %v1192
    %1715 = vmatpush.xpose.msra.mxu0 %v1189
    %1716 = vmatpush.xpose.msra.mxu0 %v1186
    %1717 = vmatmul.f32.gmra.mxu0 %v1699
    %v1718 = vpop.f32.mrf.mxu0
    %v1719 = vadd.f32 0.0, %v1718
    %1720 = vdwg.mxu0
    %v1721 = vmul.f32 %v1719, 0.17677669
    %s1722 = scalar_lea.vmem %s15, 8
    %v1723 = vld [vmem:[%s1722] sm:$0x3f]
    %v1724 = vadd.f32 %v1721, %v1723
    %v1725 = vsel %vm1223, %v1724, -inf
    %1726 = vmax.xlane.f32.xlu0 %v1725
    %v1727 = vpop.xlane.xlu0 %1726
    %v1728 = vsub.f32 %v1724, %v1727
    %v1729 = vmul.f32 %v1728, 1.442695
    %v1730 = vpow.pop %v1729
    %v1731 = vsel %vm1223, %v1730, 0.0
    %1732 = vadd.xlane.f32.xlu0 %v1731
    %v1733 = vpop.xlane.xlu0 %1732
    %v1734 = vrcp.pop %v1733
    %v1735 = vmul.f32 %v1730, %v1734
    %v1737 = vsel %vm632, %v1735, 0
    %1739 = vmatpush.msra.mxu0 0.0
    %1740 = vmatpush.msra.mxu0 0.0
    %1741 = vmatpush.msra.mxu0 0.0
    %1742 = vmatpush.msra.mxu0 0.0
    %1743 = vmatpush.msra.mxu0 0.0
    %1744 = vmatpush.msra.mxu0 0.0
    %1745 = vmatpush.msra.mxu0 0.0
    %1746 = vmatpush.msra.mxu0 0.0
    %1747 = vmatpush.msra.mxu0 0.0
    %1748 = vmatpush.msra.mxu0 0.0
    %1749 = vmatpush.msra.mxu0 0.0
    %1750 = vmatpush.msra.mxu0 %v1239
    %1751 = vmatpush.msra.mxu0 %v1015
    %1752 = vmatpush.msra.mxu0 %v1012
    %1753 = vmatpush.msra.mxu0 %v1009
    %1754 = vmatpush.msra.mxu0 %v1006
    %1755 = vmatmul.f32.gmra.mxu0 %v1737
    %v1756 = vpop.f32.mrf.mxu0
    %v1757 = vadd.f32 0.0, %v1756
    %1758 = vdwg.mxu0
    %v1759 = vld [vmem:[%s79] sm:$0xff]
    %v1760 = vld [vmem:[%s79 + $0x8] sm:$0xff]
    %v1761 = vld [vmem:[%s79 + $0x10] sm:$0xff]
    %v1762 = vld [vmem:[%s79 + $0x18] sm:$0xff]
    %v1763 = vld [vmem:[%s81] sm:$0x1]
    %v1765 = vperm.slane %v1763, 0
    %v1768 = vsel %vm427, %v1757, 0
    %1770 = vmatpush.msra.mxu0 0.0
    %1771 = vmatpush.msra.mxu0 0.0
    %1772 = vmatpush.msra.mxu0 0.0
    %1773 = vmatpush.msra.mxu0 0.0
    %1774 = vmatpush.msra.mxu0 0.0
    %1775 = vmatpush.msra.mxu0 0.0
    %1776 = vmatpush.msra.mxu0 0.0
    %1777 = vmatpush.msra.mxu0 0.0
    %1778 = vmatpush.msra.mxu0 0.0
    %1779 = vmatpush.msra.mxu0 0.0
    %1780 = vmatpush.msra.mxu0 0.0
    %1781 = vmatpush.msra.mxu0 0.0
    %1782 = vmatpush.msra.mxu0 %v1762
    %1783 = vmatpush.msra.mxu0 %v1761
    %1784 = vmatpush.msra.mxu0 %v1760
    %1785 = vmatpush.msra.mxu0 %v1759
    %1786 = vmatmul.f32.gmra.mxu0 %v1768
    %v1787 = vpop.f32.mrf.mxu0
    %v1788 = vadd.f32 %v1765, %v1787
    %1789 = vdwg.mxu0
    %v1790 = vadd.f32 %v1666, %v1788
    %v1791 = vld [vmem:[%s83] sm:$0xff]
    %v1792 = vld [vmem:[%s83 + $0x8] sm:$0xff]
    %v1793 = vld [vmem:[%s83 + $0x10] sm:$0xff]
    %v1794 = vld [vmem:[%s83 + $0x18] sm:$0xff]
    %v1795 = vld [vmem:[%s85] sm:$0x1]
    %v1797 = vperm.slane %v1795, 0
    %v1800 = vsel %vm427, %v1790, 0
    %1802 = vmatpush.msra.mxu0 0.0
    %1803 = vmatpush.msra.mxu0 0.0
    %1804 = vmatpush.msra.mxu0 0.0
    %1805 = vmatpush.msra.mxu0 0.0
    %1806 = vmatpush.msra.mxu0 0.0
    %1807 = vmatpush.msra.mxu0 0.0
    %1808 = vmatpush.msra.mxu0 0.0
    %1809 = vmatpush.msra.mxu0 0.0
    %1810 = vmatpush.msra.mxu0 0.0
    %1811 = vmatpush.msra.mxu0 0.0
    %1812 = vmatpush.msra.mxu0 0.0
    %1813 = vmatpush.msra.mxu0 0.0
    %1814 = vmatpush.msra.mxu0 %v1794
    %1815 = vmatpush.msra.mxu0 %v1793
    %1816 = vmatpush.msra.mxu0 %v1792
    %1817 = vmatpush.msra.mxu0 %v1791
    %1818 = vmatmul.f32.gmra.mxu0 %v1800
    %v1819 = vpop.f32.mrf.mxu0
    %v1820 = vadd.f32 %v1797, %v1819
    %1821 = vdwg.mxu0
    %v1822 = vmax.f32 %v1820, 0.0
    %v1823 = vld [vmem:[%s87] sm:$0xff]
    %v1824 = vld [vmem:[%s87 + $0x8] sm:$0xff]
    %v1825 = vld [vmem:[%s87 + $0x10] sm:$0xff]
    %v1826 = vld [vmem:[%s87 + $0x18] sm:$0xff]
    %v1827 = vld [vmem:[%s87 + $0x20] sm:$0xff]
    %v1828 = vld [vmem:[%s87 + $0x28] sm:$0xff]
    %v1829 = vld [vmem:[%s87 + $0x30] sm:$0xff]
    %v1830 = vld [vmem:[%s87 + $0x38] sm:$0xff]
    %v1831 = vld [vmem:[%s89] sm:$0x1]
    %v1833 = vperm.slane %v1831, 0
    %v1836 = vsel %vm872, %v1822, 0
    %1838 = vmatpush.msra.mxu0 0.0
    %1839 = vmatpush.msra.mxu0 0.0
    %1840 = vmatpush.msra.mxu0 0.0
    %1841 = vmatpush.msra.mxu0 0.0
    %1842 = vmatpush.msra.mxu0 0.0
    %1843 = vmatpush.msra.mxu0 0.0
    %1844 = vmatpush.msra.mxu0 0.0
    %1845 = vmatpush.msra.mxu0 0.0
    %1846 = vmatpush.msra.mxu0 %v1830
    %1847 = vmatpush.msra.mxu0 %v1829
    %1848 = vmatpush.msra.mxu0 %v1828
    %1849 = vmatpush.msra.mxu0 %v1827
    %1850 = vmatpush.msra.mxu0 %v1826
    %1851 = vmatpush.msra.mxu0 %v1825
    %1852 = vmatpush.msra.mxu0 %v1824
    %1853 = vmatpush.msra.mxu0 %v1823
    %1854 = vmatmul.f32.gmra.mxu0 %v1836
    %v1855 = vpop.f32.mrf.mxu0
    %v1856 = vadd.f32 %v1833, %v1855
    %1857 = vdwg.mxu0
    %v1858 = vadd.f32 %v1790, %v1856
    %v1859 = vld [vmem:[%s91] sm:$0xff]
    %v1860 = vld [vmem:[%s91 + $0x8] sm:$0xff]
    %v1861 = vld [vmem:[%s91 + $0x10] sm:$0xff]
    %v1862 = vld [vmem:[%s91 + $0x18] sm:$0xff]
    %v1863 = vld [vmem:[#allocation2] sm:$0x1]
    %v1865 = vperm.slane %v1863, 0
    %v1868 = vsel %vm427, %v1858, 0
    %1870 = vmatpush.msra.mxu0 0.0
    %1871 = vmatpush.msra.mxu0 0.0
    %1872 = vmatpush.msra.mxu0 0.0
    %1873 = vmatpush.msra.mxu0 0.0
    %1874 = vmatpush.msra.mxu0 0.0
    %1875 = vmatpush.msra.mxu0 0.0
    %1876 = vmatpush.msra.mxu0 0.0
    %1877 = vmatpush.msra.mxu0 0.0
    %1878 = vmatpush.msra.mxu0 0.0
    %1879 = vmatpush.msra.mxu0 0.0
    %1880 = vmatpush.msra.mxu0 0.0
    %1881 = vmatpush.msra.mxu0 0.0
    %1882 = vmatpush.msra.mxu0 %v1862
    %1883 = vmatpush.msra.mxu0 %v1861
    %1884 = vmatpush.msra.mxu0 %v1860
    %1885 = vmatpush.msra.mxu0 %v1859
    %1886 = vmatmul.f32.gmra.mxu0 %v1868
    %v1887 = vpop.f32.mrf.mxu0
    %v1888 = vadd.f32 %v1865, %v1887
    %1889 = vdwg.mxu0
    %v1890 = vld [vmem:[%s95] sm:$0xff]
    %v1891 = vld [vmem:[%s95 + $0x8] sm:$0xff]
    %v1892 = vld [vmem:[%s95 + $0x10] sm:$0xff]
    %v1893 = vld [vmem:[%s95 + $0x18] sm:$0xff]
    %v1894 = vld [vmem:[#allocation5] sm:$0x1]
    %v1896 = vperm.slane %v1894, 0
    %1898 = vmatpush.msra.mxu0 0.0
    %1899 = vmatpush.msra.mxu0 0.0
    %1900 = vmatpush.msra.mxu0 0.0
    %1901 = vmatpush.msra.mxu0 0.0
    %1902 = vmatpush.msra.mxu0 0.0
    %1903 = vmatpush.msra.mxu0 0.0
    %1904 = vmatpush.msra.mxu0 0.0
    %1905 = vmatpush.msra.mxu0 0.0
    %1906 = vmatpush.msra.mxu0 0.0
    %1907 = vmatpush.msra.mxu0 0.0
    %1908 = vmatpush.msra.mxu0 0.0
    %1909 = vmatpush.msra.mxu0 0.0
    %1910 = vmatpush.msra.mxu0 %v1893
    %1911 = vmatpush.msra.mxu0 %v1892
    %1912 = vmatpush.msra.mxu0 %v1891
    %1913 = vmatpush.msra.mxu0 %v1890
    %1914 = vmatmul.f32.gmra.mxu0 %v1868
    %v1915 = vpop.f32.mrf.mxu0
    %v1916 = vadd.f32 %v1896, %v1915
    %1917 = vdwg.mxu0
    %s1918 = scalar_lea.vmem %s99, 8
    %1919 = vst.msk [vmem:[%s1918] sm:$0x3f] %vm1420, %v1888
    %s1920 = scalar_lea.vmem %s101, 8
    %1921 = vst.msk [vmem:[%s1920] sm:$0x3f] %vm1422, %v1916
    %s1922 = scalar_lea.vmem %s11, 8
    %v1923 = vld [vmem:[%s1922] sm:$0x3f]
    %v1924 = vsub.f32 %v1888, %v1923
    %v1925 = vmul.f32 %v1924, %v1924
    %v1926 = vsel %vm1420, %v1925, 0.0
    %1927 = vadd.xlane.f32.xlu0 %v1926
    %v1928 = vpop.xlane.xlu0 %1927
    %v1929 = vrot.slane %v1928, 4
    %v1930 = vadd.f32 %v1928, %v1929
    %v1931 = vrot.slane %v1930, 2
    %v1932 = vadd.f32 %v1930, %v1931
    %v1933 = vrot.slane %v1932, 1
    %v1934 = vadd.f32 %v1932, %v1933
    %s1935 = vtos %v1934
    %v1936 = vstv %s1935
    %v1937 = vadd.f32 %v1438, %v1936
    %s1938 = scalar_lea.vmem %s9, 8
    %v1939 = vld [vmem:[%s1938] sm:$0x3f]
    %vm1940 = vcmp.gt.f32.partialorder %v1939, 0.0
    %v1941 = vsel %vm1940, 2.0, 1.0
    %v1942 = vsub.f32 %v1916, %v1939
    %v1943 = vmul.f32 %v1942, %v1941
    %v1944 = vmul.f32 %v1943, %v1943
    %v1945 = vsel %vm1422, %v1944, 0.0
    %1946 = vadd.xlane.f32.xlu0 %v1945
    %v1947 = vpop.xlane.xlu0 %1946
    %v1948 = vrot.slane %v1947, 4
    %v1949 = vadd.f32 %v1947, %v1948
    %v1950 = vrot.slane %v1949, 2
    %v1951 = vadd.f32 %v1949, %v1950
    %v1952 = vrot.slane %v1951, 1
    %v1953 = vadd.f32 %v1951, %v1952
    %s1954 = vtos %v1953
    %v1955 = vstv %s1954
    %v1956 = vadd.f32 %v1456, %v1955
    %v1957 = vld [vmem:[%s17] sm:$0x3f]
    %v1958 = vld [vmem:[%s21] sm:$0x3]
    %v1960 = vsel %vm1459, %v1888, 0
    %v1963 = vsel %vm1463, %v1958, 0
    %1965 = vmatpush.msra.mxu0 0.0
    %1966 = vmatpush.msra.mxu0 0.0
    %1967 = vmatpush.msra.mxu0 0.0
    %1968 = vmatpush.msra.mxu0 0.0
    %1969 = vmatpush.msra.mxu0 0.0
    %1970 = vmatpush.msra.mxu0 0.0
    %1971 = vmatpush.msra.mxu0 0.0
    %1972 = vmatpush.msra.mxu0 0.0
    %1973 = vmatpush.msra.mxu0 0.0
    %1974 = vmatpush.msra.mxu0 0.0
    %1975 = vmatpush.msra.mxu0 0.0
    %1976 = vmatpush.msra.mxu0 0.0
    %1977 = vmatpush.msra.mxu0 0.0
    %1978 = vmatpush.msra.mxu0 0.0
    %1979 = vmatpush.msra.mxu0 0.0
    %1980 = vmatpush.msra.mxu0 %v1963
    %1981 = vmatmul.f32.gmra.mxu0 %v1960
    %v1982 = vpop.f32.mrf.mxu0
    %v1983 = vadd.f32 0.0, %v1982
    %1984 = vdwg.mxu0
    %v1986 = vsel %vm303, %v1916, 0
    %v1989 = vsel %vm319, %v1957, 0
    %1991 = vmatpush.msra.mxu0 0.0
    %1992 = vmatpush.msra.mxu0 0.0
    %1993 = vmatpush.msra.mxu0 0.0
    %1994 = vmatpush.msra.mxu0 0.0
    %1995 = vmatpush.msra.mxu0 0.0
    %1996 = vmatpush.msra.mxu0 0.0
    %1997 = vmatpush.msra.mxu0 0.0
    %1998 = vmatpush.msra.mxu0 0.0
    %1999 = vmatpush.msra.mxu0 0.0
    %2000 = vmatpush.msra.mxu0 0.0
    %2001 = vmatpush.msra.mxu0 0.0
    %2002 = vmatpush.msra.mxu0 0.0
    %2003 = vmatpush.msra.mxu0 0.0
    %2004 = vmatpush.msra.mxu0 0.0
    %2005 = vmatpush.msra.mxu0 0.0
    %2006 = vmatpush.msra.mxu0 %v1989
    %2007 = vmatmul.f32.gmra.mxu0 %v1986
    %v2008 = vpop.f32.mrf.mxu0
    %v2009 = vadd.f32 %v1983, %v2008
    %2010 = vdwg.mxu0
    %v2011 = vld [vmem:[%s23] sm:$0x1]
    %v2012 = vmul.f32 %v2011, 0.2
    %v2014 = vperm.slane %v2012, 0
    %v2016 = vadd.f32 %v2009, %v2014
    %v2017 = vld [vmem:[%s25] sm:$0x1]
    %v2019 = vperm.slane %v2017, 0
    %v2021 = vadd.f32 %v2016, %v2019
    %v2022 = vmax.f32 %v2021, 0.0
    %v2023 = vld [vmem:[%s55] sm:$0xff]
    %v2024 = vld [vmem:[%s55 + $0x8] sm:$0xff]
    %v2025 = vld [vmem:[%s55 + $0x10] sm:$0xff]
    %v2026 = vld [vmem:[%s55 + $0x18] sm:$0xff]
    %v2027 = vld [vmem:[%s57] sm:$0x1]
    %v2029 = vperm.slane %v2027, 0
    %v2032 = vsel %vm427, %v2022, 0
    %2034 = vmatpush.msra.mxu0 0.0
    %2035 = vmatpush.msra.mxu0 0.0
    %2036 = vmatpush.msra.mxu0 0.0
    %2037 = vmatpush.msra.mxu0 0.0
    %2038 = vmatpush.msra.mxu0 0.0
    %2039 = vmatpush.msra.mxu0 0.0
    %2040 = vmatpush.msra.mxu0 0.0
    %2041 = vmatpush.msra.mxu0 0.0
    %2042 = vmatpush.msra.mxu0 0.0
    %2043 = vmatpush.msra.mxu0 0.0
    %2044 = vmatpush.msra.mxu0 0.0
    %2045 = vmatpush.msra.mxu0 0.0
    %2046 = vmatpush.msra.mxu0 %v2026
    %2047 = vmatpush.msra.mxu0 %v2025
    %2048 = vmatpush.msra.mxu0 %v2024
    %2049 = vmatpush.msra.mxu0 %v2023
    %2050 = vmatmul.f32.gmra.mxu0 %v2032
    %v2051 = vpop.f32.mrf.mxu0
    %v2052 = vadd.f32 %v2029, %v2051
    %2053 = vdwg.mxu0
    %v2054 = vld [vmem:[%s59] sm:$0xff]
    %v2055 = vld [vmem:[%s59 + $0x8] sm:$0xff]
    %v2056 = vld [vmem:[%s59 + $0x10] sm:$0xff]
    %v2057 = vld [vmem:[%s59 + $0x18] sm:$0xff]
    %v2058 = vld [vmem:[%s61] sm:$0x1]
    %v2060 = vperm.slane %v2058, 0
    %2062 = vmatpush.msra.mxu0 0.0
    %2063 = vmatpush.msra.mxu0 0.0
    %2064 = vmatpush.msra.mxu0 0.0
    %2065 = vmatpush.msra.mxu0 0.0
    %2066 = vmatpush.msra.mxu0 0.0
    %2067 = vmatpush.msra.mxu0 0.0
    %2068 = vmatpush.msra.mxu0 0.0
    %2069 = vmatpush.msra.mxu0 0.0
    %2070 = vmatpush.msra.mxu0 0.0
    %2071 = vmatpush.msra.mxu0 0.0
    %2072 = vmatpush.msra.mxu0 0.0
    %2073 = vmatpush.msra.mxu0 0.0
    %2074 = vmatpush.msra.mxu0 %v2057
    %2075 = vmatpush.msra.mxu0 %v2056
    %2076 = vmatpush.msra.mxu0 %v2055
    %2077 = vmatpush.msra.mxu0 %v2054
    %2078 = vmatmul.f32.gmra.mxu0 %v2032
    %v2079 = vpop.f32.mrf.mxu0
    %v2080 = vadd.f32 %v2060, %v2079
    %2081 = vdwg.mxu0
    %v2082 = vld [vmem:[%s51] sm:$0xff]
    %v2083 = vld [vmem:[%s51 + $0x8] sm:$0xff]
    %v2084 = vld [vmem:[%s51 + $0x10] sm:$0xff]
    %v2085 = vld [vmem:[%s51 + $0x18] sm:$0xff]
    %v2086 = vld [vmem:[%s53] sm:$0x1]
    %v2088 = vperm.slane %v2086, 0
    %2090 = vmatpush.msra.mxu0 0.0
    %2091 = vmatpush.msra.mxu0 0.0
    %2092 = vmatpush.msra.mxu0 0.0
    %2093 = vmatpush.msra.mxu0 0.0
    %2094 = vmatpush.msra.mxu0 0.0
    %2095 = vmatpush.msra.mxu0 0.0
    %2096 = vmatpush.msra.mxu0 0.0
    %2097 = vmatpush.msra.mxu0 0.0
    %2098 = vmatpush.msra.mxu0 0.0
    %2099 = vmatpush.msra.mxu0 0.0
    %2100 = vmatpush.msra.mxu0 0.0
    %2101 = vmatpush.msra.mxu0 0.0
    %2102 = vmatpush.msra.mxu0 %v2085
    %2103 = vmatpush.msra.mxu0 %v2084
    %2104 = vmatpush.msra.mxu0 %v2083
    %2105 = vmatpush.msra.mxu0 %v2082
    %2106 = vmatmul.f32.gmra.mxu0 %v2032
    %v2107 = vpop.f32.mrf.mxu0
    %v2108 = vadd.f32 %v2088, %v2107
    %2109 = vdwg.mxu0
    %v2110 = vmul.f32 %v2108, %v1049
    %v2111 = vsel %vm1108, %v2110, 0.0
    %2112 = vadd.xlane.f32.xlu0 %v2111
    %v2113 = vpop.xlane.xlu0 %2112
    %v2114 = vmul.f32 %v2113, 0.17677669
    %v2115 = vmul.f32 %v2108, %v1554
    %v2116 = vsel %vm1108, %v2115, 0.0
    %2117 = vadd.xlane.f32.xlu0 %v2116
    %v2118 = vpop.xlane.xlu0 %2117
    %v2119 = vmul.f32 %v2118, 0.17677669
    %v2120 = vmul.f32 %v2108, %v2052
    %v2121 = vsel %vm1108, %v2120, 0.0
    %2122 = vadd.xlane.f32.xlu0 %v2121
    %v2123 = vpop.xlane.xlu0 %2122
    %v2124 = vmul.f32 %v2123, 0.17677669
    %v2125 = vmax.f32 %v2114, %v2119
    %v2126 = vmax.f32 %v2125, %v2124
    %v2127 = vsub.f32 %v2114, %v2126
    %v2128 = vmul.f32 %v2127, 1.442695
    %v2129 = vpow.pop %v2128
    %v2130 = vsub.f32 %v2119, %v2126
    %v2131 = vmul.f32 %v2130, 1.442695
    %v2132 = vpow.pop %v2131
    %v2133 = vsub.f32 %v2124, %v2126
    %v2134 = vmul.f32 %v2133, 1.442695
    %v2135 = vpow.pop %v2134
    %v2136 = vadd.f32 %v2129, %v2132
    %v2137 = vadd.f32 %v2136, %v2135
    %v2138 = vmul.f32 %v2129, %v1077
    %v2139 = vmul.f32 %v2132, %v1582
    %v2140 = vadd.f32 %v2138, %v2139
    %v2141 = vmul.f32 %v2135, %v2080
    %v2142 = vadd.f32 %v2140, %v2141
    %v2143 = vrcp.pop %v2137
    %v2144 = vmul.f32 %v2142, %v2143
    %v2145 = vld [vmem:[%s63] sm:$0xff]
    %v2146 = vld [vmem:[%s63 + $0x8] sm:$0xff]
    %v2147 = vld [vmem:[%s63 + $0x10] sm:$0xff]
    %v2148 = vld [vmem:[%s63 + $0x18] sm:$0xff]
    %v2149 = vld [vmem:[%s65] sm:$0x1]
    %v2151 = vperm.slane %v2149, 0
    %v2154 = vsel %vm427, %v2144, 0
    %2156 = vmatpush.msra.mxu0 0.0
    %2157 = vmatpush.msra.mxu0 0.0
    %2158 = vmatpush.msra.mxu0 0.0
    %2159 = vmatpush.msra.mxu0 0.0
    %2160 = vmatpush.msra.mxu0 0.0
    %2161 = vmatpush.msra.mxu0 0.0
    %2162 = vmatpush.msra.mxu0 0.0
    %2163 = vmatpush.msra.mxu0 0.0
    %2164 = vmatpush.msra.mxu0 0.0
    %2165 = vmatpush.msra.mxu0 0.0
    %2166 = vmatpush.msra.mxu0 0.0
    %2167 = vmatpush.msra.mxu0 0.0
    %2168 = vmatpush.msra.mxu0 %v2148
    %2169 = vmatpush.msra.mxu0 %v2147
    %2170 = vmatpush.msra.mxu0 %v2146
    %2171 = vmatpush.msra.mxu0 %v2145
    %2172 = vmatmul.f32.gmra.mxu0 %v2154
    %v2173 = vpop.f32.mrf.mxu0
    %v2174 = vadd.f32 %v2151, %v2173
    %2175 = vdwg.mxu0
    %v2176 = vadd.f32 %v2174, %v2022
    %v2177 = vld [vmem:[%s67] sm:$0xff]
    %v2178 = vld [vmem:[%s67 + $0x8] sm:$0xff]
    %v2179 = vld [vmem:[%s67 + $0x10] sm:$0xff]
    %v2180 = vld [vmem:[%s67 + $0x18] sm:$0xff]
    %v2181 = vld [vmem:[%s69] sm:$0x1]
    %v2183 = vperm.slane %v2181, 0
    %v2186 = vsel %vm427, %v2176, 0
    %2188 = vmatpush.msra.mxu0 0.0
    %2189 = vmatpush.msra.mxu0 0.0
    %2190 = vmatpush.msra.mxu0 0.0
    %2191 = vmatpush.msra.mxu0 0.0
    %2192 = vmatpush.msra.mxu0 0.0
    %2193 = vmatpush.msra.mxu0 0.0
    %2194 = vmatpush.msra.mxu0 0.0
    %2195 = vmatpush.msra.mxu0 0.0
    %2196 = vmatpush.msra.mxu0 0.0
    %2197 = vmatpush.msra.mxu0 0.0
    %2198 = vmatpush.msra.mxu0 0.0
    %2199 = vmatpush.msra.mxu0 0.0
    %2200 = vmatpush.msra.mxu0 %v2180
    %2201 = vmatpush.msra.mxu0 %v2179
    %2202 = vmatpush.msra.mxu0 %v2178
    %2203 = vmatpush.msra.mxu0 %v2177
    %2204 = vmatmul.f32.gmra.mxu0 %v2186
    %v2205 = vpop.f32.mrf.mxu0
    %v2206 = vadd.f32 %v2183, %v2205
    %2207 = vdwg.mxu0
    %v2209 = vsel %vm427, %v2206, 0
    %2211 = vmatpush.xpose.msra.mxu0 0.0
    %2212 = vmatpush.xpose.msra.mxu0 0.0
    %2213 = vmatpush.xpose.msra.mxu0 0.0
    %2214 = vmatpush.xpose.msra.mxu0 0.0
    %2215 = vmatpush.xpose.msra.mxu0 0.0
    %2216 = vmatpush.xpose.msra.mxu0 0.0
    %2217 = vmatpush.xpose.msra.mxu0 0.0
    %2218 = vmatpush.xpose.msra.mxu0 0.0
    %2219 = vmatpush.xpose.msra.mxu0 0.0
    %2220 = vmatpush.xpose.msra.mxu0 0.0
    %2221 = vmatpush.xpose.msra.mxu0 0.0
    %2222 = vmatpush.xpose.msra.mxu0 %v1198
    %2223 = vmatpush.xpose.msra.mxu0 %v1195
    %2224 = vmatpush.xpose.msra.mxu0 %v1192
    %2225 = vmatpush.xpose.msra.mxu0 %v1189
    %2226 = vmatpush.xpose.msra.mxu0 %v1186
    %2227 = vmatmul.f32.gmra.mxu0 %v2209
    %v2228 = vpop.f32.mrf.mxu0
    %v2229 = vadd.f32 0.0, %v2228
    %2230 = vdwg.mxu0
    %v2231 = vmul.f32 %v2229, 0.17677669
    %s2232 = scalar_lea.vmem %s15, 16
    %v2233 = vld [vmem:[%s2232] sm:$0x3f]
    %v2234 = vadd.f32 %v2231, %v2233
    %v2235 = vsel %vm1223, %v2234, -inf
    %2236 = vmax.xlane.f32.xlu0 %v2235
    %v2237 = vpop.xlane.xlu0 %2236
    %v2238 = vsub.f32 %v2234, %v2237
    %v2239 = vmul.f32 %v2238, 1.442695
    %v2240 = vpow.pop %v2239
    %v2241 = vsel %vm1223, %v2240, 0.0
    %2242 = vadd.xlane.f32.xlu0 %v2241
    %v2243 = vpop.xlane.xlu0 %2242
    %v2244 = vrcp.pop %v2243
    %v2245 = vmul.f32 %v2240, %v2244
    %v2247 = vsel %vm632, %v2245, 0
    %2249 = vmatpush.msra.mxu0 0.0
    %2250 = vmatpush.msra.mxu0 0.0
    %2251 = vmatpush.msra.mxu0 0.0
    %2252 = vmatpush.msra.mxu0 0.0
    %2253 = vmatpush.msra.mxu0 0.0
    %2254 = vmatpush.msra.mxu0 0.0
    %2255 = vmatpush.msra.mxu0 0.0
    %2256 = vmatpush.msra.mxu0 0.0
    %2257 = vmatpush.msra.mxu0 0.0
    %2258 = vmatpush.msra.mxu0 0.0
    %2259 = vmatpush.msra.mxu0 0.0
    %2260 = vmatpush.msra.mxu0 %v1239
    %2261 = vmatpush.msra.mxu0 %v1015
    %2262 = vmatpush.msra.mxu0 %v1012
    %2263 = vmatpush.msra.mxu0 %v1009
    %2264 = vmatpush.msra.mxu0 %v1006
    %2265 = vmatmul.f32.gmra.mxu0 %v2247
    %v2266 = vpop.f32.mrf.mxu0
    %v2267 = vadd.f32 0.0, %v2266
    %2268 = vdwg.mxu0
    %v2269 = vld [vmem:[%s79] sm:$0xff]
    %v2270 = vld [vmem:[%s79 + $0x8] sm:$0xff]
    %v2271 = vld [vmem:[%s79 + $0x10] sm:$0xff]
    %v2272 = vld [vmem:[%s79 + $0x18] sm:$0xff]
    %v2273 = vld [vmem:[%s81] sm:$0x1]
    %v2275 = vperm.slane %v2273, 0
    %v2278 = vsel %vm427, %v2267, 0
    %2280 = vmatpush.msra.mxu0 0.0
    %2281 = vmatpush.msra.mxu0 0.0
    %2282 = vmatpush.msra.mxu0 0.0
    %2283 = vmatpush.msra.mxu0 0.0
    %2284 = vmatpush.msra.mxu0 0.0
    %2285 = vmatpush.msra.mxu0 0.0
    %2286 = vmatpush.msra.mxu0 0.0
    %2287 = vmatpush.msra.mxu0 0.0
    %2288 = vmatpush.msra.mxu0 0.0
    %2289 = vmatpush.msra.mxu0 0.0
    %2290 = vmatpush.msra.mxu0 0.0
    %2291 = vmatpush.msra.mxu0 0.0
    %2292 = vmatpush.msra.mxu0 %v2272
    %2293 = vmatpush.msra.mxu0 %v2271
    %2294 = vmatpush.msra.mxu0 %v2270
    %2295 = vmatpush.msra.mxu0 %v2269
    %2296 = vmatmul.f32.gmra.mxu0 %v2278
    %v2297 = vpop.f32.mrf.mxu0
    %v2298 = vadd.f32 %v2275, %v2297
    %2299 = vdwg.mxu0
    %v2300 = vadd.f32 %v2176, %v2298
    %v2301 = vld [vmem:[%s83] sm:$0xff]
    %v2302 = vld [vmem:[%s83 + $0x8] sm:$0xff]
    %v2303 = vld [vmem:[%s83 + $0x10] sm:$0xff]
    %v2304 = vld [vmem:[%s83 + $0x18] sm:$0xff]
    %v2305 = vld [vmem:[%s85] sm:$0x1]
    %v2307 = vperm.slane %v2305, 0
    %v2310 = vsel %vm427, %v2300, 0
    %2312 = vmatpush.msra.mxu0 0.0
    %2313 = vmatpush.msra.mxu0 0.0
    %2314 = vmatpush.msra.mxu0 0.0
    %2315 = vmatpush.msra.mxu0 0.0
    %2316 = vmatpush.msra.mxu0 0.0
    %2317 = vmatpush.msra.mxu0 0.0
    %2318 = vmatpush.msra.mxu0 0.0
    %2319 = vmatpush.msra.mxu0 0.0
    %2320 = vmatpush.msra.mxu0 0.0
    %2321 = vmatpush.msra.mxu0 0.0
    %2322 = vmatpush.msra.mxu0 0.0
    %2323 = vmatpush.msra.mxu0 0.0
    %2324 = vmatpush.msra.mxu0 %v2304
    %2325 = vmatpush.msra.mxu0 %v2303
    %2326 = vmatpush.msra.mxu0 %v2302
    %2327 = vmatpush.msra.mxu0 %v2301
    %2328 = vmatmul.f32.gmra.mxu0 %v2310
    %v2329 = vpop.f32.mrf.mxu0
    %v2330 = vadd.f32 %v2307, %v2329
    %2331 = vdwg.mxu0
    %v2332 = vmax.f32 %v2330, 0.0
    %v2333 = vld [vmem:[%s87] sm:$0xff]
    %v2334 = vld [vmem:[%s87 + $0x8] sm:$0xff]
    %v2335 = vld [vmem:[%s87 + $0x10] sm:$0xff]
    %v2336 = vld [vmem:[%s87 + $0x18] sm:$0xff]
    %v2337 = vld [vmem:[%s87 + $0x20] sm:$0xff]
    %v2338 = vld [vmem:[%s87 + $0x28] sm:$0xff]
    %v2339 = vld [vmem:[%s87 + $0x30] sm:$0xff]
    %v2340 = vld [vmem:[%s87 + $0x38] sm:$0xff]
    %v2341 = vld [vmem:[%s89] sm:$0x1]
    %v2343 = vperm.slane %v2341, 0
    %v2346 = vsel %vm872, %v2332, 0
    %2348 = vmatpush.msra.mxu0 0.0
    %2349 = vmatpush.msra.mxu0 0.0
    %2350 = vmatpush.msra.mxu0 0.0
    %2351 = vmatpush.msra.mxu0 0.0
    %2352 = vmatpush.msra.mxu0 0.0
    %2353 = vmatpush.msra.mxu0 0.0
    %2354 = vmatpush.msra.mxu0 0.0
    %2355 = vmatpush.msra.mxu0 0.0
    %2356 = vmatpush.msra.mxu0 %v2340
    %2357 = vmatpush.msra.mxu0 %v2339
    %2358 = vmatpush.msra.mxu0 %v2338
    %2359 = vmatpush.msra.mxu0 %v2337
    %2360 = vmatpush.msra.mxu0 %v2336
    %2361 = vmatpush.msra.mxu0 %v2335
    %2362 = vmatpush.msra.mxu0 %v2334
    %2363 = vmatpush.msra.mxu0 %v2333
    %2364 = vmatmul.f32.gmra.mxu0 %v2346
    %v2365 = vpop.f32.mrf.mxu0
    %v2366 = vadd.f32 %v2343, %v2365
    %2367 = vdwg.mxu0
    %v2368 = vadd.f32 %v2300, %v2366
    %v2369 = vld [vmem:[%s91] sm:$0xff]
    %v2370 = vld [vmem:[%s91 + $0x8] sm:$0xff]
    %v2371 = vld [vmem:[%s91 + $0x10] sm:$0xff]
    %v2372 = vld [vmem:[%s91 + $0x18] sm:$0xff]
    %v2373 = vld [vmem:[#allocation2] sm:$0x1]
    %v2375 = vperm.slane %v2373, 0
    %v2378 = vsel %vm427, %v2368, 0
    %2380 = vmatpush.msra.mxu0 0.0
    %2381 = vmatpush.msra.mxu0 0.0
    %2382 = vmatpush.msra.mxu0 0.0
    %2383 = vmatpush.msra.mxu0 0.0
    %2384 = vmatpush.msra.mxu0 0.0
    %2385 = vmatpush.msra.mxu0 0.0
    %2386 = vmatpush.msra.mxu0 0.0
    %2387 = vmatpush.msra.mxu0 0.0
    %2388 = vmatpush.msra.mxu0 0.0
    %2389 = vmatpush.msra.mxu0 0.0
    %2390 = vmatpush.msra.mxu0 0.0
    %2391 = vmatpush.msra.mxu0 0.0
    %2392 = vmatpush.msra.mxu0 %v2372
    %2393 = vmatpush.msra.mxu0 %v2371
    %2394 = vmatpush.msra.mxu0 %v2370
    %2395 = vmatpush.msra.mxu0 %v2369
    %2396 = vmatmul.f32.gmra.mxu0 %v2378
    %v2397 = vpop.f32.mrf.mxu0
    %v2398 = vadd.f32 %v2375, %v2397
    %2399 = vdwg.mxu0
    %v2400 = vld [vmem:[%s95] sm:$0xff]
    %v2401 = vld [vmem:[%s95 + $0x8] sm:$0xff]
    %v2402 = vld [vmem:[%s95 + $0x10] sm:$0xff]
    %v2403 = vld [vmem:[%s95 + $0x18] sm:$0xff]
    %v2404 = vld [vmem:[#allocation5] sm:$0x1]
    %v2406 = vperm.slane %v2404, 0
    %2408 = vmatpush.msra.mxu0 0.0
    %2409 = vmatpush.msra.mxu0 0.0
    %2410 = vmatpush.msra.mxu0 0.0
    %2411 = vmatpush.msra.mxu0 0.0
    %2412 = vmatpush.msra.mxu0 0.0
    %2413 = vmatpush.msra.mxu0 0.0
    %2414 = vmatpush.msra.mxu0 0.0
    %2415 = vmatpush.msra.mxu0 0.0
    %2416 = vmatpush.msra.mxu0 0.0
    %2417 = vmatpush.msra.mxu0 0.0
    %2418 = vmatpush.msra.mxu0 0.0
    %2419 = vmatpush.msra.mxu0 0.0
    %2420 = vmatpush.msra.mxu0 %v2403
    %2421 = vmatpush.msra.mxu0 %v2402
    %2422 = vmatpush.msra.mxu0 %v2401
    %2423 = vmatpush.msra.mxu0 %v2400
    %2424 = vmatmul.f32.gmra.mxu0 %v2378
    %v2425 = vpop.f32.mrf.mxu0
    %v2426 = vadd.f32 %v2406, %v2425
    %2427 = vdwg.mxu0
    %s2428 = scalar_lea.vmem %s99, 16
    %2429 = vst.msk [vmem:[%s2428] sm:$0x3f] %vm1420, %v2398
    %s2430 = scalar_lea.vmem %s101, 16
    %2431 = vst.msk [vmem:[%s2430] sm:$0x3f] %vm1422, %v2426
    %s2432 = scalar_lea.vmem %s11, 16
    %v2433 = vld [vmem:[%s2432] sm:$0x3f]
    %v2434 = vsub.f32 %v2398, %v2433
    %v2435 = vmul.f32 %v2434, %v2434
    %v2436 = vsel %vm1420, %v2435, 0.0
    %2437 = vadd.xlane.f32.xlu0 %v2436
    %v2438 = vpop.xlane.xlu0 %2437
    %v2439 = vrot.slane %v2438, 4
    %v2440 = vadd.f32 %v2438, %v2439
    %v2441 = vrot.slane %v2440, 2
    %v2442 = vadd.f32 %v2440, %v2441
    %v2443 = vrot.slane %v2442, 1
    %v2444 = vadd.f32 %v2442, %v2443
    %s2445 = vtos %v2444
    %v2446 = vstv %s2445
    %v2447 = vadd.f32 %v1937, %v2446
    %s2448 = scalar_lea.vmem %s9, 16
    %v2449 = vld [vmem:[%s2448] sm:$0x3f]
    %vm2450 = vcmp.gt.f32.partialorder %v2449, 0.0
    %v2451 = vsel %vm2450, 2.0, 1.0
    %v2452 = vsub.f32 %v2426, %v2449
    %v2453 = vmul.f32 %v2452, %v2451
    %v2454 = vmul.f32 %v2453, %v2453
    %v2455 = vsel %vm1422, %v2454, 0.0
    %2456 = vadd.xlane.f32.xlu0 %v2455
    %v2457 = vpop.xlane.xlu0 %2456
    %v2458 = vrot.slane %v2457, 4
    %v2459 = vadd.f32 %v2457, %v2458
    %v2460 = vrot.slane %v2459, 2
    %v2461 = vadd.f32 %v2459, %v2460
    %v2462 = vrot.slane %v2461, 1
    %v2463 = vadd.f32 %v2461, %v2462
    %s2464 = vtos %v2463
    %v2465 = vstv %s2464
    %v2466 = vadd.f32 %v1956, %v2465
    %v2467 = vld [vmem:[%s17] sm:$0x3f]
    %v2468 = vld [vmem:[%s21] sm:$0x3]
    %v2470 = vsel %vm1459, %v2398, 0
    %v2473 = vsel %vm1463, %v2468, 0
    %2475 = vmatpush.msra.mxu0 0.0
    %2476 = vmatpush.msra.mxu0 0.0
    %2477 = vmatpush.msra.mxu0 0.0
    %2478 = vmatpush.msra.mxu0 0.0
    %2479 = vmatpush.msra.mxu0 0.0
    %2480 = vmatpush.msra.mxu0 0.0
    %2481 = vmatpush.msra.mxu0 0.0
    %2482 = vmatpush.msra.mxu0 0.0
    %2483 = vmatpush.msra.mxu0 0.0
    %2484 = vmatpush.msra.mxu0 0.0
    %2485 = vmatpush.msra.mxu0 0.0
    %2486 = vmatpush.msra.mxu0 0.0
    %2487 = vmatpush.msra.mxu0 0.0
    %2488 = vmatpush.msra.mxu0 0.0
    %2489 = vmatpush.msra.mxu0 0.0
    %2490 = vmatpush.msra.mxu0 %v2473
    %2491 = vmatmul.f32.gmra.mxu0 %v2470
    %v2492 = vpop.f32.mrf.mxu0
    %v2493 = vadd.f32 0.0, %v2492
    %2494 = vdwg.mxu0
    %v2496 = vsel %vm303, %v2426, 0
    %v2499 = vsel %vm319, %v2467, 0
    %2501 = vmatpush.msra.mxu0 0.0
    %2502 = vmatpush.msra.mxu0 0.0
    %2503 = vmatpush.msra.mxu0 0.0
    %2504 = vmatpush.msra.mxu0 0.0
    %2505 = vmatpush.msra.mxu0 0.0
    %2506 = vmatpush.msra.mxu0 0.0
    %2507 = vmatpush.msra.mxu0 0.0
    %2508 = vmatpush.msra.mxu0 0.0
    %2509 = vmatpush.msra.mxu0 0.0
    %2510 = vmatpush.msra.mxu0 0.0
    %2511 = vmatpush.msra.mxu0 0.0
    %2512 = vmatpush.msra.mxu0 0.0
    %2513 = vmatpush.msra.mxu0 0.0
    %2514 = vmatpush.msra.mxu0 0.0
    %2515 = vmatpush.msra.mxu0 0.0
    %2516 = vmatpush.msra.mxu0 %v2499
    %2517 = vmatmul.f32.gmra.mxu0 %v2496
    %v2518 = vpop.f32.mrf.mxu0
    %v2519 = vadd.f32 %v2493, %v2518
    %2520 = vdwg.mxu0
    %v2521 = vld [vmem:[%s23] sm:$0x1]
    %v2522 = vmul.f32 %v2521, 0.3
    %v2524 = vperm.slane %v2522, 0
    %v2526 = vadd.f32 %v2519, %v2524
    %v2527 = vld [vmem:[%s25] sm:$0x1]
    %v2529 = vperm.slane %v2527, 0
    %v2531 = vadd.f32 %v2526, %v2529
    %v2532 = vmax.f32 %v2531, 0.0
    %v2533 = vld [vmem:[%s55] sm:$0xff]
    %v2534 = vld [vmem:[%s55 + $0x8] sm:$0xff]
    %v2535 = vld [vmem:[%s55 + $0x10] sm:$0xff]
    %v2536 = vld [vmem:[%s55 + $0x18] sm:$0xff]
    %v2537 = vld [vmem:[%s57] sm:$0x1]
    %v2539 = vperm.slane %v2537, 0
    %v2542 = vsel %vm427, %v2532, 0
    %2544 = vmatpush.msra.mxu0 0.0
    %2545 = vmatpush.msra.mxu0 0.0
    %2546 = vmatpush.msra.mxu0 0.0
    %2547 = vmatpush.msra.mxu0 0.0
    %2548 = vmatpush.msra.mxu0 0.0
    %2549 = vmatpush.msra.mxu0 0.0
    %2550 = vmatpush.msra.mxu0 0.0
    %2551 = vmatpush.msra.mxu0 0.0
    %2552 = vmatpush.msra.mxu0 0.0
    %2553 = vmatpush.msra.mxu0 0.0
    %2554 = vmatpush.msra.mxu0 0.0
    %2555 = vmatpush.msra.mxu0 0.0
    %2556 = vmatpush.msra.mxu0 %v2536
    %2557 = vmatpush.msra.mxu0 %v2535
    %2558 = vmatpush.msra.mxu0 %v2534
    %2559 = vmatpush.msra.mxu0 %v2533
    %2560 = vmatmul.f32.gmra.mxu0 %v2542
    %v2561 = vpop.f32.mrf.mxu0
    %v2562 = vadd.f32 %v2539, %v2561
    %2563 = vdwg.mxu0
    %v2564 = vld [vmem:[%s59] sm:$0xff]
    %v2565 = vld [vmem:[%s59 + $0x8] sm:$0xff]
    %v2566 = vld [vmem:[%s59 + $0x10] sm:$0xff]
    %v2567 = vld [vmem:[%s59 + $0x18] sm:$0xff]
    %v2568 = vld [vmem:[%s61] sm:$0x1]
    %v2570 = vperm.slane %v2568, 0
    %2572 = vmatpush.msra.mxu0 0.0
    %2573 = vmatpush.msra.mxu0 0.0
    %2574 = vmatpush.msra.mxu0 0.0
    %2575 = vmatpush.msra.mxu0 0.0
    %2576 = vmatpush.msra.mxu0 0.0
    %2577 = vmatpush.msra.mxu0 0.0
    %2578 = vmatpush.msra.mxu0 0.0
    %2579 = vmatpush.msra.mxu0 0.0
    %2580 = vmatpush.msra.mxu0 0.0
    %2581 = vmatpush.msra.mxu0 0.0
    %2582 = vmatpush.msra.mxu0 0.0
    %2583 = vmatpush.msra.mxu0 0.0
    %2584 = vmatpush.msra.mxu0 %v2567
    %2585 = vmatpush.msra.mxu0 %v2566
    %2586 = vmatpush.msra.mxu0 %v2565
    %2587 = vmatpush.msra.mxu0 %v2564
    %2588 = vmatmul.f32.gmra.mxu0 %v2542
    %v2589 = vpop.f32.mrf.mxu0
    %v2590 = vadd.f32 %v2570, %v2589
    %2591 = vdwg.mxu0
    %v2592 = vld [vmem:[%s51] sm:$0xff]
    %v2593 = vld [vmem:[%s51 + $0x8] sm:$0xff]
    %v2594 = vld [vmem:[%s51 + $0x10] sm:$0xff]
    %v2595 = vld [vmem:[%s51 + $0x18] sm:$0xff]
    %v2596 = vld [vmem:[%s53] sm:$0x1]
    %v2598 = vperm.slane %v2596, 0
    %2600 = vmatpush.msra.mxu0 0.0
    %2601 = vmatpush.msra.mxu0 0.0
    %2602 = vmatpush.msra.mxu0 0.0
    %2603 = vmatpush.msra.mxu0 0.0
    %2604 = vmatpush.msra.mxu0 0.0
    %2605 = vmatpush.msra.mxu0 0.0
    %2606 = vmatpush.msra.mxu0 0.0
    %2607 = vmatpush.msra.mxu0 0.0
    %2608 = vmatpush.msra.mxu0 0.0
    %2609 = vmatpush.msra.mxu0 0.0
    %2610 = vmatpush.msra.mxu0 0.0
    %2611 = vmatpush.msra.mxu0 0.0
    %2612 = vmatpush.msra.mxu0 %v2595
    %2613 = vmatpush.msra.mxu0 %v2594
    %2614 = vmatpush.msra.mxu0 %v2593
    %2615 = vmatpush.msra.mxu0 %v2592
    %2616 = vmatmul.f32.gmra.mxu0 %v2542
    %v2617 = vpop.f32.mrf.mxu0
    %v2618 = vadd.f32 %v2598, %v2617
    %2619 = vdwg.mxu0
    %v2620 = vmul.f32 %v2618, %v1049
    %v2621 = vsel %vm1108, %v2620, 0.0
    %2622 = vadd.xlane.f32.xlu0 %v2621
    %v2623 = vpop.xlane.xlu0 %2622
    %v2624 = vmul.f32 %v2623, 0.17677669
    %v2625 = vmul.f32 %v2618, %v1554
    %v2626 = vsel %vm1108, %v2625, 0.0
    %2627 = vadd.xlane.f32.xlu0 %v2626
    %v2628 = vpop.xlane.xlu0 %2627
    %v2629 = vmul.f32 %v2628, 0.17677669
    %v2630 = vmul.f32 %v2618, %v2052
    %v2631 = vsel %vm1108, %v2630, 0.0
    %2632 = vadd.xlane.f32.xlu0 %v2631
    %v2633 = vpop.xlane.xlu0 %2632
    %v2634 = vmul.f32 %v2633, 0.17677669
    %v2635 = vmul.f32 %v2618, %v2562
    %v2636 = vsel %vm1108, %v2635, 0.0
    %2637 = vadd.xlane.f32.xlu0 %v2636
    %v2638 = vpop.xlane.xlu0 %2637
    %v2639 = vmul.f32 %v2638, 0.17677669
    %v2640 = vmax.f32 %v2624, %v2629
    %v2641 = vmax.f32 %v2640, %v2634
    %v2642 = vmax.f32 %v2641, %v2639
    %v2643 = vsub.f32 %v2624, %v2642
    %v2644 = vmul.f32 %v2643, 1.442695
    %v2645 = vpow.pop %v2644
    %v2646 = vsub.f32 %v2629, %v2642
    %v2647 = vmul.f32 %v2646, 1.442695
    %v2648 = vpow.pop %v2647
    %v2649 = vsub.f32 %v2634, %v2642
    %v2650 = vmul.f32 %v2649, 1.442695
    %v2651 = vpow.pop %v2650
    %v2652 = vsub.f32 %v2639, %v2642
    %v2653 = vmul.f32 %v2652, 1.442695
    %v2654 = vpow.pop %v2653
    %v2655 = vadd.f32 %v2645, %v2648
    %v2656 = vadd.f32 %v2655, %v2651
    %v2657 = vadd.f32 %v2656, %v2654
    %v2658 = vmul.f32 %v2645, %v1077
    %v2659 = vmul.f32 %v2648, %v1582
    %v2660 = vadd.f32 %v2658, %v2659
    %v2661 = vmul.f32 %v2651, %v2080
    %v2662 = vadd.f32 %v2660, %v2661
    %v2663 = vmul.f32 %v2654, %v2590
    %v2664 = vadd.f32 %v2662, %v2663
    %v2665 = vrcp.pop %v2657
    %v2666 = vmul.f32 %v2664, %v2665
    %v2667 = vld [vmem:[%s63] sm:$0xff]
    %v2668 = vld [vmem:[%s63 + $0x8] sm:$0xff]
    %v2669 = vld [vmem:[%s63 + $0x10] sm:$0xff]
    %v2670 = vld [vmem:[%s63 + $0x18] sm:$0xff]
    %v2671 = vld [vmem:[%s65] sm:$0x1]
    %v2673 = vperm.slane %v2671, 0
    %v2676 = vsel %vm427, %v2666, 0
    %2678 = vmatpush.msra.mxu0 0.0
    %2679 = vmatpush.msra.mxu0 0.0
    %2680 = vmatpush.msra.mxu0 0.0
    %2681 = vmatpush.msra.mxu0 0.0
    %2682 = vmatpush.msra.mxu0 0.0
    %2683 = vmatpush.msra.mxu0 0.0
    %2684 = vmatpush.msra.mxu0 0.0
    %2685 = vmatpush.msra.mxu0 0.0
    %2686 = vmatpush.msra.mxu0 0.0
    %2687 = vmatpush.msra.mxu0 0.0
    %2688 = vmatpush.msra.mxu0 0.0
    %2689 = vmatpush.msra.mxu0 0.0
    %2690 = vmatpush.msra.mxu0 %v2670
    %2691 = vmatpush.msra.mxu0 %v2669
    %2692 = vmatpush.msra.mxu0 %v2668
    %2693 = vmatpush.msra.mxu0 %v2667
    %2694 = vmatmul.f32.gmra.mxu0 %v2676
    %v2695 = vpop.f32.mrf.mxu0
    %v2696 = vadd.f32 %v2673, %v2695
    %2697 = vdwg.mxu0
    %v2698 = vadd.f32 %v2696, %v2532
    %v2699 = vld [vmem:[%s67] sm:$0xff]
    %v2700 = vld [vmem:[%s67 + $0x8] sm:$0xff]
    %v2701 = vld [vmem:[%s67 + $0x10] sm:$0xff]
    %v2702 = vld [vmem:[%s67 + $0x18] sm:$0xff]
    %v2703 = vld [vmem:[%s69] sm:$0x1]
    %v2705 = vperm.slane %v2703, 0
    %v2708 = vsel %vm427, %v2698, 0
    %2710 = vmatpush.msra.mxu0 0.0
    %2711 = vmatpush.msra.mxu0 0.0
    %2712 = vmatpush.msra.mxu0 0.0
    %2713 = vmatpush.msra.mxu0 0.0
    %2714 = vmatpush.msra.mxu0 0.0
    %2715 = vmatpush.msra.mxu0 0.0
    %2716 = vmatpush.msra.mxu0 0.0
    %2717 = vmatpush.msra.mxu0 0.0
    %2718 = vmatpush.msra.mxu0 0.0
    %2719 = vmatpush.msra.mxu0 0.0
    %2720 = vmatpush.msra.mxu0 0.0
    %2721 = vmatpush.msra.mxu0 0.0
    %2722 = vmatpush.msra.mxu0 %v2702
    %2723 = vmatpush.msra.mxu0 %v2701
    %2724 = vmatpush.msra.mxu0 %v2700
    %2725 = vmatpush.msra.mxu0 %v2699
    %2726 = vmatmul.f32.gmra.mxu0 %v2708
    %v2727 = vpop.f32.mrf.mxu0
    %v2728 = vadd.f32 %v2705, %v2727
    %2729 = vdwg.mxu0
    %v2731 = vsel %vm427, %v2728, 0
    %2733 = vmatpush.xpose.msra.mxu0 0.0
    %2734 = vmatpush.xpose.msra.mxu0 0.0
    %2735 = vmatpush.xpose.msra.mxu0 0.0
    %2736 = vmatpush.xpose.msra.mxu0 0.0
    %2737 = vmatpush.xpose.msra.mxu0 0.0
    %2738 = vmatpush.xpose.msra.mxu0 0.0
    %2739 = vmatpush.xpose.msra.mxu0 0.0
    %2740 = vmatpush.xpose.msra.mxu0 0.0
    %2741 = vmatpush.xpose.msra.mxu0 0.0
    %2742 = vmatpush.xpose.msra.mxu0 0.0
    %2743 = vmatpush.xpose.msra.mxu0 0.0
    %2744 = vmatpush.xpose.msra.mxu0 %v1198
    %2745 = vmatpush.xpose.msra.mxu0 %v1195
    %2746 = vmatpush.xpose.msra.mxu0 %v1192
    %2747 = vmatpush.xpose.msra.mxu0 %v1189
    %2748 = vmatpush.xpose.msra.mxu0 %v1186
    %2749 = vmatmul.f32.gmra.mxu0 %v2731
    %v2750 = vpop.f32.mrf.mxu0
    %v2751 = vadd.f32 0.0, %v2750
    %2752 = vdwg.mxu0
    %v2753 = vmul.f32 %v2751, 0.17677669
    %s2754 = scalar_lea.vmem %s15, 24
    %v2755 = vld [vmem:[%s2754] sm:$0x3f]
    %v2756 = vadd.f32 %v2753, %v2755
    %v2757 = vsel %vm1223, %v2756, -inf
    %2758 = vmax.xlane.f32.xlu0 %v2757
    %v2759 = vpop.xlane.xlu0 %2758
    %v2760 = vsub.f32 %v2756, %v2759
    %v2761 = vmul.f32 %v2760, 1.442695
    %v2762 = vpow.pop %v2761
    %v2763 = vsel %vm1223, %v2762, 0.0
    %2764 = vadd.xlane.f32.xlu0 %v2763
    %v2765 = vpop.xlane.xlu0 %2764
    %v2766 = vrcp.pop %v2765
    %v2767 = vmul.f32 %v2762, %v2766
    %v2769 = vsel %vm632, %v2767, 0
    %2771 = vmatpush.msra.mxu0 0.0
    %2772 = vmatpush.msra.mxu0 0.0
    %2773 = vmatpush.msra.mxu0 0.0
    %2774 = vmatpush.msra.mxu0 0.0
    %2775 = vmatpush.msra.mxu0 0.0
    %2776 = vmatpush.msra.mxu0 0.0
    %2777 = vmatpush.msra.mxu0 0.0
    %2778 = vmatpush.msra.mxu0 0.0
    %2779 = vmatpush.msra.mxu0 0.0
    %2780 = vmatpush.msra.mxu0 0.0
    %2781 = vmatpush.msra.mxu0 0.0
    %2782 = vmatpush.msra.mxu0 %v1239
    %2783 = vmatpush.msra.mxu0 %v1015
    %2784 = vmatpush.msra.mxu0 %v1012
    %2785 = vmatpush.msra.mxu0 %v1009
    %2786 = vmatpush.msra.mxu0 %v1006
    %2787 = vmatmul.f32.gmra.mxu0 %v2769
    %v2788 = vpop.f32.mrf.mxu0
    %v2789 = vadd.f32 0.0, %v2788
    %2790 = vdwg.mxu0
    %v2791 = vld [vmem:[%s79] sm:$0xff]
    %v2792 = vld [vmem:[%s79 + $0x8] sm:$0xff]
    %v2793 = vld [vmem:[%s79 + $0x10] sm:$0xff]
    %v2794 = vld [vmem:[%s79 + $0x18] sm:$0xff]
    %v2795 = vld [vmem:[%s81] sm:$0x1]
    %v2797 = vperm.slane %v2795, 0
    %v2800 = vsel %vm427, %v2789, 0
    %2802 = vmatpush.msra.mxu0 0.0
    %2803 = vmatpush.msra.mxu0 0.0
    %2804 = vmatpush.msra.mxu0 0.0
    %2805 = vmatpush.msra.mxu0 0.0
    %2806 = vmatpush.msra.mxu0 0.0
    %2807 = vmatpush.msra.mxu0 0.0
    %2808 = vmatpush.msra.mxu0 0.0
    %2809 = vmatpush.msra.mxu0 0.0
    %2810 = vmatpush.msra.mxu0 0.0
    %2811 = vmatpush.msra.mxu0 0.0
    %2812 = vmatpush.msra.mxu0 0.0
    %2813 = vmatpush.msra.mxu0 0.0
    %2814 = vmatpush.msra.mxu0 %v2794
    %2815 = vmatpush.msra.mxu0 %v2793
    %2816 = vmatpush.msra.mxu0 %v2792
    %2817 = vmatpush.msra.mxu0 %v2791
    %2818 = vmatmul.f32.gmra.mxu0 %v2800
    %v2819 = vpop.f32.mrf.mxu0
    %v2820 = vadd.f32 %v2797, %v2819
    %2821 = vdwg.mxu0
    %v2822 = vadd.f32 %v2698, %v2820
    %v2823 = vld [vmem:[%s83] sm:$0xff]
    %v2824 = vld [vmem:[%s83 + $0x8] sm:$0xff]
    %v2825 = vld [vmem:[%s83 + $0x10] sm:$0xff]
    %v2826 = vld [vmem:[%s83 + $0x18] sm:$0xff]
    %v2827 = vld [vmem:[%s85] sm:$0x1]
    %v2829 = vperm.slane %v2827, 0
    %v2832 = vsel %vm427, %v2822, 0
    %2834 = vmatpush.msra.mxu0 0.0
    %2835 = vmatpush.msra.mxu0 0.0
    %2836 = vmatpush.msra.mxu0 0.0
    %2837 = vmatpush.msra.mxu0 0.0
    %2838 = vmatpush.msra.mxu0 0.0
    %2839 = vmatpush.msra.mxu0 0.0
    %2840 = vmatpush.msra.mxu0 0.0
    %2841 = vmatpush.msra.mxu0 0.0
    %2842 = vmatpush.msra.mxu0 0.0
    %2843 = vmatpush.msra.mxu0 0.0
    %2844 = vmatpush.msra.mxu0 0.0
    %2845 = vmatpush.msra.mxu0 0.0
    %2846 = vmatpush.msra.mxu0 %v2826
    %2847 = vmatpush.msra.mxu0 %v2825
    %2848 = vmatpush.msra.mxu0 %v2824
    %2849 = vmatpush.msra.mxu0 %v2823
    %2850 = vmatmul.f32.gmra.mxu0 %v2832
    %v2851 = vpop.f32.mrf.mxu0
    %v2852 = vadd.f32 %v2829, %v2851
    %2853 = vdwg.mxu0
    %v2854 = vmax.f32 %v2852, 0.0
    %v2855 = vld [vmem:[%s87] sm:$0xff]
    %v2856 = vld [vmem:[%s87 + $0x8] sm:$0xff]
    %v2857 = vld [vmem:[%s87 + $0x10] sm:$0xff]
    %v2858 = vld [vmem:[%s87 + $0x18] sm:$0xff]
    %v2859 = vld [vmem:[%s87 + $0x20] sm:$0xff]
    %v2860 = vld [vmem:[%s87 + $0x28] sm:$0xff]
    %v2861 = vld [vmem:[%s87 + $0x30] sm:$0xff]
    %v2862 = vld [vmem:[%s87 + $0x38] sm:$0xff]
    %v2863 = vld [vmem:[%s89] sm:$0x1]
    %v2865 = vperm.slane %v2863, 0
    %v2868 = vsel %vm872, %v2854, 0
    %2870 = vmatpush.msra.mxu0 0.0
    %2871 = vmatpush.msra.mxu0 0.0
    %2872 = vmatpush.msra.mxu0 0.0
    %2873 = vmatpush.msra.mxu0 0.0
    %2874 = vmatpush.msra.mxu0 0.0
    %2875 = vmatpush.msra.mxu0 0.0
    %2876 = vmatpush.msra.mxu0 0.0
    %2877 = vmatpush.msra.mxu0 0.0
    %2878 = vmatpush.msra.mxu0 %v2862
    %2879 = vmatpush.msra.mxu0 %v2861
    %2880 = vmatpush.msra.mxu0 %v2860
    %2881 = vmatpush.msra.mxu0 %v2859
    %2882 = vmatpush.msra.mxu0 %v2858
    %2883 = vmatpush.msra.mxu0 %v2857
    %2884 = vmatpush.msra.mxu0 %v2856
    %2885 = vmatpush.msra.mxu0 %v2855
    %2886 = vmatmul.f32.gmra.mxu0 %v2868
    %v2887 = vpop.f32.mrf.mxu0
    %v2888 = vadd.f32 %v2865, %v2887
    %2889 = vdwg.mxu0
    %v2890 = vadd.f32 %v2822, %v2888
    %v2891 = vld [vmem:[%s91] sm:$0xff]
    %v2892 = vld [vmem:[%s91 + $0x8] sm:$0xff]
    %v2893 = vld [vmem:[%s91 + $0x10] sm:$0xff]
    %v2894 = vld [vmem:[%s91 + $0x18] sm:$0xff]
    %v2895 = vld [vmem:[#allocation2] sm:$0x1]
    %v2897 = vperm.slane %v2895, 0
    %v2900 = vsel %vm427, %v2890, 0
    %2902 = vmatpush.msra.mxu0 0.0
    %2903 = vmatpush.msra.mxu0 0.0
    %2904 = vmatpush.msra.mxu0 0.0
    %2905 = vmatpush.msra.mxu0 0.0
    %2906 = vmatpush.msra.mxu0 0.0
    %2907 = vmatpush.msra.mxu0 0.0
    %2908 = vmatpush.msra.mxu0 0.0
    %2909 = vmatpush.msra.mxu0 0.0
    %2910 = vmatpush.msra.mxu0 0.0
    %2911 = vmatpush.msra.mxu0 0.0
    %2912 = vmatpush.msra.mxu0 0.0
    %2913 = vmatpush.msra.mxu0 0.0
    %2914 = vmatpush.msra.mxu0 %v2894
    %2915 = vmatpush.msra.mxu0 %v2893
    %2916 = vmatpush.msra.mxu0 %v2892
    %2917 = vmatpush.msra.mxu0 %v2891
    %2918 = vmatmul.f32.gmra.mxu0 %v2900
    %v2919 = vpop.f32.mrf.mxu0
    %v2920 = vadd.f32 %v2897, %v2919
    %2921 = vdwg.mxu0
    %v2922 = vld [vmem:[%s95] sm:$0xff]
    %v2923 = vld [vmem:[%s95 + $0x8] sm:$0xff]
    %v2924 = vld [vmem:[%s95 + $0x10] sm:$0xff]
    %v2925 = vld [vmem:[%s95 + $0x18] sm:$0xff]
    %v2926 = vld [vmem:[#allocation5] sm:$0x1]
    %v2928 = vperm.slane %v2926, 0
    %2930 = vmatpush.msra.mxu0 0.0
    %2931 = vmatpush.msra.mxu0 0.0
    %2932 = vmatpush.msra.mxu0 0.0
    %2933 = vmatpush.msra.mxu0 0.0
    %2934 = vmatpush.msra.mxu0 0.0
    %2935 = vmatpush.msra.mxu0 0.0
    %2936 = vmatpush.msra.mxu0 0.0
    %2937 = vmatpush.msra.mxu0 0.0
    %2938 = vmatpush.msra.mxu0 0.0
    %2939 = vmatpush.msra.mxu0 0.0
    %2940 = vmatpush.msra.mxu0 0.0
    %2941 = vmatpush.msra.mxu0 0.0
    %2942 = vmatpush.msra.mxu0 %v2925
    %2943 = vmatpush.msra.mxu0 %v2924
    %2944 = vmatpush.msra.mxu0 %v2923
    %2945 = vmatpush.msra.mxu0 %v2922
    %2946 = vmatmul.f32.gmra.mxu0 %v2900
    %v2947 = vpop.f32.mrf.mxu0
    %v2948 = vadd.f32 %v2928, %v2947
    %2949 = vdwg.mxu0
    %s2950 = scalar_lea.vmem %s99, 24
    %2951 = vst.msk [vmem:[%s2950] sm:$0x3f] %vm1420, %v2920
    %s2952 = scalar_lea.vmem %s101, 24
    %2953 = vst.msk [vmem:[%s2952] sm:$0x3f] %vm1422, %v2948
    %s2954 = scalar_lea.vmem %s11, 24
    %v2955 = vld [vmem:[%s2954] sm:$0x3f]
    %v2956 = vsub.f32 %v2920, %v2955
    %v2957 = vmul.f32 %v2956, %v2956
    %v2958 = vsel %vm1420, %v2957, 0.0
    %2959 = vadd.xlane.f32.xlu0 %v2958
    %v2960 = vpop.xlane.xlu0 %2959
    %v2961 = vrot.slane %v2960, 4
    %v2962 = vadd.f32 %v2960, %v2961
    %v2963 = vrot.slane %v2962, 2
    %v2964 = vadd.f32 %v2962, %v2963
    %v2965 = vrot.slane %v2964, 1
    %v2966 = vadd.f32 %v2964, %v2965
    %s2967 = vtos %v2966
    %v2968 = vstv %s2967
    %v2969 = vadd.f32 %v2447, %v2968
    %s2970 = scalar_lea.vmem %s9, 24
    %v2971 = vld [vmem:[%s2970] sm:$0x3f]
    %vm2972 = vcmp.gt.f32.partialorder %v2971, 0.0
    %v2973 = vsel %vm2972, 2.0, 1.0
    %v2974 = vsub.f32 %v2948, %v2971
    %v2975 = vmul.f32 %v2974, %v2973
    %v2976 = vmul.f32 %v2975, %v2975
    %v2977 = vsel %vm1422, %v2976, 0.0
    %2978 = vadd.xlane.f32.xlu0 %v2977
    %v2979 = vpop.xlane.xlu0 %2978
    %v2980 = vrot.slane %v2979, 4
    %v2981 = vadd.f32 %v2979, %v2980
    %v2982 = vrot.slane %v2981, 2
    %v2983 = vadd.f32 %v2981, %v2982
    %v2984 = vrot.slane %v2983, 1
    %v2985 = vadd.f32 %v2983, %v2984
    %s2986 = vtos %v2985
    %v2987 = vstv %s2986
    %v2988 = vadd.f32 %v2466, %v2987
    %v2989 = vld [vmem:[%s17] sm:$0x3f]
    %v2990 = vld [vmem:[%s21] sm:$0x3]
    %v2992 = vsel %vm1459, %v2920, 0
    %v2995 = vsel %vm1463, %v2990, 0
    %2997 = vmatpush.msra.mxu0 0.0
    %2998 = vmatpush.msra.mxu0 0.0
    %2999 = vmatpush.msra.mxu0 0.0
    %3000 = vmatpush.msra.mxu0 0.0
    %3001 = vmatpush.msra.mxu0 0.0
    %3002 = vmatpush.msra.mxu0 0.0
    %3003 = vmatpush.msra.mxu0 0.0
    %3004 = vmatpush.msra.mxu0 0.0
    %3005 = vmatpush.msra.mxu0 0.0
    %3006 = vmatpush.msra.mxu0 0.0
    %3007 = vmatpush.msra.mxu0 0.0
    %3008 = vmatpush.msra.mxu0 0.0
    %3009 = vmatpush.msra.mxu0 0.0
    %3010 = vmatpush.msra.mxu0 0.0
    %3011 = vmatpush.msra.mxu0 0.0
    %3012 = vmatpush.msra.mxu0 %v2995
    %3013 = vmatmul.f32.gmra.mxu0 %v2992
    %v3014 = vpop.f32.mrf.mxu0
    %v3015 = vadd.f32 0.0, %v3014
    %3016 = vdwg.mxu0
    %v3018 = vsel %vm303, %v2948, 0
    %v3021 = vsel %vm319, %v2989, 0
    %3023 = vmatpush.msra.mxu0 0.0
    %3024 = vmatpush.msra.mxu0 0.0
    %3025 = vmatpush.msra.mxu0 0.0
    %3026 = vmatpush.msra.mxu0 0.0
    %3027 = vmatpush.msra.mxu0 0.0
    %3028 = vmatpush.msra.mxu0 0.0
    %3029 = vmatpush.msra.mxu0 0.0
    %3030 = vmatpush.msra.mxu0 0.0
    %3031 = vmatpush.msra.mxu0 0.0
    %3032 = vmatpush.msra.mxu0 0.0
    %3033 = vmatpush.msra.mxu0 0.0
    %3034 = vmatpush.msra.mxu0 0.0
    %3035 = vmatpush.msra.mxu0 0.0
    %3036 = vmatpush.msra.mxu0 0.0
    %3037 = vmatpush.msra.mxu0 0.0
    %3038 = vmatpush.msra.mxu0 %v3021
    %3039 = vmatmul.f32.gmra.mxu0 %v3018
    %v3040 = vpop.f32.mrf.mxu0
    %v3041 = vadd.f32 %v3015, %v3040
    %3042 = vdwg.mxu0
    %v3043 = vld [vmem:[%s23] sm:$0x1]
    %v3044 = vmul.f32 %v3043, 0.4
    %v3046 = vperm.slane %v3044, 0
    %v3048 = vadd.f32 %v3041, %v3046
    %v3049 = vld [vmem:[%s25] sm:$0x1]
    %v3051 = vperm.slane %v3049, 0
    %v3053 = vadd.f32 %v3048, %v3051
    %v3054 = vmax.f32 %v3053, 0.0
    %v3055 = vld [vmem:[%s55] sm:$0xff]
    %v3056 = vld [vmem:[%s55 + $0x8] sm:$0xff]
    %v3057 = vld [vmem:[%s55 + $0x10] sm:$0xff]
    %v3058 = vld [vmem:[%s55 + $0x18] sm:$0xff]
    %v3059 = vld [vmem:[%s57] sm:$0x1]
    %v3061 = vperm.slane %v3059, 0
    %v3064 = vsel %vm427, %v3054, 0
    %3066 = vmatpush.msra.mxu0 0.0
    %3067 = vmatpush.msra.mxu0 0.0
    %3068 = vmatpush.msra.mxu0 0.0
    %3069 = vmatpush.msra.mxu0 0.0
    %3070 = vmatpush.msra.mxu0 0.0
    %3071 = vmatpush.msra.mxu0 0.0
    %3072 = vmatpush.msra.mxu0 0.0
    %3073 = vmatpush.msra.mxu0 0.0
    %3074 = vmatpush.msra.mxu0 0.0
    %3075 = vmatpush.msra.mxu0 0.0
    %3076 = vmatpush.msra.mxu0 0.0
    %3077 = vmatpush.msra.mxu0 0.0
    %3078 = vmatpush.msra.mxu0 %v3058
    %3079 = vmatpush.msra.mxu0 %v3057
    %3080 = vmatpush.msra.mxu0 %v3056
    %3081 = vmatpush.msra.mxu0 %v3055
    %3082 = vmatmul.f32.gmra.mxu0 %v3064
    %v3083 = vpop.f32.mrf.mxu0
    %v3084 = vadd.f32 %v3061, %v3083
    %3085 = vdwg.mxu0
    %v3086 = vld [vmem:[%s59] sm:$0xff]
    %v3087 = vld [vmem:[%s59 + $0x8] sm:$0xff]
    %v3088 = vld [vmem:[%s59 + $0x10] sm:$0xff]
    %v3089 = vld [vmem:[%s59 + $0x18] sm:$0xff]
    %v3090 = vld [vmem:[%s61] sm:$0x1]
    %v3092 = vperm.slane %v3090, 0
    %3094 = vmatpush.msra.mxu0 0.0
    %3095 = vmatpush.msra.mxu0 0.0
    %3096 = vmatpush.msra.mxu0 0.0
    %3097 = vmatpush.msra.mxu0 0.0
    %3098 = vmatpush.msra.mxu0 0.0
    %3099 = vmatpush.msra.mxu0 0.0
    %3100 = vmatpush.msra.mxu0 0.0
    %3101 = vmatpush.msra.mxu0 0.0
    %3102 = vmatpush.msra.mxu0 0.0
    %3103 = vmatpush.msra.mxu0 0.0
    %3104 = vmatpush.msra.mxu0 0.0
    %3105 = vmatpush.msra.mxu0 0.0
    %3106 = vmatpush.msra.mxu0 %v3089
    %3107 = vmatpush.msra.mxu0 %v3088
    %3108 = vmatpush.msra.mxu0 %v3087
    %3109 = vmatpush.msra.mxu0 %v3086
    %3110 = vmatmul.f32.gmra.mxu0 %v3064
    %v3111 = vpop.f32.mrf.mxu0
    %v3112 = vadd.f32 %v3092, %v3111
    %3113 = vdwg.mxu0
    %v3114 = vld [vmem:[%s51] sm:$0xff]
    %v3115 = vld [vmem:[%s51 + $0x8] sm:$0xff]
    %v3116 = vld [vmem:[%s51 + $0x10] sm:$0xff]
    %v3117 = vld [vmem:[%s51 + $0x18] sm:$0xff]
    %v3118 = vld [vmem:[%s53] sm:$0x1]
    %v3120 = vperm.slane %v3118, 0
    %3122 = vmatpush.msra.mxu0 0.0
    %3123 = vmatpush.msra.mxu0 0.0
    %3124 = vmatpush.msra.mxu0 0.0
    %3125 = vmatpush.msra.mxu0 0.0
    %3126 = vmatpush.msra.mxu0 0.0
    %3127 = vmatpush.msra.mxu0 0.0
    %3128 = vmatpush.msra.mxu0 0.0
    %3129 = vmatpush.msra.mxu0 0.0
    %3130 = vmatpush.msra.mxu0 0.0
    %3131 = vmatpush.msra.mxu0 0.0
    %3132 = vmatpush.msra.mxu0 0.0
    %3133 = vmatpush.msra.mxu0 0.0
    %3134 = vmatpush.msra.mxu0 %v3117
    %3135 = vmatpush.msra.mxu0 %v3116
    %3136 = vmatpush.msra.mxu0 %v3115
    %3137 = vmatpush.msra.mxu0 %v3114
    %3138 = vmatmul.f32.gmra.mxu0 %v3064
    %v3139 = vpop.f32.mrf.mxu0
    %v3140 = vadd.f32 %v3120, %v3139
    %3141 = vdwg.mxu0
    %v3142 = vmul.f32 %v3140, %v1049
    %v3143 = vsel %vm1108, %v3142, 0.0
    %3144 = vadd.xlane.f32.xlu0 %v3143
    %v3145 = vpop.xlane.xlu0 %3144
    %v3146 = vmul.f32 %v3145, 0.17677669
    %v3147 = vmul.f32 %v3140, %v1554
    %v3148 = vsel %vm1108, %v3147, 0.0
    %3149 = vadd.xlane.f32.xlu0 %v3148
    %v3150 = vpop.xlane.xlu0 %3149
    %v3151 = vmul.f32 %v3150, 0.17677669
    %v3152 = vmul.f32 %v3140, %v2052
    %v3153 = vsel %vm1108, %v3152, 0.0
    %3154 = vadd.xlane.f32.xlu0 %v3153
    %v3155 = vpop.xlane.xlu0 %3154
    %v3156 = vmul.f32 %v3155, 0.17677669
    %v3157 = vmul.f32 %v3140, %v2562
    %v3158 = vsel %vm1108, %v3157, 0.0
    %3159 = vadd.xlane.f32.xlu0 %v3158
    %v3160 = vpop.xlane.xlu0 %3159
    %v3161 = vmul.f32 %v3160, 0.17677669
    %v3162 = vmul.f32 %v3140, %v3084
    %v3163 = vsel %vm1108, %v3162, 0.0
    %3164 = vadd.xlane.f32.xlu0 %v3163
    %v3165 = vpop.xlane.xlu0 %3164
    %v3166 = vmul.f32 %v3165, 0.17677669
    %v3167 = vmax.f32 %v3146, %v3151
    %v3168 = vmax.f32 %v3167, %v3156
    %v3169 = vmax.f32 %v3168, %v3161
    %v3170 = vmax.f32 %v3169, %v3166
    %v3171 = vsub.f32 %v3146, %v3170
    %v3172 = vmul.f32 %v3171, 1.442695
    %v3173 = vpow.pop %v3172
    %v3174 = vsub.f32 %v3151, %v3170
    %v3175 = vmul.f32 %v3174, 1.442695
    %v3176 = vpow.pop %v3175
    %v3177 = vsub.f32 %v3156, %v3170
    %v3178 = vmul.f32 %v3177, 1.442695
    %v3179 = vpow.pop %v3178
    %v3180 = vsub.f32 %v3161, %v3170
    %v3181 = vmul.f32 %v3180, 1.442695
    %v3182 = vpow.pop %v3181
    %v3183 = vsub.f32 %v3166, %v3170
    %v3184 = vmul.f32 %v3183, 1.442695
    %v3185 = vpow.pop %v3184
    %v3186 = vadd.f32 %v3173, %v3176
    %v3187 = vadd.f32 %v3186, %v3179
    %v3188 = vadd.f32 %v3187, %v3182
    %v3189 = vadd.f32 %v3188, %v3185
    %v3190 = vmul.f32 %v3173, %v1077
    %v3191 = vmul.f32 %v3176, %v1582
    %v3192 = vadd.f32 %v3190, %v3191
    %v3193 = vmul.f32 %v3179, %v2080
    %v3194 = vadd.f32 %v3192, %v3193
    %v3195 = vmul.f32 %v3182, %v2590
    %v3196 = vadd.f32 %v3194, %v3195
    %v3197 = vmul.f32 %v3185, %v3112
    %v3198 = vadd.f32 %v3196, %v3197
    %v3199 = vrcp.pop %v3189
    %v3200 = vmul.f32 %v3198, %v3199
    %v3201 = vld [vmem:[%s63] sm:$0xff]
    %v3202 = vld [vmem:[%s63 + $0x8] sm:$0xff]
    %v3203 = vld [vmem:[%s63 + $0x10] sm:$0xff]
    %v3204 = vld [vmem:[%s63 + $0x18] sm:$0xff]
    %v3205 = vld [vmem:[%s65] sm:$0x1]
    %v3207 = vperm.slane %v3205, 0
    %v3210 = vsel %vm427, %v3200, 0
    %3212 = vmatpush.msra.mxu0 0.0
    %3213 = vmatpush.msra.mxu0 0.0
    %3214 = vmatpush.msra.mxu0 0.0
    %3215 = vmatpush.msra.mxu0 0.0
    %3216 = vmatpush.msra.mxu0 0.0
    %3217 = vmatpush.msra.mxu0 0.0
    %3218 = vmatpush.msra.mxu0 0.0
    %3219 = vmatpush.msra.mxu0 0.0
    %3220 = vmatpush.msra.mxu0 0.0
    %3221 = vmatpush.msra.mxu0 0.0
    %3222 = vmatpush.msra.mxu0 0.0
    %3223 = vmatpush.msra.mxu0 0.0
    %3224 = vmatpush.msra.mxu0 %v3204
    %3225 = vmatpush.msra.mxu0 %v3203
    %3226 = vmatpush.msra.mxu0 %v3202
    %3227 = vmatpush.msra.mxu0 %v3201
    %3228 = vmatmul.f32.gmra.mxu0 %v3210
    %v3229 = vpop.f32.mrf.mxu0
    %v3230 = vadd.f32 %v3207, %v3229
    %3231 = vdwg.mxu0
    %v3232 = vadd.f32 %v3230, %v3054
    %v3233 = vld [vmem:[%s67] sm:$0xff]
    %v3234 = vld [vmem:[%s67 + $0x8] sm:$0xff]
    %v3235 = vld [vmem:[%s67 + $0x10] sm:$0xff]
    %v3236 = vld [vmem:[%s67 + $0x18] sm:$0xff]
    %v3237 = vld [vmem:[%s69] sm:$0x1]
    %v3239 = vperm.slane %v3237, 0
    %v3242 = vsel %vm427, %v3232, 0
    %3244 = vmatpush.msra.mxu0 0.0
    %3245 = vmatpush.msra.mxu0 0.0
    %3246 = vmatpush.msra.mxu0 0.0
    %3247 = vmatpush.msra.mxu0 0.0
    %3248 = vmatpush.msra.mxu0 0.0
    %3249 = vmatpush.msra.mxu0 0.0
    %3250 = vmatpush.msra.mxu0 0.0
    %3251 = vmatpush.msra.mxu0 0.0
    %3252 = vmatpush.msra.mxu0 0.0
    %3253 = vmatpush.msra.mxu0 0.0
    %3254 = vmatpush.msra.mxu0 0.0
    %3255 = vmatpush.msra.mxu0 0.0
    %3256 = vmatpush.msra.mxu0 %v3236
    %3257 = vmatpush.msra.mxu0 %v3235
    %3258 = vmatpush.msra.mxu0 %v3234
    %3259 = vmatpush.msra.mxu0 %v3233
    %3260 = vmatmul.f32.gmra.mxu0 %v3242
    %v3261 = vpop.f32.mrf.mxu0
    %v3262 = vadd.f32 %v3239, %v3261
    %3263 = vdwg.mxu0
    %v3265 = vsel %vm427, %v3262, 0
    %3267 = vmatpush.xpose.msra.mxu0 0.0
    %3268 = vmatpush.xpose.msra.mxu0 0.0
    %3269 = vmatpush.xpose.msra.mxu0 0.0
    %3270 = vmatpush.xpose.msra.mxu0 0.0
    %3271 = vmatpush.xpose.msra.mxu0 0.0
    %3272 = vmatpush.xpose.msra.mxu0 0.0
    %3273 = vmatpush.xpose.msra.mxu0 0.0
    %3274 = vmatpush.xpose.msra.mxu0 0.0
    %3275 = vmatpush.xpose.msra.mxu0 0.0
    %3276 = vmatpush.xpose.msra.mxu0 0.0
    %3277 = vmatpush.xpose.msra.mxu0 0.0
    %3278 = vmatpush.xpose.msra.mxu0 %v1198
    %3279 = vmatpush.xpose.msra.mxu0 %v1195
    %3280 = vmatpush.xpose.msra.mxu0 %v1192
    %3281 = vmatpush.xpose.msra.mxu0 %v1189
    %3282 = vmatpush.xpose.msra.mxu0 %v1186
    %3283 = vmatmul.f32.gmra.mxu0 %v3265
    %v3284 = vpop.f32.mrf.mxu0
    %v3285 = vadd.f32 0.0, %v3284
    %3286 = vdwg.mxu0
    %v3287 = vmul.f32 %v3285, 0.17677669
    %s3288 = scalar_lea.vmem %s15, 32
    %v3289 = vld [vmem:[%s3288] sm:$0x3f]
    %v3290 = vadd.f32 %v3287, %v3289
    %v3291 = vsel %vm1223, %v3290, -inf
    %3292 = vmax.xlane.f32.xlu0 %v3291
    %v3293 = vpop.xlane.xlu0 %3292
    %v3294 = vsub.f32 %v3290, %v3293
    %v3295 = vmul.f32 %v3294, 1.442695
    %v3296 = vpow.pop %v3295
    %v3297 = vsel %vm1223, %v3296, 0.0
    %3298 = vadd.xlane.f32.xlu0 %v3297
    %v3299 = vpop.xlane.xlu0 %3298
    %v3300 = vrcp.pop %v3299
    %v3301 = vmul.f32 %v3296, %v3300
    %v3303 = vsel %vm632, %v3301, 0
    %3305 = vmatpush.msra.mxu0 0.0
    %3306 = vmatpush.msra.mxu0 0.0
    %3307 = vmatpush.msra.mxu0 0.0
    %3308 = vmatpush.msra.mxu0 0.0
    %3309 = vmatpush.msra.mxu0 0.0
    %3310 = vmatpush.msra.mxu0 0.0
    %3311 = vmatpush.msra.mxu0 0.0
    %3312 = vmatpush.msra.mxu0 0.0
    %3313 = vmatpush.msra.mxu0 0.0
    %3314 = vmatpush.msra.mxu0 0.0
    %3315 = vmatpush.msra.mxu0 0.0
    %3316 = vmatpush.msra.mxu0 %v1239
    %3317 = vmatpush.msra.mxu0 %v1015
    %3318 = vmatpush.msra.mxu0 %v1012
    %3319 = vmatpush.msra.mxu0 %v1009
    %3320 = vmatpush.msra.mxu0 %v1006
    %3321 = vmatmul.f32.gmra.mxu0 %v3303
    %v3322 = vpop.f32.mrf.mxu0
    %v3323 = vadd.f32 0.0, %v3322
    %3324 = vdwg.mxu0
    %v3325 = vld [vmem:[%s79] sm:$0xff]
    %v3326 = vld [vmem:[%s79 + $0x8] sm:$0xff]
    %v3327 = vld [vmem:[%s79 + $0x10] sm:$0xff]
    %v3328 = vld [vmem:[%s79 + $0x18] sm:$0xff]
    %v3329 = vld [vmem:[%s81] sm:$0x1]
    %v3331 = vperm.slane %v3329, 0
    %v3334 = vsel %vm427, %v3323, 0
    %3336 = vmatpush.msra.mxu0 0.0
    %3337 = vmatpush.msra.mxu0 0.0
    %3338 = vmatpush.msra.mxu0 0.0
    %3339 = vmatpush.msra.mxu0 0.0
    %3340 = vmatpush.msra.mxu0 0.0
    %3341 = vmatpush.msra.mxu0 0.0
    %3342 = vmatpush.msra.mxu0 0.0
    %3343 = vmatpush.msra.mxu0 0.0
    %3344 = vmatpush.msra.mxu0 0.0
    %3345 = vmatpush.msra.mxu0 0.0
    %3346 = vmatpush.msra.mxu0 0.0
    %3347 = vmatpush.msra.mxu0 0.0
    %3348 = vmatpush.msra.mxu0 %v3328
    %3349 = vmatpush.msra.mxu0 %v3327
    %3350 = vmatpush.msra.mxu0 %v3326
    %3351 = vmatpush.msra.mxu0 %v3325
    %3352 = vmatmul.f32.gmra.mxu0 %v3334
    %v3353 = vpop.f32.mrf.mxu0
    %v3354 = vadd.f32 %v3331, %v3353
    %3355 = vdwg.mxu0
    %v3356 = vadd.f32 %v3232, %v3354
    %v3357 = vld [vmem:[%s83] sm:$0xff]
    %v3358 = vld [vmem:[%s83 + $0x8] sm:$0xff]
    %v3359 = vld [vmem:[%s83 + $0x10] sm:$0xff]
    %v3360 = vld [vmem:[%s83 + $0x18] sm:$0xff]
    %v3361 = vld [vmem:[%s85] sm:$0x1]
    %v3363 = vperm.slane %v3361, 0
    %v3366 = vsel %vm427, %v3356, 0
    %3368 = vmatpush.msra.mxu0 0.0
    %3369 = vmatpush.msra.mxu0 0.0
    %3370 = vmatpush.msra.mxu0 0.0
    %3371 = vmatpush.msra.mxu0 0.0
    %3372 = vmatpush.msra.mxu0 0.0
    %3373 = vmatpush.msra.mxu0 0.0
    %3374 = vmatpush.msra.mxu0 0.0
    %3375 = vmatpush.msra.mxu0 0.0
    %3376 = vmatpush.msra.mxu0 0.0
    %3377 = vmatpush.msra.mxu0 0.0
    %3378 = vmatpush.msra.mxu0 0.0
    %3379 = vmatpush.msra.mxu0 0.0
    %3380 = vmatpush.msra.mxu0 %v3360
    %3381 = vmatpush.msra.mxu0 %v3359
    %3382 = vmatpush.msra.mxu0 %v3358
    %3383 = vmatpush.msra.mxu0 %v3357
    %3384 = vmatmul.f32.gmra.mxu0 %v3366
    %v3385 = vpop.f32.mrf.mxu0
    %v3386 = vadd.f32 %v3363, %v3385
    %3387 = vdwg.mxu0
    %v3388 = vmax.f32 %v3386, 0.0
    %v3389 = vld [vmem:[%s87] sm:$0xff]
    %v3390 = vld [vmem:[%s87 + $0x8] sm:$0xff]
    %v3391 = vld [vmem:[%s87 + $0x10] sm:$0xff]
    %v3392 = vld [vmem:[%s87 + $0x18] sm:$0xff]
    %v3393 = vld [vmem:[%s87 + $0x20] sm:$0xff]
    %v3394 = vld [vmem:[%s87 + $0x28] sm:$0xff]
    %v3395 = vld [vmem:[%s87 + $0x30] sm:$0xff]
    %v3396 = vld [vmem:[%s87 + $0x38] sm:$0xff]
    %v3397 = vld [vmem:[%s89] sm:$0x1]
    %v3399 = vperm.slane %v3397, 0
    %v3402 = vsel %vm872, %v3388, 0
    %3404 = vmatpush.msra.mxu0 0.0
    %3405 = vmatpush.msra.mxu0 0.0
    %3406 = vmatpush.msra.mxu0 0.0
    %3407 = vmatpush.msra.mxu0 0.0
    %3408 = vmatpush.msra.mxu0 0.0
    %3409 = vmatpush.msra.mxu0 0.0
    %3410 = vmatpush.msra.mxu0 0.0
    %3411 = vmatpush.msra.mxu0 0.0
    %3412 = vmatpush.msra.mxu0 %v3396
    %3413 = vmatpush.msra.mxu0 %v3395
    %3414 = vmatpush.msra.mxu0 %v3394
    %3415 = vmatpush.msra.mxu0 %v3393
    %3416 = vmatpush.msra.mxu0 %v3392
    %3417 = vmatpush.msra.mxu0 %v3391
    %3418 = vmatpush.msra.mxu0 %v3390
    %3419 = vmatpush.msra.mxu0 %v3389
    %3420 = vmatmul.f32.gmra.mxu0 %v3402
    %v3421 = vpop.f32.mrf.mxu0
    %v3422 = vadd.f32 %v3399, %v3421
    %3423 = vdwg.mxu0
    %v3424 = vadd.f32 %v3356, %v3422
    %v3425 = vld [vmem:[%s91] sm:$0xff]
    %v3426 = vld [vmem:[%s91 + $0x8] sm:$0xff]
    %v3427 = vld [vmem:[%s91 + $0x10] sm:$0xff]
    %v3428 = vld [vmem:[%s91 + $0x18] sm:$0xff]
    %v3429 = vld [vmem:[#allocation2] sm:$0x1]
    %v3431 = vperm.slane %v3429, 0
    %v3434 = vsel %vm427, %v3424, 0
    %3436 = vmatpush.msra.mxu0 0.0
    %3437 = vmatpush.msra.mxu0 0.0
    %3438 = vmatpush.msra.mxu0 0.0
    %3439 = vmatpush.msra.mxu0 0.0
    %3440 = vmatpush.msra.mxu0 0.0
    %3441 = vmatpush.msra.mxu0 0.0
    %3442 = vmatpush.msra.mxu0 0.0
    %3443 = vmatpush.msra.mxu0 0.0
    %3444 = vmatpush.msra.mxu0 0.0
    %3445 = vmatpush.msra.mxu0 0.0
    %3446 = vmatpush.msra.mxu0 0.0
    %3447 = vmatpush.msra.mxu0 0.0
    %3448 = vmatpush.msra.mxu0 %v3428
    %3449 = vmatpush.msra.mxu0 %v3427
    %3450 = vmatpush.msra.mxu0 %v3426
    %3451 = vmatpush.msra.mxu0 %v3425
    %3452 = vmatmul.f32.gmra.mxu0 %v3434
    %v3453 = vpop.f32.mrf.mxu0
    %v3454 = vadd.f32 %v3431, %v3453
    %3455 = vdwg.mxu0
    %v3456 = vld [vmem:[%s95] sm:$0xff]
    %v3457 = vld [vmem:[%s95 + $0x8] sm:$0xff]
    %v3458 = vld [vmem:[%s95 + $0x10] sm:$0xff]
    %v3459 = vld [vmem:[%s95 + $0x18] sm:$0xff]
    %v3460 = vld [vmem:[#allocation5] sm:$0x1]
    %v3462 = vperm.slane %v3460, 0
    %3464 = vmatpush.msra.mxu0 0.0
    %3465 = vmatpush.msra.mxu0 0.0
    %3466 = vmatpush.msra.mxu0 0.0
    %3467 = vmatpush.msra.mxu0 0.0
    %3468 = vmatpush.msra.mxu0 0.0
    %3469 = vmatpush.msra.mxu0 0.0
    %3470 = vmatpush.msra.mxu0 0.0
    %3471 = vmatpush.msra.mxu0 0.0
    %3472 = vmatpush.msra.mxu0 0.0
    %3473 = vmatpush.msra.mxu0 0.0
    %3474 = vmatpush.msra.mxu0 0.0
    %3475 = vmatpush.msra.mxu0 0.0
    %3476 = vmatpush.msra.mxu0 %v3459
    %3477 = vmatpush.msra.mxu0 %v3458
    %3478 = vmatpush.msra.mxu0 %v3457
    %3479 = vmatpush.msra.mxu0 %v3456
    %3480 = vmatmul.f32.gmra.mxu0 %v3434
    %v3481 = vpop.f32.mrf.mxu0
    %v3482 = vadd.f32 %v3462, %v3481
    %3483 = vdwg.mxu0
    %s3484 = scalar_lea.vmem %s99, 32
    %3485 = vst.msk [vmem:[%s3484] sm:$0x3f] %vm1420, %v3454
    %s3486 = scalar_lea.vmem %s101, 32
    %3487 = vst.msk [vmem:[%s3486] sm:$0x3f] %vm1422, %v3482
    %s3488 = scalar_lea.vmem %s11, 32
    %v3489 = vld [vmem:[%s3488] sm:$0x3f]
    %v3490 = vsub.f32 %v3454, %v3489
    %v3491 = vmul.f32 %v3490, %v3490
    %v3492 = vsel %vm1420, %v3491, 0.0
    %3493 = vadd.xlane.f32.xlu0 %v3492
    %v3494 = vpop.xlane.xlu0 %3493
    %v3495 = vrot.slane %v3494, 4
    %v3496 = vadd.f32 %v3494, %v3495
    %v3497 = vrot.slane %v3496, 2
    %v3498 = vadd.f32 %v3496, %v3497
    %v3499 = vrot.slane %v3498, 1
    %v3500 = vadd.f32 %v3498, %v3499
    %s3501 = vtos %v3500
    %v3502 = vstv %s3501
    %v3503 = vadd.f32 %v2969, %v3502
    %s3504 = scalar_lea.vmem %s9, 32
    %v3505 = vld [vmem:[%s3504] sm:$0x3f]
    %vm3506 = vcmp.gt.f32.partialorder %v3505, 0.0
    %v3507 = vsel %vm3506, 2.0, 1.0
    %v3508 = vsub.f32 %v3482, %v3505
    %v3509 = vmul.f32 %v3508, %v3507
    %v3510 = vmul.f32 %v3509, %v3509
    %v3511 = vsel %vm1422, %v3510, 0.0
    %3512 = vadd.xlane.f32.xlu0 %v3511
    %v3513 = vpop.xlane.xlu0 %3512
    %v3514 = vrot.slane %v3513, 4
    %v3515 = vadd.f32 %v3513, %v3514
    %v3516 = vrot.slane %v3515, 2
    %v3517 = vadd.f32 %v3515, %v3516
    %v3518 = vrot.slane %v3517, 1
    %v3519 = vadd.f32 %v3517, %v3518
    %s3520 = vtos %v3519
    %v3521 = vstv %s3520
    %v3522 = vadd.f32 %v2988, %v3521
    %v3523 = vmul.f32 %v3503, 0.5
    %vm3524 = vcmask 0
    %3525 = vst.msk [vmem:[#allocation7] sm:$0x1] %vm3524, %v3523
    %v3526 = vmul.f32 %v3522, 0.5
    %3527 = vst.msk [vmem:[#allocation8] sm:$0x1] %vm3524, %v3526
    // Predicated region
    $region206: #{ef_transformer_forward.1} parent=1 // pred_check
      _
    $region207: #{ef_transformer_forward.1} parent=1 // pred_check_branch
      %3529 = sbr.rel (0) target = $region209
    $region208: #{ef_transformer_forward.1} parent=1 // pred_region
      _
    $region209: #{ef_transformer_forward.1} parent=1 // pred_fallthru
      _
    // Predicated region
    $region210: #{ef_transformer_forward.1} parent=1 // pred_check
      _
    $region211: #{ef_transformer_forward.1} parent=1 // pred_check_branch
      %3531 = sbr.rel (0) target = $region213
    $region212: #{ef_transformer_forward.1} parent=1 // pred_region
      _
    $region213: #{ef_transformer_forward.1} parent=1 // pred_fallthru
      _
    // Predicated region
    $region214: #{ef_transformer_forward.1} parent=1 // pred_check
      _
    $region215: #{ef_transformer_forward.1} parent=1 // pred_check_branch
      %3533 = sbr.rel (0) target = $region217
    $region216: #{ef_transformer_forward.1} parent=1 // pred_region
      %3535 = vsyncadd [#allocation4], 0
      %s3537 = sshll.u32 [#allocation7], 4
      %s3538 = int_to_ptr.vmem [resolvable:$true] %s3537
      %s3539 = sshll.u32 %s103, 4
      %s3540 = int_to_ptr.hbm [resolvable:$true] %s3539
      %3542 = dma.vmem_to_hbm [thread:$0]  %s3538, 16, %s3540, [#allocation4]
    $region217: #{ef_transformer_forward.1} parent=1 // pred_fallthru
      _
    // Predicated region
    $region218: #{ef_transformer_forward.1} parent=1 // pred_check
      _
    $region219: #{ef_transformer_forward.1} parent=1 // pred_check_branch
      %3544 = sbr.rel (0) target = $region221
    $region220: #{ef_transformer_forward.1} parent=1 // pred_region
      %3546 = vsyncadd [#allocation9], 0
      %s3548 = sshll.u32 [#allocation8], 4
      %s3549 = int_to_ptr.vmem [resolvable:$true] %s3548
      %s3550 = sshll.u32 %s105, 4
      %s3551 = int_to_ptr.hbm [resolvable:$true] %s3550
      %3553 = dma.vmem_to_hbm [thread:$0]  %s3549, 16, %s3551, [#allocation9]
    $region221: #{ef_transformer_forward.1} parent=1 // pred_fallthru
      _
    // Predicated region
    $region222: #{ef_transformer_forward.1} parent=1 // pred_check
      _
    $region223: #{ef_transformer_forward.1} parent=1 // pred_check_branch
      %3555 = sbr.rel (0) target = $region225
    $region224: #{ef_transformer_forward.1} parent=1 // pred_region
      _
    $region225: #{ef_transformer_forward.1} parent=1 // pred_fallthru
      _
    // Predicated region
    $region226: #{ef_transformer_forward.1} parent=1 // pred_check
      _
    $region227: #{ef_transformer_forward.1} parent=1 // pred_check_branch
      %3557 = sbr.rel (0) target = $region229
    $region228: #{ef_transformer_forward.1} parent=1 // pred_region
      _
    $region229: #{ef_transformer_forward.1} parent=1 // pred_fallthru
      _
    // Predicated region
    $region230: #{ef_transformer_forward.1} parent=1 // pred_check
      _
    $region231: #{ef_transformer_forward.1} parent=1 // pred_check_branch
      %3559 = sbr.rel (0) target = $region233
    $region232: #{ef_transformer_forward.1} parent=1 // pred_region
      %3561 = dma.done [#allocation4], 16
    $region233: #{ef_transformer_forward.1} parent=1 // pred_fallthru
      _
    // Predicated region
    $region234: #{ef_transformer_forward.1} parent=1 // pred_check
      _
    $region235: #{ef_transformer_forward.1} parent=1 // pred_check_branch
      %3563 = sbr.rel (0) target = $region237
    $region236: #{ef_transformer_forward.1} parent=1 // pred_region
      %3565 = dma.done [#allocation9], 16
    $region237: #{ef_transformer_forward.1} parent=1 // pred_fallthru
      _
    %3566 = vsyncpa [#allocation3], 1
    %3567 = vsyncpa [#allocation6], 1
    %3568 = vsyncpa [#allocation4], 1
    %3569 = vsyncpa [#allocation9], 1

</llo_original>
